<compile_context>
chip_gen: v5e
topology: v5e:2x2
jax: 0.10.0
libtpu: 0.0.40
codegen_flags: <defaults>
</compile_context>

<pallas_src>
import functools

import jax
import jax.numpy as jnp
import numpy as np
from jax.experimental import pallas as pl
from jax.experimental.pallas import tpu as pltpu

# Plain Python scalars only (no jnp arrays) so the kernel captures no constants.
NEG_INF = -1e30
LN_EPS = 1e-5
LEAKY_SLOPE = 0.2          # GATConv default negative_slope


# ----------------------------- fused kernel ---------------------------------
def deep_gat_block_kernel(x_ref, bias_ref, wg_ref, acat_ref, w1_ref, w2_ref,
                          vec_ref, out_ref, *, num_heads, h_real):
    """grid=(num_levels,): one GAT -> add&norm -> FFN -> add&norm per step."""
    lvl = pl.program_id(0)

    # Level 0: seed the resident feature block with the kernel input.
    @pl.when(lvl == 0)
    def _():
        out_ref[...] = x_ref[...]

    x = out_ref[...]                         # [Np, Hp] current node features (f32)
    bias = bias_ref[...]                     # [Np, Np] additive mask (0 / -1e30)
    N, H = x.shape                           # padded (static python ints)

    # Packed per-level vectors: one DMA, slice rows in VMEM.
    vec = vec_ref[0]                         # [8, Hp]
    bg, g1, be1 = vec[0:1, :], vec[1:2, :], vec[2:3, :]
    b1, b2 = vec[3:4, :], vec[4:5, :]
    g2, be2 = vec[5:6, :], vec[6:7, :]

    # Channel mask so LayerNorm stats ignore the zero-padded hidden channels.
    chan_mask = (jax.lax.broadcasted_iota(jnp.int32, (1, H), 1)
                 < h_real).astype(jnp.float32)
    inv_h = 1.0 / h_real

    def layer_norm(z, gamma, beta):          # torch LayerNorm (biased var, eps)
        mean = jnp.sum(z, axis=-1, keepdims=True) * inv_h
        zc = (z - mean) * chan_mask
        var = jnp.sum(zc * zc, axis=-1, keepdims=True) * inv_h
        inv = jax.lax.rsqrt(var + LN_EPS)
        return zc * inv * gamma + beta

    # ---- GATConv(heads=num_heads, concat=False) ---------------------------
    x_bf = x.astype(jnp.bfloat16)
    xp = jnp.dot(x_bf, wg_ref[0], preferred_element_type=jnp.float32)  # [Np, heads*Hp]

    # One fused matmul for BOTH attention scalars of all heads:
    # acat is block-diagonal [heads*Hp, 2*heads]; cols [0:heads)=dst, [heads:2h)=src.
    att = jnp.dot(xp, acat_ref[0], preferred_element_type=jnp.float32)  # [Np, 2*heads]
    a_dst = att[:, 0:num_heads]                                         # [Np, heads]
    a_src_t = att[:, num_heads:2 * num_heads].T                         # [heads, Np] (one transpose)

    xp_bf = xp.astype(jnp.bfloat16)
    acc = jnp.zeros((N, H), jnp.float32)
    for h in range(num_heads):               # heads is small; fully unrolled
        logits = a_dst[:, h:h + 1] + a_src_t[h:h + 1, :]              # [Np, Np]
        logits = jnp.where(logits > 0, logits, LEAKY_SLOPE * logits)  # LeakyReLU
        logits = logits + bias                                        # mask non-edges / pads
        m = jnp.max(logits, axis=-1, keepdims=True)
        e = jnp.exp(logits - m)
        denom = jnp.sum(e, axis=-1, keepdims=True)
        alpha = e * pl.reciprocal(denom, approx=True)                 # row softmax
        # Per-head accumulation (no [N, heads*N] concatenation), bf16 MXU.
        acc = acc + jnp.dot(alpha.astype(jnp.bfloat16),
                            xp_bf[:, h * H:(h + 1) * H],
                            preferred_element_type=jnp.float32)

    # concat=False -> mean over heads, then GATConv bias.
    x_att = acc * (1.0 / num_heads) + bg

    # ---- residual + LayerNorm ----------------------------------------------
    x1 = layer_norm(x + x_att, g1, be1)

    # ---- FFN: Linear -> ReLU -> Linear, residual, LayerNorm ----------------
    h1 = jnp.dot(x1.astype(jnp.bfloat16), w1_ref[0],
                 preferred_element_type=jnp.float32) + b1
    h1 = jnp.maximum(h1, 0.0)
    ff = jnp.dot(h1.astype(jnp.bfloat16), w2_ref[0],
                 preferred_element_type=jnp.float32) + b2
    out_ref[...] = layer_norm(x1 + ff, g2, be2)


# ------------------------------- wrapper -------------------------------------
def _round_up(v, m):
    return (v + m - 1) // m * m


def deep_gat_block_forward(x, adj, params, num_heads):
    """All num_levels levels fused into one pallas_call (grid over levels)."""
    N, H = x.shape
    L = len(params)
    Np = _round_up(max(N, 128), 128)          # lane-dense node axis
    Hp = _round_up(max(H, 128), 128)          # lane-dense hidden axis

    # Padded features (zeros in padded rows/channels).
    x_pad = jnp.zeros((Np, Hp), jnp.float32).at[:N, :H].set(x)

    # Additive attention bias precomputed once (hoisted out of the kernel).
    # Padded src columns are fully masked -> exactly zero attention weight.
    bias = jnp.full((Np, Np), NEG_INF, jnp.float32)
    bias = bias.at[:N, :N].set(jnp.where(adj > 0, 0.0, NEG_INF))

    def pad_wg(wg):                           # [H, heads*H] -> [Hp, heads*Hp]
        out = jnp.zeros((Hp, num_heads * Hp), jnp.float32)
        for h in range(num_heads):
            out = out.at[:H, h * Hp:h * Hp + H].set(wg[:, h * H:(h + 1) * H])
        return out

    def pad_sq(w):                            # [H, H] -> [Hp, Hp]
        return jnp.zeros((Hp, Hp), jnp.float32).at[:H, :H].set(w)

    def pad_vec(v):                           # [1, H] -> [1, Hp]
        return jnp.zeros((1, Hp), jnp.float32).at[:, :H].set(v)

    def make_acat(asrc, adst):                # block-diag [heads*Hp, 2*heads]
        out = jnp.zeros((num_heads * Hp, 2 * num_heads), jnp.float32)
        for h in range(num_heads):
            out = out.at[h * Hp:h * Hp + H, h].set(adst[:, h])
            out = out.at[h * Hp:h * Hp + H, num_heads + h].set(asrc[:, h])
        return out

    WG = jnp.stack([pad_wg(p["wg"]) for p in params]).astype(jnp.bfloat16)
    ACAT = jnp.stack([make_acat(p["asrc"], p["adst"]) for p in params])  # f32 (tiny)
    W1 = jnp.stack([pad_sq(p["w1"]) for p in params]).astype(jnp.bfloat16)
    W2 = jnp.stack([pad_sq(p["w2"]) for p in params]).astype(jnp.bfloat16)
    # Pack the 7 tiny per-level vectors into one [L, 8, Hp] array (1 DMA/level).
    VEC = jnp.stack([
        jnp.concatenate([pad_vec(p[k]) for k in
                         ("bg", "g1", "be1", "b1", "b2", "g2", "be2")]
                        + [jnp.zeros((1, Hp), jnp.float32)], axis=0)
        for p in params])                                               # [L, 8, Hp]

    const_x = pl.BlockSpec((Np, Hp), lambda l: (0, 0))     # resident across levels
    const_bias = pl.BlockSpec((Np, Np), lambda l: (0, 0))  # DMA'd once, reused

    def lvl_spec(arr):
        s = arr.shape[1:]
        return pl.BlockSpec((1,) + s, lambda l: (l,) + (0,) * len(s))

    grid_spec = pltpu.PrefetchScalarGridSpec(
        num_scalar_prefetch=0,
        grid=(L,),
        in_specs=[const_x, const_bias, lvl_spec(WG), lvl_spec(ACAT),
                  lvl_spec(W1), lvl_spec(W2), lvl_spec(VEC)],
        out_specs=const_x,
    )
    kernel = functools.partial(deep_gat_block_kernel,
                               num_heads=num_heads, h_real=H)
    out = pl.pallas_call(
        kernel,
        out_shape=jax.ShapeDtypeStruct((Np, Hp), jnp.float32),
        grid_spec=grid_spec,
        compiler_params=pltpu.CompilerParams(
            dimension_semantics=("arbitrary",)),   # level axis is sequential
    )(x_pad, bias, WG, ACAT, W1, W2, VEC)
    # out_dropout: identity in eval mode.  Strip lane/sublane padding.
    return out[:N, :H]


# ---------------------------- pure-JAX reference ----------------------------
def _layer_norm_ref(z, gamma, beta):
    mean = jnp.mean(z, axis=-1, keepdims=True)
    zc = z - mean
    var = jnp.mean(zc * zc, axis=-1, keepdims=True)
    inv = jax.lax.rsqrt(var + LN_EPS)
    return zc * inv * gamma + beta


def reference_forward(x, adj, params, num_heads):
    for lvl in params:
        N, H = x.shape
        xp = jnp.dot(x, lvl["wg"])
        acc = jnp.zeros((N, H), jnp.float32)
        for h in range(num_heads):
            xph = xp[:, h * H:(h + 1) * H]
            a_src = xph @ lvl["asrc"][:, h:h + 1]
            a_dst = xph @ lvl["adst"][:, h:h + 1]
            logits = a_dst + a_src.T
            logits = jnp.where(logits > 0, logits, LEAKY_SLOPE * logits)
            logits = jnp.where(adj > 0, logits, NEG_INF)
            alpha = jax.nn.softmax(logits, axis=-1)
            acc = acc + alpha @ xph
        x_att = acc / num_heads + lvl["bg"]
        x1 = _layer_norm_ref(x + x_att, lvl["g1"], lvl["be1"])
        h1 = jnp.maximum(x1 @ lvl["w1"] + lvl["b1"], 0.0)
        ff = h1 @ lvl["w2"] + lvl["b2"]
        x = _layer_norm_ref(x1 + ff, lvl["g2"], lvl["be2"])
    return x


# ------------------------------ parameter init -------------------------------
def init_params(key, num_levels, hidden, heads):
    params = []
    for _ in range(num_levels):
        key, *ks = jax.random.split(key, 9)
        lvl = {
            "wg":   0.1 * jax.random.normal(ks[0], (hidden, heads * hidden), jnp.float32),
            "asrc": 0.1 * jax.random.normal(ks[1], (hidden, heads), jnp.float32),
            "adst": 0.1 * jax.random.normal(ks[2], (hidden, heads), jnp.float32),
            "bg":   0.1 * jax.random.normal(ks[3], (1, hidden), jnp.float32),
            "g1":   jnp.ones((1, hidden), jnp.float32),
            "be1":  jnp.zeros((1, hidden), jnp.float32),
            "w1":   0.1 * jax.random.normal(ks[4], (hidden, hidden), jnp.float32),
            "b1":   0.1 * jax.random.normal(ks[5], (1, hidden), jnp.float32),
            "w2":   0.1 * jax.random.normal(ks[6], (hidden, hidden), jnp.float32),
            "b2":   0.1 * jax.random.normal(ks[7], (1, hidden), jnp.float32),
            "g2":   jnp.ones((1, hidden), jnp.float32),
            "be2":  jnp.zeros((1, hidden), jnp.float32),
        }
        params.append(lvl)
    return params


if __name__ == "__main__":
    NUM_LEVELS = 2
    HIDDEN = 32
    HEADS = 4
    N = 16  # number of graph nodes

    key = jax.random.PRNGKey(0)
    key, kx = jax.random.split(key)
    x = jax.random.normal(kx, (N, HIDDEN), jnp.float32)
    params = init_params(key, NUM_LEVELS, HIDDEN, HEADS)

    # Deterministic small graph: edge_index in PyG convention [2, E] = [src; dst].
    srcs, dsts = [], []
    for i in range(N):
        srcs += [i, i]
        dsts += [(i + 1) % N, (i + 3) % N]
    edge_index = np.array([srcs, dsts], dtype=np.int32)            # [2, 32]

    # Dense adjacency mask adj[dst, src], plus self loops (GATConv default).
    adj_np = np.zeros((N, N), dtype=np.float32)
    adj_np[edge_index[1], edge_index[0]] = 1.0
    np.fill_diagonal(adj_np, 1.0)
    adj = jnp.asarray(adj_np)

    out = jax.block_until_ready(deep_gat_block_forward(x, adj, params, HEADS))
    ref = jax.block_until_ready(reference_forward(x, adj, params, HEADS))

    assert out.shape == (N, HIDDEN) and out.dtype == jnp.float32
    assert bool(jnp.all(jnp.isfinite(out)))
    np.testing.assert_allclose(np.asarray(out), np.asarray(ref),
                               rtol=5e-2, atol=5e-2)
    print("KERNEL_OK")
</pallas_src>

<mosaic_0001>
module attributes {stable_mosaic.version = 11 : i64} {
  func.func @deep_gat_block_kernel(%arg0: i32, %arg1: memref<128x128xf32, #tpu.memory_space<vmem>>, %arg2: memref<128x128xf32, #tpu.memory_space<vmem>>, %arg3: memref<1x128x512xbf16, #tpu.memory_space<vmem>>, %arg4: memref<1x512x8xf32, #tpu.memory_space<vmem>>, %arg5: memref<1x128x128xbf16, #tpu.memory_space<vmem>>, %arg6: memref<1x128x128xbf16, #tpu.memory_space<vmem>>, %arg7: memref<1x8x128xf32, #tpu.memory_space<vmem>>, %arg8: memref<128x128xf32, #tpu.memory_space<vmem>>) attributes {dimension_semantics = [#tpu.dimension_semantics<arbitrary>], iteration_bounds = array<i64: 2>, scalar_prefetch = 0 : i64, scratch_operands = 0 : i64, tpu.core_type = #tpu.core_type<tc>, window_params = [{pipeline_mode = #tpu.pipeline_mode<synchronous>, transform_indices = @transform_0, window_bounds = array<i64: 128, 128>}, {pipeline_mode = #tpu.pipeline_mode<synchronous>, transform_indices = @transform_1, window_bounds = array<i64: 128, 128>}, {transform_indices = @transform_2, window_bounds = array<i64: 1, 128, 512>}, {transform_indices = @transform_3, window_bounds = array<i64: 1, 512, 8>}, {transform_indices = @transform_4, window_bounds = array<i64: 1, 128, 128>}, {transform_indices = @transform_5, window_bounds = array<i64: 1, 128, 128>}, {transform_indices = @transform_6, window_bounds = array<i64: 1, 8, 128>}, {pipeline_mode = #tpu.pipeline_mode<synchronous>, transform_indices = @transform_7, window_bounds = array<i64: 128, 128>}]} {
    %c0_i32 = arith.constant 0 : i32
    %0 = arith.cmpi eq, %arg0, %c0_i32 : i32
    %1 = arith.extui %0 : i1 to i32
    %c0_i32_0 = arith.constant 0 : i32
    %2 = arith.cmpi ne, %1, %c0_i32_0 : i32
    scf.if %2 {
      %c0_57 = arith.constant 0 : index
      %c0_58 = arith.constant 0 : index
      %196 = vector.load %arg1[%c0_57, %c0_58] : memref<128x128xf32, #tpu.memory_space<vmem>>, vector<128x128xf32>
      %c0_59 = arith.constant 0 : index
      %c0_60 = arith.constant 0 : index
      %197 = vector.load %arg8[%c0_59, %c0_60] : memref<128x128xf32, #tpu.memory_space<vmem>>, vector<128x128xf32>
      tpu.vector_store %arg8[%c0_59, %c0_60], %196 {strides = array<i32>} : memref<128x128xf32, #tpu.memory_space<vmem>>, vector<128x128xf32>,
    } else {
    }
    %c0 = arith.constant 0 : index
    %c0_1 = arith.constant 0 : index
    %3 = vector.load %arg8[%c0, %c0_1] : memref<128x128xf32, #tpu.memory_space<vmem>>, vector<128x128xf32>
    %c0_2 = arith.constant 0 : index
    %c0_3 = arith.constant 0 : index
    %4 = vector.load %arg2[%c0_2, %c0_3] : memref<128x128xf32, #tpu.memory_space<vmem>>, vector<128x128xf32>
    %c0_4 = arith.constant 0 : index
    %c0_5 = arith.constant 0 : index
    %c0_6 = arith.constant 0 : index
    %5 = vector.load %arg7[%c0_4, %c0_5, %c0_6] : memref<1x8x128xf32, #tpu.memory_space<vmem>>, vector<1x8x128xf32>
    %6 = vector.shape_cast %5 : vector<1x8x128xf32> to vector<8x128xf32>
    %7 = vector.extract_strided_slice %6 {offsets = [0, 0], sizes = [1, 128], strides = [1, 1]} : vector<8x128xf32> to vector<1x128xf32>
    %8 = vector.extract_strided_slice %6 {offsets = [1, 0], sizes = [1, 128], strides = [1, 1]} : vector<8x128xf32> to vector<1x128xf32>
    %9 = vector.extract_strided_slice %6 {offsets = [2, 0], sizes = [1, 128], strides = [1, 1]} : vector<8x128xf32> to vector<1x128xf32>
    %10 = vector.extract_strided_slice %6 {offsets = [3, 0], sizes = [1, 128], strides = [1, 1]} : vector<8x128xf32> to vector<1x128xf32>
    %11 = vector.extract_strided_slice %6 {offsets = [4, 0], sizes = [1, 128], strides = [1, 1]} : vector<8x128xf32> to vector<1x128xf32>
    %12 = vector.extract_strided_slice %6 {offsets = [5, 0], sizes = [1, 128], strides = [1, 1]} : vector<8x128xf32> to vector<1x128xf32>
    %13 = vector.extract_strided_slice %6 {offsets = [6, 0], sizes = [1, 128], strides = [1, 1]} : vector<8x128xf32> to vector<1x128xf32>
    %14 = tpu.iota {dimensions = array<i32: 1>} : vector<1x128xi32>
    %c32_i32 = arith.constant 32 : i32
    %15 = vector.broadcast %c32_i32 : i32 to vector<1x128xi32>
    %16 = arith.cmpi slt, %14, %15 : vector<1x128xi32>
    %17 = arith.extui %16 : vector<1x128xi1> to vector<1x128xi32>
    %18 = arith.sitofp %17 : vector<1x128xi32> to vector<1x128xf32>
    %19 = arith.truncf %3 : vector<128x128xf32> to vector<128x128xbf16>
    %c0_7 = arith.constant 0 : index
    %c0_8 = arith.constant 0 : index
    %c0_9 = arith.constant 0 : index
    %20 = vector.load %arg3[%c0_7, %c0_8, %c0_9] : memref<1x128x512xbf16, #tpu.memory_space<vmem>>, vector<1x128x512xbf16>
    %21 = vector.shape_cast %20 : vector<1x128x512xbf16> to vector<128x512xbf16>
    %cst = arith.constant dense<0.000000e+00> : vector<128x512xf32>
    %22 = tpu.matmul %19, %21, %cst {dimension_numbers = #tpu.dot_dimension_numbers<[1], [0], [0], [1], [0, 0, 1, 1], [], []>} : vector<128x128xbf16>, vector<128x512xbf16>, vector<128x512xf32> -> vector<128x512xf32>
    %c0_10 = arith.constant 0 : index
    %c0_11 = arith.constant 0 : index
    %c0_12 = arith.constant 0 : index
    %23 = vector.load %arg4[%c0_10, %c0_11, %c0_12] : memref<1x512x8xf32, #tpu.memory_space<vmem>>, vector<1x512x8xf32>
    %24 = vector.shape_cast %23 : vector<1x512x8xf32> to vector<512x8xf32>
    %cst_13 = arith.constant dense<0.000000e+00> : vector<128x8xf32>
    %25 = tpu.matmul %22, %24, %cst_13 {dimension_numbers = #tpu.dot_dimension_numbers<[1], [0], [0], [1], [0, 0, 1, 1], [], []>} : vector<128x512xf32>, vector<512x8xf32>, vector<128x8xf32> -> vector<128x8xf32>
    %26 = vector.extract_strided_slice %25 {offsets = [0, 0], sizes = [128, 4], strides = [1, 1]} : vector<128x8xf32> to vector<128x4xf32>
    %27 = vector.extract_strided_slice %25 {offsets = [0, 4], sizes = [128, 4], strides = [1, 1]} : vector<128x8xf32> to vector<128x4xf32>
    %28 = tpu.transpose %27, [1, 0] : vector<128x4xf32> -> vector<4x128xf32>
    %29 = arith.truncf %22 : vector<128x512xf32> to vector<128x512xbf16>
    %cst_14 = arith.constant 0.000000e+00 : f32
    %30 = vector.broadcast %cst_14 : f32 to vector<128x128xf32>
    %31 = vector.extract_strided_slice %26 {offsets = [0, 0], sizes = [128, 1], strides = [1, 1]} : vector<128x4xf32> to vector<128x1xf32>
    %32 = vector.extract_strided_slice %28 {offsets = [0, 0], sizes = [1, 128], strides = [1, 1]} : vector<4x128xf32> to vector<1x128xf32>
    %33 = vector.broadcast %31 : vector<128x1xf32> to vector<128x128xf32>
    %34 = vector.broadcast %32 : vector<1x128xf32> to vector<128x128xf32>
    %35 = arith.addf %33, %34 : vector<128x128xf32>
    %cst_15 = arith.constant 0.000000e+00 : f32
    %36 = vector.broadcast %cst_15 : f32 to vector<128x128xf32>
    %37 = arith.cmpf ogt, %35, %36 : vector<128x128xf32>
    %cst_16 = arith.constant 2.000000e-01 : f32
    %38 = vector.broadcast %cst_16 : f32 to vector<128x128xf32>
    %39 = arith.mulf %38, %35 : vector<128x128xf32>
    %40 = arith.select %37, %35, %39 : vector<128x128xi1>, vector<128x128xf32>
    %41 = arith.addf %40, %4 : vector<128x128xf32>
    %cst_17 = arith.constant dense<0xFF800000> : vector<128xf32>
    %42 = vector.multi_reduction <maximumf>, %41, %cst_17 [1] : vector<128x128xf32> to vector<128xf32>
    %43 = vector.shape_cast %42 : vector<128xf32> to vector<128x1xf32>
    %44 = vector.broadcast %43 : vector<128x1xf32> to vector<128x128xf32>
    %45 = arith.subf %41, %44 : vector<128x128xf32>
    %46 = math.exp %45 : vector<128x128xf32>
    %cst_18 = arith.constant dense<0.000000e+00> : vector<128xf32>
    %47 = vector.multi_reduction <add>, %46, %cst_18 [1] : vector<128x128xf32> to vector<128xf32>
    %48 = vector.shape_cast %47 : vector<128xf32> to vector<128x1xf32>
    %49 = tpu.reciprocal %48 {approx = true} : vector<128x1xf32> -> vector<128x1xf32>
    %50 = vector.broadcast %49 : vector<128x1xf32> to vector<128x128xf32>
    %51 = arith.mulf %46, %50 : vector<128x128xf32>
    %52 = arith.truncf %51 : vector<128x128xf32> to vector<128x128xbf16>
    %53 = vector.extract_strided_slice %29 {offsets = [0, 0], sizes = [128, 128], strides = [1, 1]} : vector<128x512xbf16> to vector<128x128xbf16>
    %cst_19 = arith.constant dense<0.000000e+00> : vector<128x128xf32>
    %54 = tpu.matmul %52, %53, %cst_19 {dimension_numbers = #tpu.dot_dimension_numbers<[1], [0], [0], [1], [0, 0, 1, 1], [], []>} : vector<128x128xbf16>, vector<128x128xbf16>, vector<128x128xf32> -> vector<128x128xf32>
    %55 = arith.addf %30, %54 : vector<128x128xf32>
    %56 = vector.extract_strided_slice %26 {offsets = [0, 1], sizes = [128, 1], strides = [1, 1]} : vector<128x4xf32> to vector<128x1xf32>
    %57 = vector.extract_strided_slice %28 {offsets = [1, 0], sizes = [1, 128], strides = [1, 1]} : vector<4x128xf32> to vector<1x128xf32>
    %58 = vector.broadcast %56 : vector<128x1xf32> to vector<128x128xf32>
    %59 = vector.broadcast %57 : vector<1x128xf32> to vector<128x128xf32>
    %60 = arith.addf %58, %59 : vector<128x128xf32>
    %cst_20 = arith.constant 0.000000e+00 : f32
    %61 = vector.broadcast %cst_20 : f32 to vector<128x128xf32>
    %62 = arith.cmpf ogt, %60, %61 : vector<128x128xf32>
    %cst_21 = arith.constant 2.000000e-01 : f32
    %63 = vector.broadcast %cst_21 : f32 to vector<128x128xf32>
    %64 = arith.mulf %63, %60 : vector<128x128xf32>
    %65 = arith.select %62, %60, %64 : vector<128x128xi1>, vector<128x128xf32>
    %66 = arith.addf %65, %4 : vector<128x128xf32>
    %cst_22 = arith.constant dense<0xFF800000> : vector<128xf32>
    %67 = vector.multi_reduction <maximumf>, %66, %cst_22 [1] : vector<128x128xf32> to vector<128xf32>
    %68 = vector.shape_cast %67 : vector<128xf32> to vector<128x1xf32>
    %69 = vector.broadcast %68 : vector<128x1xf32> to vector<128x128xf32>
    %70 = arith.subf %66, %69 : vector<128x128xf32>
    %71 = math.exp %70 : vector<128x128xf32>
    %cst_23 = arith.constant dense<0.000000e+00> : vector<128xf32>
    %72 = vector.multi_reduction <add>, %71, %cst_23 [1] : vector<128x128xf32> to vector<128xf32>
    %73 = vector.shape_cast %72 : vector<128xf32> to vector<128x1xf32>
    %74 = tpu.reciprocal %73 {approx = true} : vector<128x1xf32> -> vector<128x1xf32>
    %75 = vector.broadcast %74 : vector<128x1xf32> to vector<128x128xf32>
    %76 = arith.mulf %71, %75 : vector<128x128xf32>
    %77 = arith.truncf %76 : vector<128x128xf32> to vector<128x128xbf16>
    %78 = vector.extract_strided_slice %29 {offsets = [0, 128], sizes = [128, 128], strides = [1, 1]} : vector<128x512xbf16> to vector<128x128xbf16>
    %cst_24 = arith.constant dense<0.000000e+00> : vector<128x128xf32>
    %79 = tpu.matmul %77, %78, %cst_24 {dimension_numbers = #tpu.dot_dimension_numbers<[1], [0], [0], [1], [0, 0, 1, 1], [], []>} : vector<128x128xbf16>, vector<128x128xbf16>, vector<128x128xf32> -> vector<128x128xf32>
    %80 = arith.addf %55, %79 : vector<128x128xf32>
    %81 = vector.extract_strided_slice %26 {offsets = [0, 2], sizes = [128, 1], strides = [1, 1]} : vector<128x4xf32> to vector<128x1xf32>
    %82 = vector.extract_strided_slice %28 {offsets = [2, 0], sizes = [1, 128], strides = [1, 1]} : vector<4x128xf32> to vector<1x128xf32>
    %83 = vector.broadcast %81 : vector<128x1xf32> to vector<128x128xf32>
    %84 = vector.broadcast %82 : vector<1x128xf32> to vector<128x128xf32>
    %85 = arith.addf %83, %84 : vector<128x128xf32>
    %cst_25 = arith.constant 0.000000e+00 : f32
    %86 = vector.broadcast %cst_25 : f32 to vector<128x128xf32>
    %87 = arith.cmpf ogt, %85, %86 : vector<128x128xf32>
    %cst_26 = arith.constant 2.000000e-01 : f32
    %88 = vector.broadcast %cst_26 : f32 to vector<128x128xf32>
    %89 = arith.mulf %88, %85 : vector<128x128xf32>
    %90 = arith.select %87, %85, %89 : vector<128x128xi1>, vector<128x128xf32>
    %91 = arith.addf %90, %4 : vector<128x128xf32>
    %cst_27 = arith.constant dense<0xFF800000> : vector<128xf32>
    %92 = vector.multi_reduction <maximumf>, %91, %cst_27 [1] : vector<128x128xf32> to vector<128xf32>
    %93 = vector.shape_cast %92 : vector<128xf32> to vector<128x1xf32>
    %94 = vector.broadcast %93 : vector<128x1xf32> to vector<128x128xf32>
    %95 = arith.subf %91, %94 : vector<128x128xf32>
    %96 = math.exp %95 : vector<128x128xf32>
    %cst_28 = arith.constant dense<0.000000e+00> : vector<128xf32>
    %97 = vector.multi_reduction <add>, %96, %cst_28 [1] : vector<128x128xf32> to vector<128xf32>
    %98 = vector.shape_cast %97 : vector<128xf32> to vector<128x1xf32>
    %99 = tpu.reciprocal %98 {approx = true} : vector<128x1xf32> -> vector<128x1xf32>
    %100 = vector.broadcast %99 : vector<128x1xf32> to vector<128x128xf32>
    %101 = arith.mulf %96, %100 : vector<128x128xf32>
    %102 = arith.truncf %101 : vector<128x128xf32> to vector<128x128xbf16>
    %103 = vector.extract_strided_slice %29 {offsets = [0, 256], sizes = [128, 128], strides = [1, 1]} : vector<128x512xbf16> to vector<128x128xbf16>
    %cst_29 = arith.constant dense<0.000000e+00> : vector<128x128xf32>
    %104 = tpu.matmul %102, %103, %cst_29 {dimension_numbers = #tpu.dot_dimension_numbers<[1], [0], [0], [1], [0, 0, 1, 1], [], []>} : vector<128x128xbf16>, vector<128x128xbf16>, vector<128x128xf32> -> vector<128x128xf32>
    %105 = arith.addf %80, %104 : vector<128x128xf32>
    %106 = vector.extract_strided_slice %26 {offsets = [0, 3], sizes = [128, 1], strides = [1, 1]} : vector<128x4xf32> to vector<128x1xf32>
    %107 = vector.extract_strided_slice %28 {offsets = [3, 0], sizes = [1, 128], strides = [1, 1]} : vector<4x128xf32> to vector<1x128xf32>
    %108 = vector.broadcast %106 : vector<128x1xf32> to vector<128x128xf32>
    %109 = vector.broadcast %107 : vector<1x128xf32> to vector<128x128xf32>
    %110 = arith.addf %108, %109 : vector<128x128xf32>
    %cst_30 = arith.constant 0.000000e+00 : f32
    %111 = vector.broadcast %cst_30 : f32 to vector<128x128xf32>
    %112 = arith.cmpf ogt, %110, %111 : vector<128x128xf32>
    %cst_31 = arith.constant 2.000000e-01 : f32
    %113 = vector.broadcast %cst_31 : f32 to vector<128x128xf32>
    %114 = arith.mulf %113, %110 : vector<128x128xf32>
    %115 = arith.select %112, %110, %114 : vector<128x128xi1>, vector<128x128xf32>
    %116 = arith.addf %115, %4 : vector<128x128xf32>
    %cst_32 = arith.constant dense<0xFF800000> : vector<128xf32>
    %117 = vector.multi_reduction <maximumf>, %116, %cst_32 [1] : vector<128x128xf32> to vector<128xf32>
    %118 = vector.shape_cast %117 : vector<128xf32> to vector<128x1xf32>
    %119 = vector.broadcast %118 : vector<128x1xf32> to vector<128x128xf32>
    %120 = arith.subf %116, %119 : vector<128x128xf32>
    %121 = math.exp %120 : vector<128x128xf32>
    %cst_33 = arith.constant dense<0.000000e+00> : vector<128xf32>
    %122 = vector.multi_reduction <add>, %121, %cst_33 [1] : vector<128x128xf32> to vector<128xf32>
    %123 = vector.shape_cast %122 : vector<128xf32> to vector<128x1xf32>
    %124 = tpu.reciprocal %123 {approx = true} : vector<128x1xf32> -> vector<128x1xf32>
    %125 = vector.broadcast %124 : vector<128x1xf32> to vector<128x128xf32>
    %126 = arith.mulf %121, %125 : vector<128x128xf32>
    %127 = arith.truncf %126 : vector<128x128xf32> to vector<128x128xbf16>
    %128 = vector.extract_strided_slice %29 {offsets = [0, 384], sizes = [128, 128], strides = [1, 1]} : vector<128x512xbf16> to vector<128x128xbf16>
    %cst_34 = arith.constant dense<0.000000e+00> : vector<128x128xf32>
    %129 = tpu.matmul %127, %128, %cst_34 {dimension_numbers = #tpu.dot_dimension_numbers<[1], [0], [0], [1], [0, 0, 1, 1], [], []>} : vector<128x128xbf16>, vector<128x128xbf16>, vector<128x128xf32> -> vector<128x128xf32>
    %130 = arith.addf %105, %129 : vector<128x128xf32>
    %cst_35 = arith.constant 2.500000e-01 : f32
    %131 = vector.broadcast %cst_35 : f32 to vector<128x128xf32>
    %132 = arith.mulf %130, %131 : vector<128x128xf32>
    %133 = vector.broadcast %7 : vector<1x128xf32> to vector<128x128xf32>
    %134 = arith.addf %132, %133 : vector<128x128xf32>
    %135 = arith.addf %3, %134 : vector<128x128xf32>
    %cst_36 = arith.constant dense<0.000000e+00> : vector<128xf32>
    %136 = vector.multi_reduction <add>, %135, %cst_36 [1] : vector<128x128xf32> to vector<128xf32>
    %137 = vector.shape_cast %136 : vector<128xf32> to vector<128x1xf32>
    %cst_37 = arith.constant 3.125000e-02 : f32
    %138 = vector.broadcast %cst_37 : f32 to vector<128x1xf32>
    %139 = arith.mulf %137, %138 : vector<128x1xf32>
    %140 = vector.broadcast %139 : vector<128x1xf32> to vector<128x128xf32>
    %141 = arith.subf %135, %140 : vector<128x128xf32>
    %142 = vector.broadcast %18 : vector<1x128xf32> to vector<128x128xf32>
    %143 = arith.mulf %141, %142 : vector<128x128xf32>
    %144 = arith.mulf %143, %143 : vector<128x128xf32>
    %cst_38 = arith.constant dense<0.000000e+00> : vector<128xf32>
    %145 = vector.multi_reduction <add>, %144, %cst_38 [1] : vector<128x128xf32> to vector<128xf32>
    %146 = vector.shape_cast %145 : vector<128xf32> to vector<128x1xf32>
    %cst_39 = arith.constant 3.125000e-02 : f32
    %147 = vector.broadcast %cst_39 : f32 to vector<128x1xf32>
    %148 = arith.mulf %146, %147 : vector<128x1xf32>
    %cst_40 = arith.constant 9.99999974E-6 : f32
    %149 = vector.broadcast %cst_40 : f32 to vector<128x1xf32>
    %150 = arith.addf %148, %149 : vector<128x1xf32>
    %151 = math.rsqrt %150 : vector<128x1xf32>
    %152 = vector.broadcast %151 : vector<128x1xf32> to vector<128x128xf32>
    %153 = arith.mulf %143, %152 : vector<128x128xf32>
    %154 = vector.broadcast %8 : vector<1x128xf32> to vector<128x128xf32>
    %155 = arith.mulf %153, %154 : vector<128x128xf32>
    %156 = vector.broadcast %9 : vector<1x128xf32> to vector<128x128xf32>
    %157 = arith.addf %155, %156 : vector<128x128xf32>
    %158 = arith.truncf %157 : vector<128x128xf32> to vector<128x128xbf16>
    %c0_41 = arith.constant 0 : index
    %c0_42 = arith.constant 0 : index
    %c0_43 = arith.constant 0 : index
    %159 = vector.load %arg5[%c0_41, %c0_42, %c0_43] : memref<1x128x128xbf16, #tpu.memory_space<vmem>>, vector<1x128x128xbf16>
    %160 = vector.shape_cast %159 : vector<1x128x128xbf16> to vector<128x128xbf16>
    %cst_44 = arith.constant dense<0.000000e+00> : vector<128x128xf32>
    %161 = tpu.matmul %158, %160, %cst_44 {dimension_numbers = #tpu.dot_dimension_numbers<[1], [0], [0], [1], [0, 0, 1, 1], [], []>} : vector<128x128xbf16>, vector<128x128xbf16>, vector<128x128xf32> -> vector<128x128xf32>
    %162 = vector.broadcast %10 : vector<1x128xf32> to vector<128x128xf32>
    %163 = arith.addf %161, %162 : vector<128x128xf32>
    %cst_45 = arith.constant 0.000000e+00 : f32
    %164 = vector.broadcast %cst_45 : f32 to vector<128x128xf32>
    %165 = arith.maximumf %163, %164 : vector<128x128xf32>
    %166 = arith.truncf %165 : vector<128x128xf32> to vector<128x128xbf16>
    %c0_46 = arith.constant 0 : index
    %c0_47 = arith.constant 0 : index
    %c0_48 = arith.constant 0 : index
    %167 = vector.load %arg6[%c0_46, %c0_47, %c0_48] : memref<1x128x128xbf16, #tpu.memory_space<vmem>>, vector<1x128x128xbf16>
    %168 = vector.shape_cast %167 : vector<1x128x128xbf16> to vector<128x128xbf16>
    %cst_49 = arith.constant dense<0.000000e+00> : vector<128x128xf32>
    %169 = tpu.matmul %166, %168, %cst_49 {dimension_numbers = #tpu.dot_dimension_numbers<[1], [0], [0], [1], [0, 0, 1, 1], [], []>} : vector<128x128xbf16>, vector<128x128xbf16>, vector<128x128xf32> -> vector<128x128xf32>
    %170 = vector.broadcast %11 : vector<1x128xf32> to vector<128x128xf32>
    %171 = arith.addf %169, %170 : vector<128x128xf32>
    %172 = arith.addf %157, %171 : vector<128x128xf32>
    %cst_50 = arith.constant dense<0.000000e+00> : vector<128xf32>
    %173 = vector.multi_reduction <add>, %172, %cst_50 [1] : vector<128x128xf32> to vector<128xf32>
    %174 = vector.shape_cast %173 : vector<128xf32> to vector<128x1xf32>
    %cst_51 = arith.constant 3.125000e-02 : f32
    %175 = vector.broadcast %cst_51 : f32 to vector<128x1xf32>
    %176 = arith.mulf %174, %175 : vector<128x1xf32>
    %177 = vector.broadcast %176 : vector<128x1xf32> to vector<128x128xf32>
    %178 = arith.subf %172, %177 : vector<128x128xf32>
    %179 = vector.broadcast %18 : vector<1x128xf32> to vector<128x128xf32>
    %180 = arith.mulf %178, %179 : vector<128x128xf32>
    %181 = arith.mulf %180, %180 : vector<128x128xf32>
    %cst_52 = arith.constant dense<0.000000e+00> : vector<128xf32>
    %182 = vector.multi_reduction <add>, %181, %cst_52 [1] : vector<128x128xf32> to vector<128xf32>
    %183 = vector.shape_cast %182 : vector<128xf32> to vector<128x1xf32>
    %cst_53 = arith.constant 3.125000e-02 : f32
    %184 = vector.broadcast %cst_53 : f32 to vector<128x1xf32>
    %185 = arith.mulf %183, %184 : vector<128x1xf32>
    %cst_54 = arith.constant 9.99999974E-6 : f32
    %186 = vector.broadcast %cst_54 : f32 to vector<128x1xf32>
    %187 = arith.addf %185, %186 : vector<128x1xf32>
    %188 = math.rsqrt %187 : vector<128x1xf32>
    %189 = vector.broadcast %188 : vector<128x1xf32> to vector<128x128xf32>
    %190 = arith.mulf %180, %189 : vector<128x128xf32>
    %191 = vector.broadcast %12 : vector<1x128xf32> to vector<128x128xf32>
    %192 = arith.mulf %190, %191 : vector<128x128xf32>
    %193 = vector.broadcast %13 : vector<1x128xf32> to vector<128x128xf32>
    %194 = arith.addf %192, %193 : vector<128x128xf32>
    %c0_55 = arith.constant 0 : index
    %c0_56 = arith.constant 0 : index
    %195 = vector.load %arg8[%c0_55, %c0_56] : memref<128x128xf32, #tpu.memory_space<vmem>>, vector<128x128xf32>
    tpu.vector_store %arg8[%c0_55, %c0_56], %194 {strides = array<i32>} : memref<128x128xf32, #tpu.memory_space<vmem>>, vector<128x128xf32>,
    return
  }
  func.func @transform_0(%arg0: i32) -> (i32, i32) {
    %c0_i32 = arith.constant 0 : i32
    %c0_i32_0 = arith.constant 0 : i32
    %c0_i32_1 = arith.constant 0 : i32
    return %c0_i32, %c0_i32_0 : i32, i32
  }
  func.func @transform_1(%arg0: i32) -> (i32, i32) {
    %c0_i32 = arith.constant 0 : i32
    %c0_i32_0 = arith.constant 0 : i32
    %c0_i32_1 = arith.constant 0 : i32
    return %c0_i32, %c0_i32_0 : i32, i32
  }
  func.func @transform_2(%arg0: i32) -> (i32, i32, i32) {
    %c0_i32 = arith.constant 0 : i32
    %c0_i32_0 = arith.constant 0 : i32
    %c0_i32_1 = arith.constant 0 : i32
    return %arg0, %c0_i32, %c0_i32_0 : i32, i32, i32
  }
  func.func @transform_3(%arg0: i32) -> (i32, i32, i32) {
    %c0_i32 = arith.constant 0 : i32
    %c0_i32_0 = arith.constant 0 : i32
    %c0_i32_1 = arith.constant 0 : i32
    return %arg0, %c0_i32, %c0_i32_0 : i32, i32, i32
  }
  func.func @transform_4(%arg0: i32) -> (i32, i32, i32) {
    %c0_i32 = arith.constant 0 : i32
    %c0_i32_0 = arith.constant 0 : i32
    %c0_i32_1 = arith.constant 0 : i32
    return %arg0, %c0_i32, %c0_i32_0 : i32, i32, i32
  }
  func.func @transform_5(%arg0: i32) -> (i32, i32, i32) {
    %c0_i32 = arith.constant 0 : i32
    %c0_i32_0 = arith.constant 0 : i32
    %c0_i32_1 = arith.constant 0 : i32
    return %arg0, %c0_i32, %c0_i32_0 : i32, i32, i32
  }
  func.func @transform_6(%arg0: i32) -> (i32, i32, i32) {
    %c0_i32 = arith.constant 0 : i32
    %c0_i32_0 = arith.constant 0 : i32
    %c0_i32_1 = arith.constant 0 : i32
    return %arg0, %c0_i32, %c0_i32_0 : i32, i32, i32
  }
  func.func @transform_7(%arg0: i32) -> (i32, i32) {
    %c0_i32 = arith.constant 0 : i32
    %c0_i32_0 = arith.constant 0 : i32
    %c0_i32_1 = arith.constant 0 : i32
    return %c0_i32, %c0_i32_0 : i32, i32
  }
}

</mosaic_0001>

<llo_original>
// kernel: tpu_custom_call.1
$region0: #{tpu_custom_call.1}
  #allocation0 [shape = 'u32[]', space=smem, size = 0x4, offset = 0x4, fixed_abs, tag = 'smem constant byte address 0x4 - core index']
  #allocation1 [shape = 'u32[72,128]{1,0:T(1,128)}', space=vmem, size = 0x9000, scoped, tag = 'internal scratch']
  %s0 = inlined_call_operand.vmem [shape: f32[128,128], index: 0, kind: input, shape index: {}]
  %s1 = inlined_call_operand.vmem [shape: f32[128,128], index: 1, kind: input, shape index: {}]
  %s2 = inlined_call_operand.vmem [shape: bf16[2,128,512], index: 2, kind: input, shape index: {}]
  %s3 = inlined_call_operand.vmem [shape: f32[2,512,8], index: 3, kind: input, shape index: {}]
  %s4 = inlined_call_operand.vmem [shape: bf16[2,128,128], index: 4, kind: input, shape index: {}]
  %s5 = inlined_call_operand.vmem [shape: bf16[2,128,128], index: 5, kind: input, shape index: {}]
  %s6 = inlined_call_operand.vmem [shape: f32[2,8,128], index: 6, kind: input, shape index: {}]
  %s7 = inlined_call_operand.hbm [shape: f32[128,128], index: 7, kind: output, shape index: {}]
  %s8 = sld [smem:[#allocation0]]
  $region65: #{tpu_custom_call.1} parent=0
    _
  %s10 = ssub.s32 1, %s8
  %s11 = scalar_select 0, %s10, %s8
  $region1: #{tpu_custom_call.1} parent=0
    #allocation2 [shape = 'u8[65536]{0}', space=vmem, size = 0x10000, scoped, tag = 'output window, operand 0, single buffered']
    #allocation3 [shape = 's32[2]{0}', space=sflag, size = 0x8, scoped, tag = 'scoped memory for tpu_custom_call.1']
    %12 = vsyncpa [#allocation3], 0
    loop: start=0, step=1, limit=4
    $region2: #{tpu_custom_call.1} parent=1 // loop_pre_header
      _
    $region3: #{tpu_custom_call.1} parent=1 // loop_header
      %s14 = sphi 0, %s18
      %p15 = scmp.ge.s32.totalorder %s14, 4
      %s22 = sphi 0, %s22
      %s24 = sphi 0, %s22
      %s25 = sphi 0, %s24
      %s39 = sphi 0, %s25
      %s43 = sphi 0, %s43
      %s45 = sphi 0, %s43
      %s46 = sphi 0, %s45
      %s60 = sphi 0, %s46
      %s66 = sphi 0, %s68
      %s69 = sphi 0, %s66
      %s70 = sphi 0, %s69
      %s86 = sphi 0, %s70
      %s92 = sphi 0, %s94
      %s95 = sphi 0, %s92
      %s96 = sphi 0, %s95
      %s112 = sphi 0, %s96
      %s118 = sphi 0, %s120
      %s121 = sphi 0, %s118
      %s122 = sphi 0, %s121
      %s138 = sphi 0, %s122
      %s144 = sphi 0, %s146
      %s147 = sphi 0, %s144
      %s148 = sphi 0, %s147
      %s164 = sphi 0, %s148
      %s170 = sphi 0, %s172
      %s173 = sphi 0, %s170
      %s174 = sphi 0, %s173
      %s190 = sphi 0, %s174
      %s194 = sphi 0, %s194
      %s196 = sphi 0, %s194
      %s197 = sphi 0, %s196
      %s211 = sphi 0, %s197
    $region4: #{tpu_custom_call.1} parent=1 // loop_header_branch
      %17 = sbr.rel (%p15) target = $region8
    $region5: #{tpu_custom_call.1} parent=1 // loop_body
      %s19 = ssub.s32 %s14, 1
      %s20 = ssub.s32 %s14, 2
      %s21 = sadd.s32 %s14, 1
      %s23 = sadd.s32 %s22, 1
      %p26 = scmp.eq.s32.totalorder %s14, 1
      %p27 = scmp.ne.s32.totalorder %s22, %s24
      %p28 = scmp.eq.s32.totalorder %s14, 0
      %p29 = por %p27, %p28
      %p30 = scmp.ne.s32.totalorder %s22, %s24
      %p31 = scmp.eq.s32.totalorder %s19, 1
      %p32 = por %p30, %p31
      %p33 = scmp.ne.s32.totalorder %s24, %s25
      %p34 = scmp.eq.s32.totalorder %s19, 0
      %p35 = por %p33, %p34
      %p36 = scmp.ne.s32.totalorder %s24, %s25
      %p37 = scmp.eq.s32.totalorder %s20, 1
      %p38 = por %p36, %p37
      %p40 = scmp.ne.s32.totalorder %s25, %s39
      %p41 = scmp.eq.s32.totalorder %s20, 0
      %p42 = por %p40, %p41
      %s44 = sadd.s32 %s43, 1
      %p47 = scmp.eq.s32.totalorder %s14, 1
      %p48 = scmp.ne.s32.totalorder %s43, %s45
      %p49 = scmp.eq.s32.totalorder %s14, 0
      %p50 = por %p48, %p49
      %p51 = scmp.ne.s32.totalorder %s43, %s45
      %p52 = scmp.eq.s32.totalorder %s19, 1
      %p53 = por %p51, %p52
      %p54 = scmp.ne.s32.totalorder %s45, %s46
      %p55 = scmp.eq.s32.totalorder %s19, 0
      %p56 = por %p54, %p55
      %p57 = scmp.ne.s32.totalorder %s45, %s46
      %p58 = scmp.eq.s32.totalorder %s20, 1
      %p59 = por %p57, %p58
      %p61 = scmp.ne.s32.totalorder %s46, %s60
      %p62 = scmp.eq.s32.totalorder %s20, 0
      %p63 = por %p61, %p62
      %s64 = ssub.s32 %s14, %s21
      %p65 = scmp.eq.s32.totalorder %s64, 0
      %s67 = sadd.s32 %s66, 1
      %s68 = scalar_select %p65, %s66, %s67
      %p71 = pneg %p65
      %p72 = scmp.eq.s32.totalorder %s14, 1
      %p73 = por %p71, %p72
      %p74 = scmp.ne.s32.totalorder %s66, %s69
      %p75 = scmp.eq.s32.totalorder %s14, 0
      %p76 = por %p74, %p75
      %p77 = scmp.ne.s32.totalorder %s66, %s69
      %p78 = scmp.eq.s32.totalorder %s19, 1
      %p79 = por %p77, %p78
      %p80 = scmp.ne.s32.totalorder %s69, %s70
      %p81 = scmp.eq.s32.totalorder %s19, 0
      %p82 = por %p80, %p81
      %p83 = scmp.ne.s32.totalorder %s69, %s70
      %p84 = scmp.eq.s32.totalorder %s20, 1
      %p85 = por %p83, %p84
      %p87 = scmp.ne.s32.totalorder %s70, %s86
      %p88 = scmp.eq.s32.totalorder %s20, 0
      %p89 = por %p87, %p88
      %s90 = ssub.s32 %s14, %s21
      %p91 = scmp.eq.s32.totalorder %s90, 0
      %s93 = sadd.s32 %s92, 1
      %s94 = scalar_select %p91, %s92, %s93
      %p97 = pneg %p91
      %p98 = scmp.eq.s32.totalorder %s14, 1
      %p99 = por %p97, %p98
      %p100 = scmp.ne.s32.totalorder %s92, %s95
      %p101 = scmp.eq.s32.totalorder %s14, 0
      %p102 = por %p100, %p101
      %p103 = scmp.ne.s32.totalorder %s92, %s95
      %p104 = scmp.eq.s32.totalorder %s19, 1
      %p105 = por %p103, %p104
      %p106 = scmp.ne.s32.totalorder %s95, %s96
      %p107 = scmp.eq.s32.totalorder %s19, 0
      %p108 = por %p106, %p107
      %p109 = scmp.ne.s32.totalorder %s95, %s96
      %p110 = scmp.eq.s32.totalorder %s20, 1
      %p111 = por %p109, %p110
      %p113 = scmp.ne.s32.totalorder %s96, %s112
      %p114 = scmp.eq.s32.totalorder %s20, 0
      %p115 = por %p113, %p114
      %s116 = ssub.s32 %s14, %s21
      %p117 = scmp.eq.s32.totalorder %s116, 0
      %s119 = sadd.s32 %s118, 1
      %s120 = scalar_select %p117, %s118, %s119
      %p123 = pneg %p117
      %p124 = scmp.eq.s32.totalorder %s14, 1
      %p125 = por %p123, %p124
      %p126 = scmp.ne.s32.totalorder %s118, %s121
      %p127 = scmp.eq.s32.totalorder %s14, 0
      %p128 = por %p126, %p127
      %p129 = scmp.ne.s32.totalorder %s118, %s121
      %p130 = scmp.eq.s32.totalorder %s19, 1
      %p131 = por %p129, %p130
      %p132 = scmp.ne.s32.totalorder %s121, %s122
      %p133 = scmp.eq.s32.totalorder %s19, 0
      %p134 = por %p132, %p133
      %p135 = scmp.ne.s32.totalorder %s121, %s122
      %p136 = scmp.eq.s32.totalorder %s20, 1
      %p137 = por %p135, %p136
      %p139 = scmp.ne.s32.totalorder %s122, %s138
      %p140 = scmp.eq.s32.totalorder %s20, 0
      %p141 = por %p139, %p140
      %s142 = ssub.s32 %s14, %s21
      %p143 = scmp.eq.s32.totalorder %s142, 0
      %s145 = sadd.s32 %s144, 1
      %s146 = scalar_select %p143, %s144, %s145
      %p149 = pneg %p143
      %p150 = scmp.eq.s32.totalorder %s14, 1
      %p151 = por %p149, %p150
      %p152 = scmp.ne.s32.totalorder %s144, %s147
      %p153 = scmp.eq.s32.totalorder %s14, 0
      %p154 = por %p152, %p153
      %p155 = scmp.ne.s32.totalorder %s144, %s147
      %p156 = scmp.eq.s32.totalorder %s19, 1
      %p157 = por %p155, %p156
      %p158 = scmp.ne.s32.totalorder %s147, %s148
      %p159 = scmp.eq.s32.totalorder %s19, 0
      %p160 = por %p158, %p159
      %p161 = scmp.ne.s32.totalorder %s147, %s148
      %p162 = scmp.eq.s32.totalorder %s20, 1
      %p163 = por %p161, %p162
      %p165 = scmp.ne.s32.totalorder %s148, %s164
      %p166 = scmp.eq.s32.totalorder %s20, 0
      %p167 = por %p165, %p166
      %s168 = ssub.s32 %s14, %s21
      %p169 = scmp.eq.s32.totalorder %s168, 0
      %s171 = sadd.s32 %s170, 1
      %s172 = scalar_select %p169, %s170, %s171
      %p175 = pneg %p169
      %p176 = scmp.eq.s32.totalorder %s14, 1
      %p177 = por %p175, %p176
      %p178 = scmp.ne.s32.totalorder %s170, %s173
      %p179 = scmp.eq.s32.totalorder %s14, 0
      %p180 = por %p178, %p179
      %p181 = scmp.ne.s32.totalorder %s170, %s173
      %p182 = scmp.eq.s32.totalorder %s19, 1
      %p183 = por %p181, %p182
      %p184 = scmp.ne.s32.totalorder %s173, %s174
      %p185 = scmp.eq.s32.totalorder %s19, 0
      %p186 = por %p184, %p185
      %p187 = scmp.ne.s32.totalorder %s173, %s174
      %p188 = scmp.eq.s32.totalorder %s20, 1
      %p189 = por %p187, %p188
      %p191 = scmp.ne.s32.totalorder %s174, %s190
      %p192 = scmp.eq.s32.totalorder %s20, 0
      %p193 = por %p191, %p192
      %s195 = sadd.s32 %s194, 1
      %p198 = scmp.eq.s32.totalorder %s14, 1
      %p199 = scmp.ne.s32.totalorder %s194, %s196
      %p200 = scmp.eq.s32.totalorder %s14, 0
      %p201 = por %p199, %p200
      %p202 = scmp.ne.s32.totalorder %s194, %s196
      %p203 = scmp.eq.s32.totalorder %s19, 1
      %p204 = por %p202, %p203
      %p205 = scmp.ne.s32.totalorder %s196, %s197
      %p206 = scmp.eq.s32.totalorder %s19, 0
      %p207 = por %p205, %p206
      %p208 = scmp.ne.s32.totalorder %s196, %s197
      %p209 = scmp.eq.s32.totalorder %s20, 1
      %p210 = por %p208, %p209
      %p212 = scmp.ne.s32.totalorder %s197, %s211
      %p213 = scmp.eq.s32.totalorder %s20, 0
      %p214 = por %p212, %p213
      %p215 = scmp.le.s32.totalorder 1, %s14
      %p216 = scmp.lt.s32.totalorder %s14, 3
      %p217 = pnand %p215, %p216
      %p218 = pneg %p217
      // Predicated region
      $region9: #{tpu_custom_call.1} parent=5 // pred_check
        _
      $region10: #{tpu_custom_call.1} parent=5 // pred_check_branch
        %220 = sbr.rel (%p217) target = $region12
      $region11: #{tpu_custom_call.1} parent=5 // pred_region
        %s221 = ssub.s32 %s14, 1
        // Predicated region
        $region13: #{tpu_custom_call.1} parent=11 // pred_check
          %p222 = pneg %p35
        $region14: #{tpu_custom_call.1} parent=11 // pred_check_branch
          %224 = sbr.rel (%p222) target = $region16
        $region15: #{tpu_custom_call.1} parent=11 // pred_region
          _
        $region16: #{tpu_custom_call.1} parent=11 // pred_fallthru
          _
        // Predicated region
        $region17: #{tpu_custom_call.1} parent=11 // pred_check
          %p225 = pneg %p56
        $region18: #{tpu_custom_call.1} parent=11 // pred_check_branch
          %227 = sbr.rel (%p225) target = $region20
        $region19: #{tpu_custom_call.1} parent=11 // pred_region
          _
        $region20: #{tpu_custom_call.1} parent=11 // pred_fallthru
          _
      $region12: #{tpu_custom_call.1} parent=5 // pred_fallthru
        _
      %p228 = scmp.lt.s32.totalorder %s14, 2
      // Predicated region
      $region21: #{tpu_custom_call.1} parent=5 // pred_check
        %p229 = pneg %p228
      $region22: #{tpu_custom_call.1} parent=5 // pred_check_branch
        %231 = sbr.rel (%p229) target = $region24
      $region23: #{tpu_custom_call.1} parent=5 // pred_region
        // Predicated region
        $region25: #{tpu_custom_call.1} parent=23 // pred_check
          %p232 = pneg %p76
        $region26: #{tpu_custom_call.1} parent=23 // pred_check_branch
          %234 = sbr.rel (%p232) target = $region28
        $region27: #{tpu_custom_call.1} parent=23 // pred_region
          %p235 = scmp.lt.s32.totalorder %s14, 1
          %s236 = scalar_select %p235, %s14, 1
          %s237 = smul.addr %s236, 64
          %s238 = smul.addr %s237, 4
          %s239 = scalar_lea.vmem %s2, %s238
        $region28: #{tpu_custom_call.1} parent=23 // pred_fallthru
          _
        // Predicated region
        $region29: #{tpu_custom_call.1} parent=23 // pred_check
          %p240 = pneg %p102
        $region30: #{tpu_custom_call.1} parent=23 // pred_check_branch
          %242 = sbr.rel (%p240) target = $region32
        $region31: #{tpu_custom_call.1} parent=23 // pred_region
          %p243 = scmp.lt.s32.totalorder %s14, 1
          %s244 = scalar_select %p243, %s14, 1
          %s245 = smul.addr %s244, 64
          %s246 = smul.addr %s245, 8
          %s247 = scalar_lea.vmem %s3, %s246
        $region32: #{tpu_custom_call.1} parent=23 // pred_fallthru
          _
        // Predicated region
        $region33: #{tpu_custom_call.1} parent=23 // pred_check
          %p248 = pneg %p128
        $region34: #{tpu_custom_call.1} parent=23 // pred_check_branch
          %250 = sbr.rel (%p248) target = $region36
        $region35: #{tpu_custom_call.1} parent=23 // pred_region
          %p251 = scmp.lt.s32.totalorder %s14, 1
          %s252 = scalar_select %p251, %s14, 1
          %s253 = smul.addr %s252, 16
          %s254 = smul.addr %s253, 4
          %s255 = scalar_lea.vmem %s4, %s254
        $region36: #{tpu_custom_call.1} parent=23 // pred_fallthru
          _
        // Predicated region
        $region37: #{tpu_custom_call.1} parent=23 // pred_check
          %p256 = pneg %p154
        $region38: #{tpu_custom_call.1} parent=23 // pred_check_branch
          %258 = sbr.rel (%p256) target = $region40
        $region39: #{tpu_custom_call.1} parent=23 // pred_region
          %p259 = scmp.lt.s32.totalorder %s14, 1
          %s260 = scalar_select %p259, %s14, 1
          %s261 = smul.addr %s260, 16
          %s262 = smul.addr %s261, 4
          %s263 = scalar_lea.vmem %s5, %s262
        $region40: #{tpu_custom_call.1} parent=23 // pred_fallthru
          _
        // Predicated region
        $region41: #{tpu_custom_call.1} parent=23 // pred_check
          %p264 = pneg %p180
        $region42: #{tpu_custom_call.1} parent=23 // pred_check_branch
          %266 = sbr.rel (%p264) target = $region44
        $region43: #{tpu_custom_call.1} parent=23 // pred_region
          %p267 = scmp.lt.s32.totalorder %s14, 1
          %s268 = scalar_select %p267, %s14, 1
          %s269 = smul.addr %s268, 8
          %s270 = scalar_lea.vmem %s6, %s269
        $region44: #{tpu_custom_call.1} parent=23 // pred_fallthru
          _
      $region24: #{tpu_custom_call.1} parent=5 // pred_fallthru
        _
      %p271 = scmp.le.s32.totalorder 1, %s14
      %p272 = scmp.lt.s32.totalorder %s14, 3
      %p273 = pnand %p271, %p272
      %p274 = pneg %p273
      // Predicated region
      $region45: #{tpu_custom_call.1} parent=5 // pred_check
        _
      $region46: #{tpu_custom_call.1} parent=5 // pred_check_branch
        %276 = sbr.rel (%p273) target = $region48
      $region47: #{tpu_custom_call.1} parent=5 // pred_region
        %s277 = ssub.s32 %s14, 1
        %p278 = pneg %p35
        %p279 = pneg %p32
        %p280 = pneg %p56
        %p281 = pneg %p53
        %p282 = scmp.lt.s32.totalorder %s19, 1
        %s283 = scalar_select %p282, %s19, 1
        %s284 = smul.addr %s283, 64
        %s285 = smul.addr %s284, 4
        %s286 = scalar_lea.vmem %s2, %s285
        %p287 = pneg %p82
        %p288 = pneg %p79
        %p289 = scmp.lt.s32.totalorder %s19, 1
        %s290 = scalar_select %p289, %s19, 1
        %s291 = smul.addr %s290, 64
        %s292 = smul.addr %s291, 8
        %s293 = scalar_lea.vmem %s3, %s292
        %p294 = pneg %p108
        %p295 = pneg %p105
        %p296 = scmp.lt.s32.totalorder %s19, 1
        %s297 = scalar_select %p296, %s19, 1
        %s298 = smul.addr %s297, 16
        %s299 = smul.addr %s298, 4
        %s300 = scalar_lea.vmem %s4, %s299
        %p301 = pneg %p134
        %p302 = pneg %p131
        %p303 = scmp.lt.s32.totalorder %s19, 1
        %s304 = scalar_select %p303, %s19, 1
        %s305 = smul.addr %s304, 16
        %s306 = smul.addr %s305, 4
        %s307 = scalar_lea.vmem %s5, %s306
        %p308 = pneg %p160
        %p309 = pneg %p157
        %p310 = scmp.lt.s32.totalorder %s19, 1
        %s311 = scalar_select %p310, %s19, 1
        %s312 = smul.addr %s311, 8
        %s313 = scalar_lea.vmem %s6, %s312
        %p314 = pneg %p186
        %p315 = pneg %p183
        %p316 = pneg %p207
        %p317 = pneg %p204
        %p318 = scmp.lt.s32.totalorder %s19, 1
        %s319 = scalar_select %p318, %s19, 1
        %s320 = smul.addr %s319, 64
        %s321 = smul.addr %s320, 4
        %s322 = scalar_lea.vmem %s2, %s321
        %p323 = scmp.lt.s32.totalorder %s19, 1
        %s324 = scalar_select %p323, %s19, 1
        %s325 = smul.addr %s324, 64
        %s326 = smul.addr %s325, 8
        %s327 = scalar_lea.vmem %s3, %s326
        %p328 = scmp.lt.s32.totalorder %s19, 1
        %s329 = scalar_select %p328, %s19, 1
        %s330 = smul.addr %s329, 16
        %s331 = smul.addr %s330, 4
        %s332 = scalar_lea.vmem %s4, %s331
        %p333 = scmp.lt.s32.totalorder %s19, 1
        %s334 = scalar_select %p333, %s19, 1
        %s335 = smul.addr %s334, 16
        %s336 = smul.addr %s335, 4
        %s337 = scalar_lea.vmem %s5, %s336
        %p338 = scmp.lt.s32.totalorder %s19, 1
        %s339 = scalar_select %p338, %s19, 1
        %s340 = smul.addr %s339, 8
        %s341 = scalar_lea.vmem %s6, %s340
        %p342 = scmp.eq.s32.totalorder %s19, 0
        // Predicated region
        $region49: #{tpu_custom_call.1} parent=47 // pred_check
          %p343 = pneg %p342
        $region50: #{tpu_custom_call.1} parent=47 // pred_check_branch
          %345 = sbr.rel (%p343) target = $region52
        $region51: #{tpu_custom_call.1} parent=47 // pred_region
          %v346 = vld [vmem:[%s0] sm:$0xff]
          %v347 = vld [vmem:[%s0 + $0x8] sm:$0xff]
          %v348 = vld [vmem:[%s0 + $0x10] sm:$0xff]
          %v349 = vld [vmem:[%s0 + $0x18] sm:$0xff]
          %v350 = vld [vmem:[%s0 + $0x20] sm:$0xff]
          %v351 = vld [vmem:[%s0 + $0x28] sm:$0xff]
          %v352 = vld [vmem:[%s0 + $0x30] sm:$0xff]
          %v353 = vld [vmem:[%s0 + $0x38] sm:$0xff]
          %v354 = vld [vmem:[%s0 + $0x40] sm:$0xff]
          %v355 = vld [vmem:[%s0 + $0x48] sm:$0xff]
          %v356 = vld [vmem:[%s0 + $0x50] sm:$0xff]
          %v357 = vld [vmem:[%s0 + $0x58] sm:$0xff]
          %v358 = vld [vmem:[%s0 + $0x60] sm:$0xff]
          %v359 = vld [vmem:[%s0 + $0x68] sm:$0xff]
          %v360 = vld [vmem:[%s0 + $0x70] sm:$0xff]
          %v361 = vld [vmem:[%s0 + $0x78] sm:$0xff]
          %362 = vst [vmem:[#allocation2] sm:$0xff] %v346
          %363 = vst [vmem:[#allocation2 + $0x8] sm:$0xff] %v347
          %364 = vst [vmem:[#allocation2 + $0x10] sm:$0xff] %v348
          %365 = vst [vmem:[#allocation2 + $0x18] sm:$0xff] %v349
          %366 = vst [vmem:[#allocation2 + $0x20] sm:$0xff] %v350
          %367 = vst [vmem:[#allocation2 + $0x28] sm:$0xff] %v351
          %368 = vst [vmem:[#allocation2 + $0x30] sm:$0xff] %v352
          %369 = vst [vmem:[#allocation2 + $0x38] sm:$0xff] %v353
          %370 = vst [vmem:[#allocation2 + $0x40] sm:$0xff] %v354
          %371 = vst [vmem:[#allocation2 + $0x48] sm:$0xff] %v355
          %372 = vst [vmem:[#allocation2 + $0x50] sm:$0xff] %v356
          %373 = vst [vmem:[#allocation2 + $0x58] sm:$0xff] %v357
          %374 = vst [vmem:[#allocation2 + $0x60] sm:$0xff] %v358
          %375 = vst [vmem:[#allocation2 + $0x68] sm:$0xff] %v359
          %376 = vst [vmem:[#allocation2 + $0x70] sm:$0xff] %v360
          %377 = vst [vmem:[#allocation2 + $0x78] sm:$0xff] %v361
        $region52: #{tpu_custom_call.1} parent=47 // pred_fallthru
          _
        %v378 = vld [vmem:[#allocation2] sm:$0xff]
        %v379 = vld [vmem:[#allocation2 + $0x8] sm:$0xff]
        %v380 = vld [vmem:[#allocation2 + $0x10] sm:$0xff]
        %v381 = vld [vmem:[#allocation2 + $0x18] sm:$0xff]
        %v382 = vld [vmem:[#allocation2 + $0x20] sm:$0xff]
        %v383 = vld [vmem:[#allocation2 + $0x28] sm:$0xff]
        %v384 = vld [vmem:[#allocation2 + $0x30] sm:$0xff]
        %v385 = vld [vmem:[#allocation2 + $0x38] sm:$0xff]
        %v386 = vld [vmem:[#allocation2 + $0x40] sm:$0xff]
        %v387 = vld [vmem:[#allocation2 + $0x48] sm:$0xff]
        %v388 = vld [vmem:[#allocation2 + $0x50] sm:$0xff]
        %v389 = vld [vmem:[#allocation2 + $0x58] sm:$0xff]
        %v390 = vld [vmem:[#allocation2 + $0x60] sm:$0xff]
        %v391 = vld [vmem:[#allocation2 + $0x68] sm:$0xff]
        %v392 = vld [vmem:[#allocation2 + $0x70] sm:$0xff]
        %v393 = vld [vmem:[#allocation2 + $0x78] sm:$0xff]
        %v394 = vld [vmem:[%s1] sm:$0xff]
        %v395 = vld [vmem:[%s1 + $0x8] sm:$0xff]
        %v396 = vld [vmem:[%s1 + $0x10] sm:$0xff]
        %v397 = vld [vmem:[%s1 + $0x18] sm:$0xff]
        %v398 = vld [vmem:[%s1 + $0x20] sm:$0xff]
        %v399 = vld [vmem:[%s1 + $0x28] sm:$0xff]
        %v400 = vld [vmem:[%s1 + $0x30] sm:$0xff]
        %v401 = vld [vmem:[%s1 + $0x38] sm:$0xff]
        %v402 = vld [vmem:[%s1 + $0x40] sm:$0xff]
        %v403 = vld [vmem:[%s1 + $0x48] sm:$0xff]
        %v404 = vld [vmem:[%s1 + $0x50] sm:$0xff]
        %v405 = vld [vmem:[%s1 + $0x58] sm:$0xff]
        %v406 = vld [vmem:[%s1 + $0x60] sm:$0xff]
        %v407 = vld [vmem:[%s1 + $0x68] sm:$0xff]
        %v408 = vld [vmem:[%s1 + $0x70] sm:$0xff]
        %v409 = vld [vmem:[%s1 + $0x78] sm:$0xff]
        %v410 = vld [vmem:[%s341] sm:$0xff]
        %v411 = vlaneseq
        %v412 = vand.u32 %v411, 127
        %vm413 = vcmp.lt.s32.totalorder %v412, 32
        %v414 = vsel %vm413, 1, 0
        %v415 = vcvt.s32.f32 %v414
        %v416 = vpack.c.bf16 %v379, %v378
        %v417 = vpack.c.bf16 %v381, %v380
        %v418 = vpack.c.bf16 %v383, %v382
        %v419 = vpack.c.bf16 %v385, %v384
        %v420 = vpack.c.bf16 %v387, %v386
        %v421 = vpack.c.bf16 %v389, %v388
        %v422 = vpack.c.bf16 %v391, %v390
        %v423 = vpack.c.bf16 %v393, %v392
        %v424 = vld [vmem:[%s322] sm:$0xff]
        %v425 = vld [vmem:[%s322 + $0x8] sm:$0xff]
        %v426 = vld [vmem:[%s322 + $0x10] sm:$0xff]
        %v427 = vld [vmem:[%s322 + $0x18] sm:$0xff]
        %v428 = vld [vmem:[%s322 + $0x20] sm:$0xff]
        %v429 = vld [vmem:[%s322 + $0x28] sm:$0xff]
        %v430 = vld [vmem:[%s322 + $0x30] sm:$0xff]
        %v431 = vld [vmem:[%s322 + $0x38] sm:$0xff]
        %v432 = vld [vmem:[%s322 + $0x40] sm:$0xff]
        %v433 = vld [vmem:[%s322 + $0x48] sm:$0xff]
        %v434 = vld [vmem:[%s322 + $0x50] sm:$0xff]
        %v435 = vld [vmem:[%s322 + $0x58] sm:$0xff]
        %v436 = vld [vmem:[%s322 + $0x60] sm:$0xff]
        %v437 = vld [vmem:[%s322 + $0x68] sm:$0xff]
        %v438 = vld [vmem:[%s322 + $0x70] sm:$0xff]
        %v439 = vld [vmem:[%s322 + $0x78] sm:$0xff]
        %v440 = vld [vmem:[%s322 + $0x80] sm:$0xff]
        %v441 = vld [vmem:[%s322 + $0x88] sm:$0xff]
        %v442 = vld [vmem:[%s322 + $0x90] sm:$0xff]
        %v443 = vld [vmem:[%s322 + $0x98] sm:$0xff]
        %v444 = vld [vmem:[%s322 + $0xa0] sm:$0xff]
        %v445 = vld [vmem:[%s322 + $0xa8] sm:$0xff]
        %v446 = vld [vmem:[%s322 + $0xb0] sm:$0xff]
        %v447 = vld [vmem:[%s322 + $0xb8] sm:$0xff]
        %v448 = vld [vmem:[%s322 + $0xc0] sm:$0xff]
        %v449 = vld [vmem:[%s322 + $0xc8] sm:$0xff]
        %v450 = vld [vmem:[%s322 + $0xd0] sm:$0xff]
        %v451 = vld [vmem:[%s322 + $0xd8] sm:$0xff]
        %v452 = vld [vmem:[%s322 + $0xe0] sm:$0xff]
        %v453 = vld [vmem:[%s322 + $0xe8] sm:$0xff]
        %v454 = vld [vmem:[%s322 + $0xf0] sm:$0xff]
        %v455 = vld [vmem:[%s322 + $0xf8] sm:$0xff]
        %v488 = vunpack.c.l.b16 %v424
        %v489 = vunpack.c.h.b16 %v424
        %v490 = vunpack.c.l.b16 %v425
        %v491 = vunpack.c.h.b16 %v425
        %v492 = vunpack.c.l.b16 %v426
        %v493 = vunpack.c.h.b16 %v426
        %v494 = vunpack.c.l.b16 %v427
        %v495 = vunpack.c.h.b16 %v427
        %v496 = vunpack.c.l.b16 %v428
        %v497 = vunpack.c.h.b16 %v428
        %v498 = vunpack.c.l.b16 %v429
        %v499 = vunpack.c.h.b16 %v429
        %v500 = vunpack.c.l.b16 %v430
        %v501 = vunpack.c.h.b16 %v430
        %v502 = vunpack.c.l.b16 %v431
        %v503 = vunpack.c.h.b16 %v431
        %v504 = vunpack.c.l.b16 %v432
        %v505 = vunpack.c.h.b16 %v432
        %v506 = vunpack.c.l.b16 %v433
        %v507 = vunpack.c.h.b16 %v433
        %v508 = vunpack.c.l.b16 %v434
        %v509 = vunpack.c.h.b16 %v434
        %v510 = vunpack.c.l.b16 %v435
        %v511 = vunpack.c.h.b16 %v435
        %v512 = vunpack.c.l.b16 %v436
        %v513 = vunpack.c.h.b16 %v436
        %v514 = vunpack.c.l.b16 %v437
        %v515 = vunpack.c.h.b16 %v437
        %v516 = vunpack.c.l.b16 %v438
        %v517 = vunpack.c.h.b16 %v438
        %v518 = vunpack.c.l.b16 %v439
        %v519 = vunpack.c.h.b16 %v439
        %v520 = vunpack.c.l.b16 %v440
        %v521 = vunpack.c.h.b16 %v440
        %v522 = vunpack.c.l.b16 %v441
        %v523 = vunpack.c.h.b16 %v441
        %v524 = vunpack.c.l.b16 %v442
        %v525 = vunpack.c.h.b16 %v442
        %v526 = vunpack.c.l.b16 %v443
        %v527 = vunpack.c.h.b16 %v443
        %v528 = vunpack.c.l.b16 %v444
        %v529 = vunpack.c.h.b16 %v444
        %v530 = vunpack.c.l.b16 %v445
        %v531 = vunpack.c.h.b16 %v445
        %v532 = vunpack.c.l.b16 %v446
        %v533 = vunpack.c.h.b16 %v446
        %v534 = vunpack.c.l.b16 %v447
        %v535 = vunpack.c.h.b16 %v447
        %v536 = vunpack.c.l.b16 %v448
        %v537 = vunpack.c.h.b16 %v448
        %v538 = vunpack.c.l.b16 %v449
        %v539 = vunpack.c.h.b16 %v449
        %v540 = vunpack.c.l.b16 %v450
        %v541 = vunpack.c.h.b16 %v450
        %v542 = vunpack.c.l.b16 %v451
        %v543 = vunpack.c.h.b16 %v451
        %v544 = vunpack.c.l.b16 %v452
        %v545 = vunpack.c.h.b16 %v452
        %v546 = vunpack.c.l.b16 %v453
        %v547 = vunpack.c.h.b16 %v453
        %v548 = vunpack.c.l.b16 %v454
        %v549 = vunpack.c.h.b16 %v454
        %v550 = vunpack.c.l.b16 %v455
        %v551 = vunpack.c.h.b16 %v455
        %v552 = vpack.c.b16 %v492, %v488
        %v553 = vpack.c.b16 %v493, %v489
        %v554 = vpack.c.b16 %v494, %v490
        %v555 = vpack.c.b16 %v495, %v491
        %v556 = vpack.c.b16 %v500, %v496
        %v557 = vpack.c.b16 %v501, %v497
        %v558 = vpack.c.b16 %v502, %v498
        %v559 = vpack.c.b16 %v503, %v499
        %v560 = vpack.c.b16 %v508, %v504
        %v561 = vpack.c.b16 %v509, %v505
        %v562 = vpack.c.b16 %v510, %v506
        %v563 = vpack.c.b16 %v511, %v507
        %v564 = vpack.c.b16 %v516, %v512
        %v565 = vpack.c.b16 %v517, %v513
        %v566 = vpack.c.b16 %v518, %v514
        %v567 = vpack.c.b16 %v519, %v515
        %v568 = vpack.c.b16 %v524, %v520
        %v569 = vpack.c.b16 %v525, %v521
        %v570 = vpack.c.b16 %v526, %v522
        %v571 = vpack.c.b16 %v527, %v523
        %v572 = vpack.c.b16 %v532, %v528
        %v573 = vpack.c.b16 %v533, %v529
        %v574 = vpack.c.b16 %v534, %v530
        %v575 = vpack.c.b16 %v535, %v531
        %v576 = vpack.c.b16 %v540, %v536
        %v577 = vpack.c.b16 %v541, %v537
        %v578 = vpack.c.b16 %v542, %v538
        %v579 = vpack.c.b16 %v543, %v539
        %v580 = vpack.c.b16 %v548, %v544
        %v581 = vpack.c.b16 %v549, %v545
        %v582 = vpack.c.b16 %v550, %v546
        %v583 = vpack.c.b16 %v551, %v547
        %616 = vmatpush.bf16.msra.mxu0 %v580
        %617 = vmatpush.bf16.msra.mxu0 %v576
        %618 = vmatpush.bf16.msra.mxu0 %v572
        %619 = vmatpush.bf16.msra.mxu0 %v568
        %620 = vmatpush.bf16.msra.mxu0 %v564
        %621 = vmatpush.bf16.msra.mxu0 %v560
        %622 = vmatpush.bf16.msra.mxu0 %v556
        %623 = vmatpush.bf16.msra.mxu0 %v552
        %624 = vmatmul.bf16.gmra.mxu0 %v416
        %v625 = vpop.f32.mrf.mxu0
        %v626 = vadd.f32 0.0, %v625
        %v627 = vpop.f32.mrf.mxu0
        %v628 = vadd.f32 0.0, %v627
        %629 = vmatmul.bf16.gmra.mxu0 %v417
        %v630 = vpop.f32.mrf.mxu0
        %v631 = vadd.f32 0.0, %v630
        %v632 = vpop.f32.mrf.mxu0
        %v633 = vadd.f32 0.0, %v632
        %634 = vmatmul.bf16.gmra.mxu0 %v418
        %v635 = vpop.f32.mrf.mxu0
        %v636 = vadd.f32 0.0, %v635
        %v637 = vpop.f32.mrf.mxu0
        %v638 = vadd.f32 0.0, %v637
        %639 = vmatmul.bf16.gmra.mxu0 %v419
        %v640 = vpop.f32.mrf.mxu0
        %v641 = vadd.f32 0.0, %v640
        %v642 = vpop.f32.mrf.mxu0
        %v643 = vadd.f32 0.0, %v642
        %644 = vmatmul.bf16.gmra.mxu0 %v420
        %v645 = vpop.f32.mrf.mxu0
        %v646 = vadd.f32 0.0, %v645
        %v647 = vpop.f32.mrf.mxu0
        %v648 = vadd.f32 0.0, %v647
        %649 = vmatmul.bf16.gmra.mxu0 %v421
        %v650 = vpop.f32.mrf.mxu0
        %v651 = vadd.f32 0.0, %v650
        %v652 = vpop.f32.mrf.mxu0
        %v653 = vadd.f32 0.0, %v652
        %654 = vmatmul.bf16.gmra.mxu0 %v422
        %v655 = vpop.f32.mrf.mxu0
        %v656 = vadd.f32 0.0, %v655
        %v657 = vpop.f32.mrf.mxu0
        %v658 = vadd.f32 0.0, %v657
        %659 = vmatmul.bf16.gmra.mxu0 %v423
        %v660 = vpop.f32.mrf.mxu0
        %v661 = vadd.f32 0.0, %v660
        %v662 = vpop.f32.mrf.mxu0
        %v663 = vadd.f32 0.0, %v662
        %664 = vdwg.mxu0
        %665 = vmatpush.bf16.msra.mxu0 %v581
        %666 = vmatpush.bf16.msra.mxu0 %v577
        %667 = vmatpush.bf16.msra.mxu0 %v573
        %668 = vmatpush.bf16.msra.mxu0 %v569
        %669 = vmatpush.bf16.msra.mxu0 %v565
        %670 = vmatpush.bf16.msra.mxu0 %v561
        %671 = vmatpush.bf16.msra.mxu0 %v557
        %672 = vmatpush.bf16.msra.mxu0 %v553
        %673 = vmatmul.bf16.gmra.mxu0 %v416
        %v674 = vpop.f32.mrf.mxu0
        %v675 = vadd.f32 0.0, %v674
        %v676 = vpop.f32.mrf.mxu0
        %v677 = vadd.f32 0.0, %v676
        %678 = vmatmul.bf16.gmra.mxu0 %v417
        %v679 = vpop.f32.mrf.mxu0
        %v680 = vadd.f32 0.0, %v679
        %v681 = vpop.f32.mrf.mxu0
        %v682 = vadd.f32 0.0, %v681
        %683 = vmatmul.bf16.gmra.mxu0 %v418
        %v684 = vpop.f32.mrf.mxu0
        %v685 = vadd.f32 0.0, %v684
        %v686 = vpop.f32.mrf.mxu0
        %v687 = vadd.f32 0.0, %v686
        %688 = vmatmul.bf16.gmra.mxu0 %v419
        %v689 = vpop.f32.mrf.mxu0
        %v690 = vadd.f32 0.0, %v689
        %v691 = vpop.f32.mrf.mxu0
        %v692 = vadd.f32 0.0, %v691
        %693 = vmatmul.bf16.gmra.mxu0 %v420
        %v694 = vpop.f32.mrf.mxu0
        %v695 = vadd.f32 0.0, %v694
        %v696 = vpop.f32.mrf.mxu0
        %v697 = vadd.f32 0.0, %v696
        %698 = vmatmul.bf16.gmra.mxu0 %v421
        %v699 = vpop.f32.mrf.mxu0
        %v700 = vadd.f32 0.0, %v699
        %v701 = vpop.f32.mrf.mxu0
        %v702 = vadd.f32 0.0, %v701
        %703 = vmatmul.bf16.gmra.mxu0 %v422
        %v704 = vpop.f32.mrf.mxu0
        %v705 = vadd.f32 0.0, %v704
        %v706 = vpop.f32.mrf.mxu0
        %v707 = vadd.f32 0.0, %v706
        %708 = vmatmul.bf16.gmra.mxu0 %v423
        %v709 = vpop.f32.mrf.mxu0
        %v710 = vadd.f32 0.0, %v709
        %v711 = vpop.f32.mrf.mxu0
        %v712 = vadd.f32 0.0, %v711
        %713 = vdwg.mxu0
        %714 = vmatpush.bf16.msra.mxu0 %v582
        %715 = vmatpush.bf16.msra.mxu0 %v578
        %716 = vmatpush.bf16.msra.mxu0 %v574
        %717 = vmatpush.bf16.msra.mxu0 %v570
        %718 = vmatpush.bf16.msra.mxu0 %v566
        %719 = vmatpush.bf16.msra.mxu0 %v562
        %720 = vmatpush.bf16.msra.mxu0 %v558
        %721 = vmatpush.bf16.msra.mxu0 %v554
        %722 = vmatmul.bf16.gmra.mxu0 %v416
        %v723 = vpop.f32.mrf.mxu0
        %v724 = vadd.f32 0.0, %v723
        %v725 = vpop.f32.mrf.mxu0
        %v726 = vadd.f32 0.0, %v725
        %727 = vmatmul.bf16.gmra.mxu0 %v417
        %v728 = vpop.f32.mrf.mxu0
        %v729 = vadd.f32 0.0, %v728
        %v730 = vpop.f32.mrf.mxu0
        %v731 = vadd.f32 0.0, %v730
        %732 = vmatmul.bf16.gmra.mxu0 %v418
        %v733 = vpop.f32.mrf.mxu0
        %v734 = vadd.f32 0.0, %v733
        %v735 = vpop.f32.mrf.mxu0
        %v736 = vadd.f32 0.0, %v735
        %737 = vmatmul.bf16.gmra.mxu0 %v419
        %v738 = vpop.f32.mrf.mxu0
        %v739 = vadd.f32 0.0, %v738
        %v740 = vpop.f32.mrf.mxu0
        %v741 = vadd.f32 0.0, %v740
        %742 = vmatmul.bf16.gmra.mxu0 %v420
        %v743 = vpop.f32.mrf.mxu0
        %v744 = vadd.f32 0.0, %v743
        %v745 = vpop.f32.mrf.mxu0
        %v746 = vadd.f32 0.0, %v745
        %747 = vmatmul.bf16.gmra.mxu0 %v421
        %v748 = vpop.f32.mrf.mxu0
        %v749 = vadd.f32 0.0, %v748
        %v750 = vpop.f32.mrf.mxu0
        %v751 = vadd.f32 0.0, %v750
        %752 = vmatmul.bf16.gmra.mxu0 %v422
        %v753 = vpop.f32.mrf.mxu0
        %v754 = vadd.f32 0.0, %v753
        %v755 = vpop.f32.mrf.mxu0
        %v756 = vadd.f32 0.0, %v755
        %757 = vmatmul.bf16.gmra.mxu0 %v423
        %v758 = vpop.f32.mrf.mxu0
        %v759 = vadd.f32 0.0, %v758
        %v760 = vpop.f32.mrf.mxu0
        %v761 = vadd.f32 0.0, %v760
        %762 = vdwg.mxu0
        %763 = vmatpush.bf16.msra.mxu0 %v583
        %764 = vmatpush.bf16.msra.mxu0 %v579
        %765 = vmatpush.bf16.msra.mxu0 %v575
        %766 = vmatpush.bf16.msra.mxu0 %v571
        %767 = vmatpush.bf16.msra.mxu0 %v567
        %768 = vmatpush.bf16.msra.mxu0 %v563
        %769 = vmatpush.bf16.msra.mxu0 %v559
        %770 = vmatpush.bf16.msra.mxu0 %v555
        %771 = vmatmul.bf16.gmra.mxu0 %v416
        %v772 = vpop.f32.mrf.mxu0
        %v773 = vadd.f32 0.0, %v772
        %v774 = vpop.f32.mrf.mxu0
        %v775 = vadd.f32 0.0, %v774
        %776 = vmatmul.bf16.gmra.mxu0 %v417
        %v777 = vpop.f32.mrf.mxu0
        %v778 = vadd.f32 0.0, %v777
        %v779 = vpop.f32.mrf.mxu0
        %v780 = vadd.f32 0.0, %v779
        %781 = vmatmul.bf16.gmra.mxu0 %v418
        %v782 = vpop.f32.mrf.mxu0
        %v783 = vadd.f32 0.0, %v782
        %v784 = vpop.f32.mrf.mxu0
        %v785 = vadd.f32 0.0, %v784
        %786 = vmatmul.bf16.gmra.mxu0 %v419
        %v787 = vpop.f32.mrf.mxu0
        %v788 = vadd.f32 0.0, %v787
        %v789 = vpop.f32.mrf.mxu0
        %v790 = vadd.f32 0.0, %v789
        %791 = vmatmul.bf16.gmra.mxu0 %v420
        %v792 = vpop.f32.mrf.mxu0
        %v793 = vadd.f32 0.0, %v792
        %v794 = vpop.f32.mrf.mxu0
        %v795 = vadd.f32 0.0, %v794
        %796 = vmatmul.bf16.gmra.mxu0 %v421
        %v797 = vpop.f32.mrf.mxu0
        %v798 = vadd.f32 0.0, %v797
        %v799 = vpop.f32.mrf.mxu0
        %v800 = vadd.f32 0.0, %v799
        %801 = vmatmul.bf16.gmra.mxu0 %v422
        %v802 = vpop.f32.mrf.mxu0
        %v803 = vadd.f32 0.0, %v802
        %v804 = vpop.f32.mrf.mxu0
        %v805 = vadd.f32 0.0, %v804
        %806 = vmatmul.bf16.gmra.mxu0 %v423
        %v807 = vpop.f32.mrf.mxu0
        %v808 = vadd.f32 0.0, %v807
        %v809 = vpop.f32.mrf.mxu0
        %v810 = vadd.f32 0.0, %v809
        %811 = vdwg.mxu0
        %v812 = vld [vmem:[%s327] sm:$0xff]
        %v813 = vld [vmem:[%s327 + $0x8] sm:$0xff]
        %v814 = vld [vmem:[%s327 + $0x10] sm:$0xff]
        %v815 = vld [vmem:[%s327 + $0x18] sm:$0xff]
        %v816 = vld [vmem:[%s327 + $0x20] sm:$0xff]
        %v817 = vld [vmem:[%s327 + $0x28] sm:$0xff]
        %v818 = vld [vmem:[%s327 + $0x30] sm:$0xff]
        %v819 = vld [vmem:[%s327 + $0x38] sm:$0xff]
        %v820 = vld [vmem:[%s327 + $0x40] sm:$0xff]
        %v821 = vld [vmem:[%s327 + $0x48] sm:$0xff]
        %v822 = vld [vmem:[%s327 + $0x50] sm:$0xff]
        %v823 = vld [vmem:[%s327 + $0x58] sm:$0xff]
        %v824 = vld [vmem:[%s327 + $0x60] sm:$0xff]
        %v825 = vld [vmem:[%s327 + $0x68] sm:$0xff]
        %v826 = vld [vmem:[%s327 + $0x70] sm:$0xff]
        %v827 = vld [vmem:[%s327 + $0x78] sm:$0xff]
        %v828 = vld [vmem:[%s327 + $0x80] sm:$0xff]
        %v829 = vld [vmem:[%s327 + $0x88] sm:$0xff]
        %v830 = vld [vmem:[%s327 + $0x90] sm:$0xff]
        %v831 = vld [vmem:[%s327 + $0x98] sm:$0xff]
        %v832 = vld [vmem:[%s327 + $0xa0] sm:$0xff]
        %v833 = vld [vmem:[%s327 + $0xa8] sm:$0xff]
        %v834 = vld [vmem:[%s327 + $0xb0] sm:$0xff]
        %v835 = vld [vmem:[%s327 + $0xb8] sm:$0xff]
        %v836 = vld [vmem:[%s327 + $0xc0] sm:$0xff]
        %v837 = vld [vmem:[%s327 + $0xc8] sm:$0xff]
        %v838 = vld [vmem:[%s327 + $0xd0] sm:$0xff]
        %v839 = vld [vmem:[%s327 + $0xd8] sm:$0xff]
        %v840 = vld [vmem:[%s327 + $0xe0] sm:$0xff]
        %v841 = vld [vmem:[%s327 + $0xe8] sm:$0xff]
        %v842 = vld [vmem:[%s327 + $0xf0] sm:$0xff]
        %v843 = vld [vmem:[%s327 + $0xf8] sm:$0xff]
        %v844 = vld [vmem:[%s327 + $0x100] sm:$0xff]
        %v845 = vld [vmem:[%s327 + $0x108] sm:$0xff]
        %v846 = vld [vmem:[%s327 + $0x110] sm:$0xff]
        %v847 = vld [vmem:[%s327 + $0x118] sm:$0xff]
        %v848 = vld [vmem:[%s327 + $0x120] sm:$0xff]
        %v849 = vld [vmem:[%s327 + $0x128] sm:$0xff]
        %v850 = vld [vmem:[%s327 + $0x130] sm:$0xff]
        %v851 = vld [vmem:[%s327 + $0x138] sm:$0xff]
        %v852 = vld [vmem:[%s327 + $0x140] sm:$0xff]
        %v853 = vld [vmem:[%s327 + $0x148] sm:$0xff]
        %v854 = vld [vmem:[%s327 + $0x150] sm:$0xff]
        %v855 = vld [vmem:[%s327 + $0x158] sm:$0xff]
        %v856 = vld [vmem:[%s327 + $0x160] sm:$0xff]
        %v857 = vld [vmem:[%s327 + $0x168] sm:$0xff]
        %v858 = vld [vmem:[%s327 + $0x170] sm:$0xff]
        %v859 = vld [vmem:[%s327 + $0x178] sm:$0xff]
        %v860 = vld [vmem:[%s327 + $0x180] sm:$0xff]
        %v861 = vld [vmem:[%s327 + $0x188] sm:$0xff]
        %v862 = vld [vmem:[%s327 + $0x190] sm:$0xff]
        %v863 = vld [vmem:[%s327 + $0x198] sm:$0xff]
        %v864 = vld [vmem:[%s327 + $0x1a0] sm:$0xff]
        %v865 = vld [vmem:[%s327 + $0x1a8] sm:$0xff]
        %v866 = vld [vmem:[%s327 + $0x1b0] sm:$0xff]
        %v867 = vld [vmem:[%s327 + $0x1b8] sm:$0xff]
        %v868 = vld [vmem:[%s327 + $0x1c0] sm:$0xff]
        %v869 = vld [vmem:[%s327 + $0x1c8] sm:$0xff]
        %v870 = vld [vmem:[%s327 + $0x1d0] sm:$0xff]
        %v871 = vld [vmem:[%s327 + $0x1d8] sm:$0xff]
        %v872 = vld [vmem:[%s327 + $0x1e0] sm:$0xff]
        %v873 = vld [vmem:[%s327 + $0x1e8] sm:$0xff]
        %v874 = vld [vmem:[%s327 + $0x1f0] sm:$0xff]
        %v875 = vld [vmem:[%s327 + $0x1f8] sm:$0xff]
        %876 = vmatpush.msra.mxu0 %v827
        %877 = vmatpush.msra.mxu0 %v826
        %878 = vmatpush.msra.mxu0 %v825
        %879 = vmatpush.msra.mxu0 %v824
        %880 = vmatpush.msra.mxu0 %v823
        %881 = vmatpush.msra.mxu0 %v822
        %882 = vmatpush.msra.mxu0 %v821
        %883 = vmatpush.msra.mxu0 %v820
        %884 = vmatpush.msra.mxu0 %v819
        %885 = vmatpush.msra.mxu0 %v818
        %886 = vmatpush.msra.mxu0 %v817
        %887 = vmatpush.msra.mxu0 %v816
        %888 = vmatpush.msra.mxu0 %v815
        %889 = vmatpush.msra.mxu0 %v814
        %890 = vmatpush.msra.mxu0 %v813
        %891 = vmatpush.msra.mxu0 %v812
        %892 = vmatmul.f32.gmra.mxu0 %v626
        %v893 = vpop.f32.mrf.mxu0
        %v894 = vadd.f32 0.0, %v893
        %895 = vmatmul.f32.gmra.mxu0 %v628
        %v896 = vpop.f32.mrf.mxu0
        %v897 = vadd.f32 0.0, %v896
        %898 = vmatmul.f32.gmra.mxu0 %v631
        %v899 = vpop.f32.mrf.mxu0
        %v900 = vadd.f32 0.0, %v899
        %901 = vmatmul.f32.gmra.mxu0 %v633
        %v902 = vpop.f32.mrf.mxu0
        %v903 = vadd.f32 0.0, %v902
        %904 = vmatmul.f32.gmra.mxu0 %v636
        %v905 = vpop.f32.mrf.mxu0
        %v906 = vadd.f32 0.0, %v905
        %907 = vmatmul.f32.gmra.mxu0 %v638
        %v908 = vpop.f32.mrf.mxu0
        %v909 = vadd.f32 0.0, %v908
        %910 = vmatmul.f32.gmra.mxu0 %v641
        %v911 = vpop.f32.mrf.mxu0
        %v912 = vadd.f32 0.0, %v911
        %913 = vmatmul.f32.gmra.mxu0 %v643
        %v914 = vpop.f32.mrf.mxu0
        %v915 = vadd.f32 0.0, %v914
        %916 = vmatmul.f32.gmra.mxu0 %v646
        %v917 = vpop.f32.mrf.mxu0
        %v918 = vadd.f32 0.0, %v917
        %919 = vmatmul.f32.gmra.mxu0 %v648
        %v920 = vpop.f32.mrf.mxu0
        %v921 = vadd.f32 0.0, %v920
        %922 = vmatmul.f32.gmra.mxu0 %v651
        %v923 = vpop.f32.mrf.mxu0
        %v924 = vadd.f32 0.0, %v923
        %925 = vmatmul.f32.gmra.mxu0 %v653
        %v926 = vpop.f32.mrf.mxu0
        %v927 = vadd.f32 0.0, %v926
        %928 = vmatmul.f32.gmra.mxu0 %v656
        %v929 = vpop.f32.mrf.mxu0
        %v930 = vadd.f32 0.0, %v929
        %931 = vmatmul.f32.gmra.mxu0 %v658
        %v932 = vpop.f32.mrf.mxu0
        %v933 = vadd.f32 0.0, %v932
        %934 = vmatmul.f32.gmra.mxu0 %v661
        %v935 = vpop.f32.mrf.mxu0
        %v936 = vadd.f32 0.0, %v935
        %937 = vmatmul.f32.gmra.mxu0 %v663
        %v938 = vpop.f32.mrf.mxu0
        %v939 = vadd.f32 0.0, %v938
        %940 = vdwg.mxu0
        %941 = vmatpush.msra.mxu0 %v843
        %942 = vmatpush.msra.mxu0 %v842
        %943 = vmatpush.msra.mxu0 %v841
        %944 = vmatpush.msra.mxu0 %v840
        %945 = vmatpush.msra.mxu0 %v839
        %946 = vmatpush.msra.mxu0 %v838
        %947 = vmatpush.msra.mxu0 %v837
        %948 = vmatpush.msra.mxu0 %v836
        %949 = vmatpush.msra.mxu0 %v835
        %950 = vmatpush.msra.mxu0 %v834
        %951 = vmatpush.msra.mxu0 %v833
        %952 = vmatpush.msra.mxu0 %v832
        %953 = vmatpush.msra.mxu0 %v831
        %954 = vmatpush.msra.mxu0 %v830
        %955 = vmatpush.msra.mxu0 %v829
        %956 = vmatpush.msra.mxu0 %v828
        %957 = vmatmul.f32.gmra.mxu0 %v675
        %v958 = vpop.f32.mrf.mxu0
        %v959 = vadd.f32 %v894, %v958
        %960 = vmatmul.f32.gmra.mxu0 %v677
        %v961 = vpop.f32.mrf.mxu0
        %v962 = vadd.f32 %v897, %v961
        %963 = vmatmul.f32.gmra.mxu0 %v680
        %v964 = vpop.f32.mrf.mxu0
        %v965 = vadd.f32 %v900, %v964
        %966 = vmatmul.f32.gmra.mxu0 %v682
        %v967 = vpop.f32.mrf.mxu0
        %v968 = vadd.f32 %v903, %v967
        %969 = vmatmul.f32.gmra.mxu0 %v685
        %v970 = vpop.f32.mrf.mxu0
        %v971 = vadd.f32 %v906, %v970
        %972 = vmatmul.f32.gmra.mxu0 %v687
        %v973 = vpop.f32.mrf.mxu0
        %v974 = vadd.f32 %v909, %v973
        %975 = vmatmul.f32.gmra.mxu0 %v690
        %v976 = vpop.f32.mrf.mxu0
        %v977 = vadd.f32 %v912, %v976
        %978 = vmatmul.f32.gmra.mxu0 %v692
        %v979 = vpop.f32.mrf.mxu0
        %v980 = vadd.f32 %v915, %v979
        %981 = vmatmul.f32.gmra.mxu0 %v695
        %v982 = vpop.f32.mrf.mxu0
        %v983 = vadd.f32 %v918, %v982
        %984 = vmatmul.f32.gmra.mxu0 %v697
        %v985 = vpop.f32.mrf.mxu0
        %v986 = vadd.f32 %v921, %v985
        %987 = vmatmul.f32.gmra.mxu0 %v700
        %v988 = vpop.f32.mrf.mxu0
        %v989 = vadd.f32 %v924, %v988
        %990 = vmatmul.f32.gmra.mxu0 %v702
        %v991 = vpop.f32.mrf.mxu0
        %v992 = vadd.f32 %v927, %v991
        %993 = vmatmul.f32.gmra.mxu0 %v705
        %v994 = vpop.f32.mrf.mxu0
        %v995 = vadd.f32 %v930, %v994
        %996 = vmatmul.f32.gmra.mxu0 %v707
        %v997 = vpop.f32.mrf.mxu0
        %v998 = vadd.f32 %v933, %v997
        %999 = vmatmul.f32.gmra.mxu0 %v710
        %v1000 = vpop.f32.mrf.mxu0
        %v1001 = vadd.f32 %v936, %v1000
        %1002 = vmatmul.f32.gmra.mxu0 %v712
        %v1003 = vpop.f32.mrf.mxu0
        %v1004 = vadd.f32 %v939, %v1003
        %1005 = vdwg.mxu0
        %1006 = vmatpush.msra.mxu0 %v859
        %1007 = vmatpush.msra.mxu0 %v858
        %1008 = vmatpush.msra.mxu0 %v857
        %1009 = vmatpush.msra.mxu0 %v856
        %1010 = vmatpush.msra.mxu0 %v855
        %1011 = vmatpush.msra.mxu0 %v854
        %1012 = vmatpush.msra.mxu0 %v853
        %1013 = vmatpush.msra.mxu0 %v852
        %1014 = vmatpush.msra.mxu0 %v851
        %1015 = vmatpush.msra.mxu0 %v850
        %1016 = vmatpush.msra.mxu0 %v849
        %1017 = vmatpush.msra.mxu0 %v848
        %1018 = vmatpush.msra.mxu0 %v847
        %1019 = vmatpush.msra.mxu0 %v846
        %1020 = vmatpush.msra.mxu0 %v845
        %1021 = vmatpush.msra.mxu0 %v844
        %1022 = vmatmul.f32.gmra.mxu0 %v724
        %v1023 = vpop.f32.mrf.mxu0
        %v1024 = vadd.f32 %v959, %v1023
        %1025 = vmatmul.f32.gmra.mxu0 %v726
        %v1026 = vpop.f32.mrf.mxu0
        %v1027 = vadd.f32 %v962, %v1026
        %1028 = vmatmul.f32.gmra.mxu0 %v729
        %v1029 = vpop.f32.mrf.mxu0
        %v1030 = vadd.f32 %v965, %v1029
        %1031 = vmatmul.f32.gmra.mxu0 %v731
        %v1032 = vpop.f32.mrf.mxu0
        %v1033 = vadd.f32 %v968, %v1032
        %1034 = vmatmul.f32.gmra.mxu0 %v734
        %v1035 = vpop.f32.mrf.mxu0
        %v1036 = vadd.f32 %v971, %v1035
        %1037 = vmatmul.f32.gmra.mxu0 %v736
        %v1038 = vpop.f32.mrf.mxu0
        %v1039 = vadd.f32 %v974, %v1038
        %1040 = vmatmul.f32.gmra.mxu0 %v739
        %v1041 = vpop.f32.mrf.mxu0
        %v1042 = vadd.f32 %v977, %v1041
        %1043 = vmatmul.f32.gmra.mxu0 %v741
        %v1044 = vpop.f32.mrf.mxu0
        %v1045 = vadd.f32 %v980, %v1044
        %1046 = vmatmul.f32.gmra.mxu0 %v744
        %v1047 = vpop.f32.mrf.mxu0
        %v1048 = vadd.f32 %v983, %v1047
        %1049 = vmatmul.f32.gmra.mxu0 %v746
        %v1050 = vpop.f32.mrf.mxu0
        %v1051 = vadd.f32 %v986, %v1050
        %1052 = vmatmul.f32.gmra.mxu0 %v749
        %v1053 = vpop.f32.mrf.mxu0
        %v1054 = vadd.f32 %v989, %v1053
        %1055 = vmatmul.f32.gmra.mxu0 %v751
        %v1056 = vpop.f32.mrf.mxu0
        %v1057 = vadd.f32 %v992, %v1056
        %1058 = vmatmul.f32.gmra.mxu0 %v754
        %v1059 = vpop.f32.mrf.mxu0
        %v1060 = vadd.f32 %v995, %v1059
        %1061 = vmatmul.f32.gmra.mxu0 %v756
        %v1062 = vpop.f32.mrf.mxu0
        %v1063 = vadd.f32 %v998, %v1062
        %1064 = vmatmul.f32.gmra.mxu0 %v759
        %v1065 = vpop.f32.mrf.mxu0
        %v1066 = vadd.f32 %v1001, %v1065
        %1067 = vmatmul.f32.gmra.mxu0 %v761
        %v1068 = vpop.f32.mrf.mxu0
        %v1069 = vadd.f32 %v1004, %v1068
        %1070 = vdwg.mxu0
        %1071 = vmatpush.msra.mxu0 %v875
        %1072 = vmatpush.msra.mxu0 %v874
        %1073 = vmatpush.msra.mxu0 %v873
        %1074 = vmatpush.msra.mxu0 %v872
        %1075 = vmatpush.msra.mxu0 %v871
        %1076 = vmatpush.msra.mxu0 %v870
        %1077 = vmatpush.msra.mxu0 %v869
        %1078 = vmatpush.msra.mxu0 %v868
        %1079 = vmatpush.msra.mxu0 %v867
        %1080 = vmatpush.msra.mxu0 %v866
        %1081 = vmatpush.msra.mxu0 %v865
        %1082 = vmatpush.msra.mxu0 %v864
        %1083 = vmatpush.msra.mxu0 %v863
        %1084 = vmatpush.msra.mxu0 %v862
        %1085 = vmatpush.msra.mxu0 %v861
        %1086 = vmatpush.msra.mxu0 %v860
        %1087 = vmatmul.f32.gmra.mxu0 %v773
        %v1088 = vpop.f32.mrf.mxu0
        %v1089 = vadd.f32 %v1024, %v1088
        %1090 = vmatmul.f32.gmra.mxu0 %v775
        %v1091 = vpop.f32.mrf.mxu0
        %v1092 = vadd.f32 %v1027, %v1091
        %1093 = vmatmul.f32.gmra.mxu0 %v778
        %v1094 = vpop.f32.mrf.mxu0
        %v1095 = vadd.f32 %v1030, %v1094
        %1096 = vmatmul.f32.gmra.mxu0 %v780
        %v1097 = vpop.f32.mrf.mxu0
        %v1098 = vadd.f32 %v1033, %v1097
        %1099 = vmatmul.f32.gmra.mxu0 %v783
        %v1100 = vpop.f32.mrf.mxu0
        %v1101 = vadd.f32 %v1036, %v1100
        %1102 = vmatmul.f32.gmra.mxu0 %v785
        %v1103 = vpop.f32.mrf.mxu0
        %v1104 = vadd.f32 %v1039, %v1103
        %1105 = vmatmul.f32.gmra.mxu0 %v788
        %v1106 = vpop.f32.mrf.mxu0
        %v1107 = vadd.f32 %v1042, %v1106
        %1108 = vmatmul.f32.gmra.mxu0 %v790
        %v1109 = vpop.f32.mrf.mxu0
        %v1110 = vadd.f32 %v1045, %v1109
        %1111 = vmatmul.f32.gmra.mxu0 %v793
        %v1112 = vpop.f32.mrf.mxu0
        %v1113 = vadd.f32 %v1048, %v1112
        %1114 = vmatmul.f32.gmra.mxu0 %v795
        %v1115 = vpop.f32.mrf.mxu0
        %v1116 = vadd.f32 %v1051, %v1115
        %1117 = vmatmul.f32.gmra.mxu0 %v798
        %v1118 = vpop.f32.mrf.mxu0
        %v1119 = vadd.f32 %v1054, %v1118
        %1120 = vmatmul.f32.gmra.mxu0 %v800
        %v1121 = vpop.f32.mrf.mxu0
        %v1122 = vadd.f32 %v1057, %v1121
        %1123 = vmatmul.f32.gmra.mxu0 %v803
        %v1124 = vpop.f32.mrf.mxu0
        %v1125 = vadd.f32 %v1060, %v1124
        %1126 = vmatmul.f32.gmra.mxu0 %v805
        %v1127 = vpop.f32.mrf.mxu0
        %v1128 = vadd.f32 %v1063, %v1127
        %1129 = vmatmul.f32.gmra.mxu0 %v808
        %v1130 = vpop.f32.mrf.mxu0
        %v1131 = vadd.f32 %v1066, %v1130
        %1132 = vmatmul.f32.gmra.mxu0 %v810
        %v1133 = vpop.f32.mrf.mxu0
        %v1134 = vadd.f32 %v1069, %v1133
        %1135 = vdwg.mxu0
        %1152 = vrot.lane.b32.xlu0 %v1089, 124
        %v1153 = vpop.permute.xlu0 %1152
        %1154 = vrot.lane.b32.xlu0 %v1092, 124
        %v1155 = vpop.permute.xlu0 %1154
        %1156 = vrot.lane.b32.xlu0 %v1095, 124
        %v1157 = vpop.permute.xlu0 %1156
        %1158 = vrot.lane.b32.xlu0 %v1098, 124
        %v1159 = vpop.permute.xlu0 %1158
        %1160 = vrot.lane.b32.xlu0 %v1101, 124
        %v1161 = vpop.permute.xlu0 %1160
        %1162 = vrot.lane.b32.xlu0 %v1104, 124
        %v1163 = vpop.permute.xlu0 %1162
        %1164 = vrot.lane.b32.xlu0 %v1107, 124
        %v1165 = vpop.permute.xlu0 %1164
        %1166 = vrot.lane.b32.xlu0 %v1110, 124
        %v1167 = vpop.permute.xlu0 %1166
        %1168 = vrot.lane.b32.xlu0 %v1113, 124
        %v1169 = vpop.permute.xlu0 %1168
        %1170 = vrot.lane.b32.xlu0 %v1116, 124
        %v1171 = vpop.permute.xlu0 %1170
        %1172 = vrot.lane.b32.xlu0 %v1119, 124
        %v1173 = vpop.permute.xlu0 %1172
        %1174 = vrot.lane.b32.xlu0 %v1122, 124
        %v1175 = vpop.permute.xlu0 %1174
        %1176 = vrot.lane.b32.xlu0 %v1125, 124
        %v1177 = vpop.permute.xlu0 %1176
        %1178 = vrot.lane.b32.xlu0 %v1128, 124
        %v1179 = vpop.permute.xlu0 %1178
        %1180 = vrot.lane.b32.xlu0 %v1131, 124
        %v1181 = vpop.permute.xlu0 %1180
        %1182 = vrot.lane.b32.xlu0 %v1134, 124
        %v1183 = vpop.permute.xlu0 %1182
        %1200 = vxpose.xlu0.b32.start [1/16] %v1153, 128
        %1201 = vxpose.xlu0.b32.cont [2/16] %v1155, 128
        %1202 = vxpose.xlu0.b32.cont [3/16] %v1157, 128
        %1203 = vxpose.xlu0.b32.cont [4/16] %v1159, 128
        %1204 = vxpose.xlu0.b32.cont [5/16] %v1161, 128
        %1205 = vxpose.xlu0.b32.cont [6/16] %v1163, 128
        %1206 = vxpose.xlu0.b32.cont [7/16] %v1165, 128
        %1207 = vxpose.xlu0.b32.cont [8/16] %v1167, 128
        %1208 = vxpose.xlu0.b32.cont [9/16] %v1169, 128
        %1209 = vxpose.xlu0.b32.cont [10/16] %v1171, 128
        %1210 = vxpose.xlu0.b32.cont [11/16] %v1173, 128
        %1211 = vxpose.xlu0.b32.cont [12/16] %v1175, 128
        %1212 = vxpose.xlu0.b32.cont [13/16] %v1177, 128
        %1213 = vxpose.xlu0.b32.cont [14/16] %v1179, 128
        %1214 = vxpose.xlu0.b32.cont [15/16] %v1181, 128
        %1215 = vxpose.xlu0.b32.end [16/16] %v1183, 128
        %v1216 = vpop.trf.xlu0
        %v1217 = vpop.trf.xlu0
        %v1218 = vpop.trf.xlu0
        %v1219 = vpop.trf.xlu0
        %v1220 = vpop.trf.xlu0
        %v1221 = vpop.trf.xlu0
        %v1222 = vpop.trf.xlu0
        %v1223 = vpop.trf.xlu0
        %v1224 = vpop.trf.xlu0
        %v1225 = vpop.trf.xlu0
        %v1226 = vpop.trf.xlu0
        %v1227 = vpop.trf.xlu0
        %v1228 = vpop.trf.xlu0
        %v1229 = vpop.trf.xlu0
        %v1230 = vpop.trf.xlu0
        %v1231 = vpop.trf.xlu0
        %v1232 = vpack.c.bf16 %v675, %v626
        %v1233 = vpack.c.bf16 %v773, %v724
        %v1234 = vpack.c.bf16 %v677, %v628
        %v1235 = vpack.c.bf16 %v775, %v726
        %v1236 = vpack.c.bf16 %v680, %v631
        %v1237 = vpack.c.bf16 %v778, %v729
        %v1238 = vpack.c.bf16 %v682, %v633
        %v1239 = vpack.c.bf16 %v780, %v731
        %v1240 = vpack.c.bf16 %v685, %v636
        %v1241 = vpack.c.bf16 %v783, %v734
        %v1242 = vpack.c.bf16 %v687, %v638
        %v1243 = vpack.c.bf16 %v785, %v736
        %v1244 = vpack.c.bf16 %v690, %v641
        %v1245 = vpack.c.bf16 %v788, %v739
        %v1246 = vpack.c.bf16 %v692, %v643
        %v1247 = vpack.c.bf16 %v790, %v741
        %v1248 = vpack.c.bf16 %v695, %v646
        %v1249 = vpack.c.bf16 %v793, %v744
        %v1250 = vpack.c.bf16 %v697, %v648
        %v1251 = vpack.c.bf16 %v795, %v746
        %v1252 = vpack.c.bf16 %v700, %v651
        %v1253 = vpack.c.bf16 %v798, %v749
        %v1254 = vpack.c.bf16 %v702, %v653
        %v1255 = vpack.c.bf16 %v800, %v751
        %v1256 = vpack.c.bf16 %v705, %v656
        %v1257 = vpack.c.bf16 %v803, %v754
        %v1258 = vpack.c.bf16 %v707, %v658
        %v1259 = vpack.c.bf16 %v805, %v756
        %v1260 = vpack.c.bf16 %v710, %v661
        %v1261 = vpack.c.bf16 %v808, %v759
        %v1262 = vpack.c.bf16 %v712, %v663
        %v1263 = vpack.c.bf16 %v810, %v761
        %1264 = vset.pattern.permute.xlu0 0
        %1265 = vperm.xlu0 %1264, %v1089
        %v1266 = vpop.permute.xlu0 %1265
        %1268 = vset.pattern.permute.xlu0 0
        %1269 = vperm.xlu0 %1268, %v1092
        %v1270 = vpop.permute.xlu0 %1269
        %1272 = vset.pattern.permute.xlu0 0
        %1273 = vperm.xlu0 %1272, %v1095
        %v1274 = vpop.permute.xlu0 %1273
        %1276 = vset.pattern.permute.xlu0 0
        %1277 = vperm.xlu0 %1276, %v1098
        %v1278 = vpop.permute.xlu0 %1277
        %1280 = vset.pattern.permute.xlu0 0
        %1281 = vperm.xlu0 %1280, %v1101
        %v1282 = vpop.permute.xlu0 %1281
        %1284 = vset.pattern.permute.xlu0 0
        %1285 = vperm.xlu0 %1284, %v1104
        %v1286 = vpop.permute.xlu0 %1285
        %1288 = vset.pattern.permute.xlu0 0
        %1289 = vperm.xlu0 %1288, %v1107
        %v1290 = vpop.permute.xlu0 %1289
        %1292 = vset.pattern.permute.xlu0 0
        %1293 = vperm.xlu0 %1292, %v1110
        %v1294 = vpop.permute.xlu0 %1293
        %1296 = vset.pattern.permute.xlu0 0
        %1297 = vperm.xlu0 %1296, %v1113
        %v1298 = vpop.permute.xlu0 %1297
        %1300 = vset.pattern.permute.xlu0 0
        %1301 = vperm.xlu0 %1300, %v1116
        %v1302 = vpop.permute.xlu0 %1301
        %1304 = vset.pattern.permute.xlu0 0
        %1305 = vperm.xlu0 %1304, %v1119
        %v1306 = vpop.permute.xlu0 %1305
        %1308 = vset.pattern.permute.xlu0 0
        %1309 = vperm.xlu0 %1308, %v1122
        %v1310 = vpop.permute.xlu0 %1309
        %1312 = vset.pattern.permute.xlu0 0
        %1313 = vperm.xlu0 %1312, %v1125
        %v1314 = vpop.permute.xlu0 %1313
        %1316 = vset.pattern.permute.xlu0 0
        %1317 = vperm.xlu0 %1316, %v1128
        %v1318 = vpop.permute.xlu0 %1317
        %1320 = vset.pattern.permute.xlu0 0
        %1321 = vperm.xlu0 %1320, %v1131
        %v1322 = vpop.permute.xlu0 %1321
        %1324 = vset.pattern.permute.xlu0 0
        %1325 = vperm.xlu0 %1324, %v1134
        %v1326 = vpop.permute.xlu0 %1325
        %v1328 = vperm.slane %v1216, 0
        %v1329 = vadd.f32 %v1266, %v1328
        %v1330 = vadd.f32 %v1270, %v1328
        %v1331 = vadd.f32 %v1274, %v1328
        %v1332 = vadd.f32 %v1278, %v1328
        %v1333 = vadd.f32 %v1282, %v1328
        %v1334 = vadd.f32 %v1286, %v1328
        %v1335 = vadd.f32 %v1290, %v1328
        %v1336 = vadd.f32 %v1294, %v1328
        %v1337 = vadd.f32 %v1298, %v1328
        %v1338 = vadd.f32 %v1302, %v1328
        %v1339 = vadd.f32 %v1306, %v1328
        %v1340 = vadd.f32 %v1310, %v1328
        %v1341 = vadd.f32 %v1314, %v1328
        %v1342 = vadd.f32 %v1318, %v1328
        %v1343 = vadd.f32 %v1322, %v1328
        %v1344 = vadd.f32 %v1326, %v1328
        %vm1345 = vcmp.gt.f32.partialorder %v1329, 0.0
        %vm1346 = vcmp.gt.f32.partialorder %v1330, 0.0
        %vm1347 = vcmp.gt.f32.partialorder %v1331, 0.0
        %vm1348 = vcmp.gt.f32.partialorder %v1332, 0.0
        %vm1349 = vcmp.gt.f32.partialorder %v1333, 0.0
        %vm1350 = vcmp.gt.f32.partialorder %v1334, 0.0
        %vm1351 = vcmp.gt.f32.partialorder %v1335, 0.0
        %vm1352 = vcmp.gt.f32.partialorder %v1336, 0.0
        %vm1353 = vcmp.gt.f32.partialorder %v1337, 0.0
        %vm1354 = vcmp.gt.f32.partialorder %v1338, 0.0
        %vm1355 = vcmp.gt.f32.partialorder %v1339, 0.0
        %vm1356 = vcmp.gt.f32.partialorder %v1340, 0.0
        %vm1357 = vcmp.gt.f32.partialorder %v1341, 0.0
        %vm1358 = vcmp.gt.f32.partialorder %v1342, 0.0
        %vm1359 = vcmp.gt.f32.partialorder %v1343, 0.0
        %vm1360 = vcmp.gt.f32.partialorder %v1344, 0.0
        %v1361 = vmul.f32 %v1329, 0.2
        %v1362 = vmul.f32 %v1330, 0.2
        %v1363 = vmul.f32 %v1331, 0.2
        %v1364 = vmul.f32 %v1332, 0.2
        %v1365 = vmul.f32 %v1333, 0.2
        %v1366 = vmul.f32 %v1334, 0.2
        %v1367 = vmul.f32 %v1335, 0.2
        %v1368 = vmul.f32 %v1336, 0.2
        %v1369 = vmul.f32 %v1337, 0.2
        %v1370 = vmul.f32 %v1338, 0.2
        %v1371 = vmul.f32 %v1339, 0.2
        %v1372 = vmul.f32 %v1340, 0.2
        %v1373 = vmul.f32 %v1341, 0.2
        %v1374 = vmul.f32 %v1342, 0.2
        %v1375 = vmul.f32 %v1343, 0.2
        %v1376 = vmul.f32 %v1344, 0.2
        %v1377 = vsel %vm1345, %v1329, %v1361
        %v1378 = vsel %vm1346, %v1330, %v1362
        %v1379 = vsel %vm1347, %v1331, %v1363
        %v1380 = vsel %vm1348, %v1332, %v1364
        %v1381 = vsel %vm1349, %v1333, %v1365
        %v1382 = vsel %vm1350, %v1334, %v1366
        %v1383 = vsel %vm1351, %v1335, %v1367
        %v1384 = vsel %vm1352, %v1336, %v1368
        %v1385 = vsel %vm1353, %v1337, %v1369
        %v1386 = vsel %vm1354, %v1338, %v1370
        %v1387 = vsel %vm1355, %v1339, %v1371
        %v1388 = vsel %vm1356, %v1340, %v1372
        %v1389 = vsel %vm1357, %v1341, %v1373
        %v1390 = vsel %vm1358, %v1342, %v1374
        %v1391 = vsel %vm1359, %v1343, %v1375
        %v1392 = vsel %vm1360, %v1344, %v1376
        %v1393 = vadd.f32 %v1377, %v394
        %v1394 = vadd.f32 %v1378, %v395
        %v1395 = vadd.f32 %v1379, %v396
        %v1396 = vadd.f32 %v1380, %v397
        %v1397 = vadd.f32 %v1381, %v398
        %v1398 = vadd.f32 %v1382, %v399
        %v1399 = vadd.f32 %v1383, %v400
        %v1400 = vadd.f32 %v1384, %v401
        %v1401 = vadd.f32 %v1385, %v402
        %v1402 = vadd.f32 %v1386, %v403
        %v1403 = vadd.f32 %v1387, %v404
        %v1404 = vadd.f32 %v1388, %v405
        %v1405 = vadd.f32 %v1389, %v406
        %v1406 = vadd.f32 %v1390, %v407
        %v1407 = vadd.f32 %v1391, %v408
        %v1408 = vadd.f32 %v1392, %v409
        %1409 = vmax.xlane.f32.xlu0 %v1393
        %v1410 = vpop.xlane.xlu0 %1409
        %1411 = vmax.xlane.f32.xlu0 %v1394
        %v1412 = vpop.xlane.xlu0 %1411
        %1413 = vmax.xlane.f32.xlu0 %v1395
        %v1414 = vpop.xlane.xlu0 %1413
        %1415 = vmax.xlane.f32.xlu0 %v1396
        %v1416 = vpop.xlane.xlu0 %1415
        %1417 = vmax.xlane.f32.xlu0 %v1397
        %v1418 = vpop.xlane.xlu0 %1417
        %1419 = vmax.xlane.f32.xlu0 %v1398
        %v1420 = vpop.xlane.xlu0 %1419
        %1421 = vmax.xlane.f32.xlu0 %v1399
        %v1422 = vpop.xlane.xlu0 %1421
        %1423 = vmax.xlane.f32.xlu0 %v1400
        %v1424 = vpop.xlane.xlu0 %1423
        %1425 = vmax.xlane.f32.xlu0 %v1401
        %v1426 = vpop.xlane.xlu0 %1425
        %1427 = vmax.xlane.f32.xlu0 %v1402
        %v1428 = vpop.xlane.xlu0 %1427
        %1429 = vmax.xlane.f32.xlu0 %v1403
        %v1430 = vpop.xlane.xlu0 %1429
        %1431 = vmax.xlane.f32.xlu0 %v1404
        %v1432 = vpop.xlane.xlu0 %1431
        %1433 = vmax.xlane.f32.xlu0 %v1405
        %v1434 = vpop.xlane.xlu0 %1433
        %1435 = vmax.xlane.f32.xlu0 %v1406
        %v1436 = vpop.xlane.xlu0 %1435
        %1437 = vmax.xlane.f32.xlu0 %v1407
        %v1438 = vpop.xlane.xlu0 %1437
        %1439 = vmax.xlane.f32.xlu0 %v1408
        %v1440 = vpop.xlane.xlu0 %1439
        %v1441 = vsub.f32 %v1393, %v1410
        %v1442 = vsub.f32 %v1394, %v1412
        %v1443 = vsub.f32 %v1395, %v1414
        %v1444 = vsub.f32 %v1396, %v1416
        %v1445 = vsub.f32 %v1397, %v1418
        %v1446 = vsub.f32 %v1398, %v1420
        %v1447 = vsub.f32 %v1399, %v1422
        %v1448 = vsub.f32 %v1400, %v1424
        %v1449 = vsub.f32 %v1401, %v1426
        %v1450 = vsub.f32 %v1402, %v1428
        %v1451 = vsub.f32 %v1403, %v1430
        %v1452 = vsub.f32 %v1404, %v1432
        %v1453 = vsub.f32 %v1405, %v1434
        %v1454 = vsub.f32 %v1406, %v1436
        %v1455 = vsub.f32 %v1407, %v1438
        %v1456 = vsub.f32 %v1408, %v1440
        %v1457 = vmul.f32 %v1441, 1.442695
        %v1458 = vpow.pop %v1457
        %v1459 = vmul.f32 %v1442, 1.442695
        %v1460 = vpow.pop %v1459
        %v1461 = vmul.f32 %v1443, 1.442695
        %v1462 = vpow.pop %v1461
        %v1463 = vmul.f32 %v1444, 1.442695
        %v1464 = vpow.pop %v1463
        %v1465 = vmul.f32 %v1445, 1.442695
        %v1466 = vpow.pop %v1465
        %v1467 = vmul.f32 %v1446, 1.442695
        %v1468 = vpow.pop %v1467
        %v1469 = vmul.f32 %v1447, 1.442695
        %v1470 = vpow.pop %v1469
        %v1471 = vmul.f32 %v1448, 1.442695
        %v1472 = vpow.pop %v1471
        %v1473 = vmul.f32 %v1449, 1.442695
        %v1474 = vpow.pop %v1473
        %v1475 = vmul.f32 %v1450, 1.442695
        %v1476 = vpow.pop %v1475
        %v1477 = vmul.f32 %v1451, 1.442695
        %v1478 = vpow.pop %v1477
        %v1479 = vmul.f32 %v1452, 1.442695
        %v1480 = vpow.pop %v1479
        %v1481 = vmul.f32 %v1453, 1.442695
        %v1482 = vpow.pop %v1481
        %v1483 = vmul.f32 %v1454, 1.442695
        %v1484 = vpow.pop %v1483
        %v1485 = vmul.f32 %v1455, 1.442695
        %v1486 = vpow.pop %v1485
        %v1487 = vmul.f32 %v1456, 1.442695
        %v1488 = vpow.pop %v1487
        %1489 = vadd.xlane.f32.xlu0 %v1458
        %v1490 = vpop.xlane.xlu0 %1489
        %1491 = vadd.xlane.f32.xlu0 %v1460
        %v1492 = vpop.xlane.xlu0 %1491
        %1493 = vadd.xlane.f32.xlu0 %v1462
        %v1494 = vpop.xlane.xlu0 %1493
        %1495 = vadd.xlane.f32.xlu0 %v1464
        %v1496 = vpop.xlane.xlu0 %1495
        %1497 = vadd.xlane.f32.xlu0 %v1466
        %v1498 = vpop.xlane.xlu0 %1497
        %1499 = vadd.xlane.f32.xlu0 %v1468
        %v1500 = vpop.xlane.xlu0 %1499
        %1501 = vadd.xlane.f32.xlu0 %v1470
        %v1502 = vpop.xlane.xlu0 %1501
        %1503 = vadd.xlane.f32.xlu0 %v1472
        %v1504 = vpop.xlane.xlu0 %1503
        %1505 = vadd.xlane.f32.xlu0 %v1474
        %v1506 = vpop.xlane.xlu0 %1505
        %1507 = vadd.xlane.f32.xlu0 %v1476
        %v1508 = vpop.xlane.xlu0 %1507
        %1509 = vadd.xlane.f32.xlu0 %v1478
        %v1510 = vpop.xlane.xlu0 %1509
        %1511 = vadd.xlane.f32.xlu0 %v1480
        %v1512 = vpop.xlane.xlu0 %1511
        %1513 = vadd.xlane.f32.xlu0 %v1482
        %v1514 = vpop.xlane.xlu0 %1513
        %1515 = vadd.xlane.f32.xlu0 %v1484
        %v1516 = vpop.xlane.xlu0 %1515
        %1517 = vadd.xlane.f32.xlu0 %v1486
        %v1518 = vpop.xlane.xlu0 %1517
        %1519 = vadd.xlane.f32.xlu0 %v1488
        %v1520 = vpop.xlane.xlu0 %1519
        %v1521 = vrcp.pop %v1490
        %v1522 = vrcp.pop %v1492
        %v1523 = vrcp.pop %v1494
        %v1524 = vrcp.pop %v1496
        %v1525 = vrcp.pop %v1498
        %v1526 = vrcp.pop %v1500
        %v1527 = vrcp.pop %v1502
        %v1528 = vrcp.pop %v1504
        %v1529 = vrcp.pop %v1506
        %v1530 = vrcp.pop %v1508
        %v1531 = vrcp.pop %v1510
        %v1532 = vrcp.pop %v1512
        %v1533 = vrcp.pop %v1514
        %v1534 = vrcp.pop %v1516
        %v1535 = vrcp.pop %v1518
        %v1536 = vrcp.pop %v1520
        %v1537 = vmul.f32 %v1458, %v1521
        %v1538 = vmul.f32 %v1460, %v1522
        %v1539 = vmul.f32 %v1462, %v1523
        %v1540 = vmul.f32 %v1464, %v1524
        %v1541 = vmul.f32 %v1466, %v1525
        %v1542 = vmul.f32 %v1468, %v1526
        %v1543 = vmul.f32 %v1470, %v1527
        %v1544 = vmul.f32 %v1472, %v1528
        %v1545 = vmul.f32 %v1474, %v1529
        %v1546 = vmul.f32 %v1476, %v1530
        %v1547 = vmul.f32 %v1478, %v1531
        %v1548 = vmul.f32 %v1480, %v1532
        %v1549 = vmul.f32 %v1482, %v1533
        %v1550 = vmul.f32 %v1484, %v1534
        %v1551 = vmul.f32 %v1486, %v1535
        %v1552 = vmul.f32 %v1488, %v1536
        %v1553 = vpack.c.bf16 %v1538, %v1537
        %v1554 = vpack.c.bf16 %v1540, %v1539
        %v1555 = vpack.c.bf16 %v1542, %v1541
        %v1556 = vpack.c.bf16 %v1544, %v1543
        %v1557 = vpack.c.bf16 %v1546, %v1545
        %v1558 = vpack.c.bf16 %v1548, %v1547
        %v1559 = vpack.c.bf16 %v1550, %v1549
        %v1560 = vpack.c.bf16 %v1552, %v1551
        %1561 = vset.pattern.permute.xlu0 1
        %1562 = vperm.xlu0 %1561, %v1089
        %v1563 = vpop.permute.xlu0 %1562
        %1565 = vset.pattern.permute.xlu0 1
        %1566 = vperm.xlu0 %1565, %v1092
        %v1567 = vpop.permute.xlu0 %1566
        %1569 = vset.pattern.permute.xlu0 1
        %1570 = vperm.xlu0 %1569, %v1095
        %v1571 = vpop.permute.xlu0 %1570
        %1573 = vset.pattern.permute.xlu0 1
        %1574 = vperm.xlu0 %1573, %v1098
        %v1575 = vpop.permute.xlu0 %1574
        %1577 = vset.pattern.permute.xlu0 1
        %1578 = vperm.xlu0 %1577, %v1101
        %v1579 = vpop.permute.xlu0 %1578
        %1581 = vset.pattern.permute.xlu0 1
        %1582 = vperm.xlu0 %1581, %v1104
        %v1583 = vpop.permute.xlu0 %1582
        %1585 = vset.pattern.permute.xlu0 1
        %1586 = vperm.xlu0 %1585, %v1107
        %v1587 = vpop.permute.xlu0 %1586
        %1589 = vset.pattern.permute.xlu0 1
        %1590 = vperm.xlu0 %1589, %v1110
        %v1591 = vpop.permute.xlu0 %1590
        %1593 = vset.pattern.permute.xlu0 1
        %1594 = vperm.xlu0 %1593, %v1113
        %v1595 = vpop.permute.xlu0 %1594
        %1597 = vset.pattern.permute.xlu0 1
        %1598 = vperm.xlu0 %1597, %v1116
        %v1599 = vpop.permute.xlu0 %1598
        %1601 = vset.pattern.permute.xlu0 1
        %1602 = vperm.xlu0 %1601, %v1119
        %v1603 = vpop.permute.xlu0 %1602
        %1605 = vset.pattern.permute.xlu0 1
        %1606 = vperm.xlu0 %1605, %v1122
        %v1607 = vpop.permute.xlu0 %1606
        %1609 = vset.pattern.permute.xlu0 1
        %1610 = vperm.xlu0 %1609, %v1125
        %v1611 = vpop.permute.xlu0 %1610
        %1613 = vset.pattern.permute.xlu0 1
        %1614 = vperm.xlu0 %1613, %v1128
        %v1615 = vpop.permute.xlu0 %1614
        %1617 = vset.pattern.permute.xlu0 1
        %1618 = vperm.xlu0 %1617, %v1131
        %v1619 = vpop.permute.xlu0 %1618
        %1621 = vset.pattern.permute.xlu0 1
        %1622 = vperm.xlu0 %1621, %v1134
        %v1623 = vpop.permute.xlu0 %1622
        %v1625 = vperm.slane %v1216, 1
        %v1626 = vadd.f32 %v1563, %v1625
        %v1627 = vadd.f32 %v1567, %v1625
        %v1628 = vadd.f32 %v1571, %v1625
        %v1629 = vadd.f32 %v1575, %v1625
        %v1630 = vadd.f32 %v1579, %v1625
        %v1631 = vadd.f32 %v1583, %v1625
        %v1632 = vadd.f32 %v1587, %v1625
        %v1633 = vadd.f32 %v1591, %v1625
        %v1634 = vadd.f32 %v1595, %v1625
        %v1635 = vadd.f32 %v1599, %v1625
        %v1636 = vadd.f32 %v1603, %v1625
        %v1637 = vadd.f32 %v1607, %v1625
        %v1638 = vadd.f32 %v1611, %v1625
        %v1639 = vadd.f32 %v1615, %v1625
        %v1640 = vadd.f32 %v1619, %v1625
        %v1641 = vadd.f32 %v1623, %v1625
        %vm1642 = vcmp.gt.f32.partialorder %v1626, 0.0
        %vm1643 = vcmp.gt.f32.partialorder %v1627, 0.0
        %vm1644 = vcmp.gt.f32.partialorder %v1628, 0.0
        %vm1645 = vcmp.gt.f32.partialorder %v1629, 0.0
        %vm1646 = vcmp.gt.f32.partialorder %v1630, 0.0
        %vm1647 = vcmp.gt.f32.partialorder %v1631, 0.0
        %vm1648 = vcmp.gt.f32.partialorder %v1632, 0.0
        %vm1649 = vcmp.gt.f32.partialorder %v1633, 0.0
        %vm1650 = vcmp.gt.f32.partialorder %v1634, 0.0
        %vm1651 = vcmp.gt.f32.partialorder %v1635, 0.0
        %vm1652 = vcmp.gt.f32.partialorder %v1636, 0.0
        %vm1653 = vcmp.gt.f32.partialorder %v1637, 0.0
        %vm1654 = vcmp.gt.f32.partialorder %v1638, 0.0
        %vm1655 = vcmp.gt.f32.partialorder %v1639, 0.0
        %vm1656 = vcmp.gt.f32.partialorder %v1640, 0.0
        %vm1657 = vcmp.gt.f32.partialorder %v1641, 0.0
        %v1658 = vmul.f32 %v1626, 0.2
        %v1659 = vmul.f32 %v1627, 0.2
        %v1660 = vmul.f32 %v1628, 0.2
        %v1661 = vmul.f32 %v1629, 0.2
        %v1662 = vmul.f32 %v1630, 0.2
        %v1663 = vmul.f32 %v1631, 0.2
        %v1664 = vmul.f32 %v1632, 0.2
        %v1665 = vmul.f32 %v1633, 0.2
        %v1666 = vmul.f32 %v1634, 0.2
        %v1667 = vmul.f32 %v1635, 0.2
        %v1668 = vmul.f32 %v1636, 0.2
        %v1669 = vmul.f32 %v1637, 0.2
        %v1670 = vmul.f32 %v1638, 0.2
        %v1671 = vmul.f32 %v1639, 0.2
        %v1672 = vmul.f32 %v1640, 0.2
        %v1673 = vmul.f32 %v1641, 0.2
        %v1674 = vsel %vm1642, %v1626, %v1658
        %v1675 = vsel %vm1643, %v1627, %v1659
        %v1676 = vsel %vm1644, %v1628, %v1660
        %v1677 = vsel %vm1645, %v1629, %v1661
        %v1678 = vsel %vm1646, %v1630, %v1662
        %v1679 = vsel %vm1647, %v1631, %v1663
        %v1680 = vsel %vm1648, %v1632, %v1664
        %v1681 = vsel %vm1649, %v1633, %v1665
        %v1682 = vsel %vm1650, %v1634, %v1666
        %v1683 = vsel %vm1651, %v1635, %v1667
        %v1684 = vsel %vm1652, %v1636, %v1668
        %v1685 = vsel %vm1653, %v1637, %v1669
        %v1686 = vsel %vm1654, %v1638, %v1670
        %v1687 = vsel %vm1655, %v1639, %v1671
        %v1688 = vsel %vm1656, %v1640, %v1672
        %v1689 = vsel %vm1657, %v1641, %v1673
        %v1690 = vadd.f32 %v1674, %v394
        %v1691 = vadd.f32 %v1675, %v395
        %v1692 = vadd.f32 %v1676, %v396
        %v1693 = vadd.f32 %v1677, %v397
        %v1694 = vadd.f32 %v1678, %v398
        %v1695 = vadd.f32 %v1679, %v399
        %v1696 = vadd.f32 %v1680, %v400
        %v1697 = vadd.f32 %v1681, %v401
        %v1698 = vadd.f32 %v1682, %v402
        %v1699 = vadd.f32 %v1683, %v403
        %v1700 = vadd.f32 %v1684, %v404
        %v1701 = vadd.f32 %v1685, %v405
        %v1702 = vadd.f32 %v1686, %v406
        %v1703 = vadd.f32 %v1687, %v407
        %v1704 = vadd.f32 %v1688, %v408
        %v1705 = vadd.f32 %v1689, %v409
        %1706 = vmax.xlane.f32.xlu0 %v1690
        %v1707 = vpop.xlane.xlu0 %1706
        %1708 = vmax.xlane.f32.xlu0 %v1691
        %v1709 = vpop.xlane.xlu0 %1708
        %1710 = vmax.xlane.f32.xlu0 %v1692
        %v1711 = vpop.xlane.xlu0 %1710
        %1712 = vmax.xlane.f32.xlu0 %v1693
        %v1713 = vpop.xlane.xlu0 %1712
        %1714 = vmax.xlane.f32.xlu0 %v1694
        %v1715 = vpop.xlane.xlu0 %1714
        %1716 = vmax.xlane.f32.xlu0 %v1695
        %v1717 = vpop.xlane.xlu0 %1716
        %1718 = vmax.xlane.f32.xlu0 %v1696
        %v1719 = vpop.xlane.xlu0 %1718
        %1720 = vmax.xlane.f32.xlu0 %v1697
        %v1721 = vpop.xlane.xlu0 %1720
        %1722 = vmax.xlane.f32.xlu0 %v1698
        %v1723 = vpop.xlane.xlu0 %1722
        %1724 = vmax.xlane.f32.xlu0 %v1699
        %v1725 = vpop.xlane.xlu0 %1724
        %1726 = vmax.xlane.f32.xlu0 %v1700
        %v1727 = vpop.xlane.xlu0 %1726
        %1728 = vmax.xlane.f32.xlu0 %v1701
        %v1729 = vpop.xlane.xlu0 %1728
        %1730 = vmax.xlane.f32.xlu0 %v1702
        %v1731 = vpop.xlane.xlu0 %1730
        %1732 = vmax.xlane.f32.xlu0 %v1703
        %v1733 = vpop.xlane.xlu0 %1732
        %1734 = vmax.xlane.f32.xlu0 %v1704
        %v1735 = vpop.xlane.xlu0 %1734
        %1736 = vmax.xlane.f32.xlu0 %v1705
        %v1737 = vpop.xlane.xlu0 %1736
        %v1738 = vsub.f32 %v1690, %v1707
        %v1739 = vsub.f32 %v1691, %v1709
        %v1740 = vsub.f32 %v1692, %v1711
        %v1741 = vsub.f32 %v1693, %v1713
        %v1742 = vsub.f32 %v1694, %v1715
        %v1743 = vsub.f32 %v1695, %v1717
        %v1744 = vsub.f32 %v1696, %v1719
        %v1745 = vsub.f32 %v1697, %v1721
        %v1746 = vsub.f32 %v1698, %v1723
        %v1747 = vsub.f32 %v1699, %v1725
        %v1748 = vsub.f32 %v1700, %v1727
        %v1749 = vsub.f32 %v1701, %v1729
        %v1750 = vsub.f32 %v1702, %v1731
        %v1751 = vsub.f32 %v1703, %v1733
        %v1752 = vsub.f32 %v1704, %v1735
        %v1753 = vsub.f32 %v1705, %v1737
        %v1754 = vmul.f32 %v1738, 1.442695
        %v1755 = vpow.pop %v1754
        %v1756 = vmul.f32 %v1739, 1.442695
        %v1757 = vpow.pop %v1756
        %v1758 = vmul.f32 %v1740, 1.442695
        %v1759 = vpow.pop %v1758
        %v1760 = vmul.f32 %v1741, 1.442695
        %v1761 = vpow.pop %v1760
        %v1762 = vmul.f32 %v1742, 1.442695
        %v1763 = vpow.pop %v1762
        %v1764 = vmul.f32 %v1743, 1.442695
        %v1765 = vpow.pop %v1764
        %v1766 = vmul.f32 %v1744, 1.442695
        %v1767 = vpow.pop %v1766
        %v1768 = vmul.f32 %v1745, 1.442695
        %v1769 = vpow.pop %v1768
        %v1770 = vmul.f32 %v1746, 1.442695
        %v1771 = vpow.pop %v1770
        %v1772 = vmul.f32 %v1747, 1.442695
        %v1773 = vpow.pop %v1772
        %v1774 = vmul.f32 %v1748, 1.442695
        %v1775 = vpow.pop %v1774
        %v1776 = vmul.f32 %v1749, 1.442695
        %v1777 = vpow.pop %v1776
        %v1778 = vmul.f32 %v1750, 1.442695
        %v1779 = vpow.pop %v1778
        %v1780 = vmul.f32 %v1751, 1.442695
        %v1781 = vpow.pop %v1780
        %v1782 = vmul.f32 %v1752, 1.442695
        %v1783 = vpow.pop %v1782
        %v1784 = vmul.f32 %v1753, 1.442695
        %v1785 = vpow.pop %v1784
        %1786 = vadd.xlane.f32.xlu0 %v1755
        %v1787 = vpop.xlane.xlu0 %1786
        %1788 = vadd.xlane.f32.xlu0 %v1757
        %v1789 = vpop.xlane.xlu0 %1788
        %1790 = vadd.xlane.f32.xlu0 %v1759
        %v1791 = vpop.xlane.xlu0 %1790
        %1792 = vadd.xlane.f32.xlu0 %v1761
        %v1793 = vpop.xlane.xlu0 %1792
        %1794 = vadd.xlane.f32.xlu0 %v1763
        %v1795 = vpop.xlane.xlu0 %1794
        %1796 = vadd.xlane.f32.xlu0 %v1765
        %v1797 = vpop.xlane.xlu0 %1796
        %1798 = vadd.xlane.f32.xlu0 %v1767
        %v1799 = vpop.xlane.xlu0 %1798
        %1800 = vadd.xlane.f32.xlu0 %v1769
        %v1801 = vpop.xlane.xlu0 %1800
        %1802 = vadd.xlane.f32.xlu0 %v1771
        %v1803 = vpop.xlane.xlu0 %1802
        %1804 = vadd.xlane.f32.xlu0 %v1773
        %v1805 = vpop.xlane.xlu0 %1804
        %1806 = vadd.xlane.f32.xlu0 %v1775
        %v1807 = vpop.xlane.xlu0 %1806
        %1808 = vadd.xlane.f32.xlu0 %v1777
        %v1809 = vpop.xlane.xlu0 %1808
        %1810 = vadd.xlane.f32.xlu0 %v1779
        %v1811 = vpop.xlane.xlu0 %1810
        %1812 = vadd.xlane.f32.xlu0 %v1781
        %v1813 = vpop.xlane.xlu0 %1812
        %1814 = vadd.xlane.f32.xlu0 %v1783
        %v1815 = vpop.xlane.xlu0 %1814
        %1816 = vadd.xlane.f32.xlu0 %v1785
        %v1817 = vpop.xlane.xlu0 %1816
        %v1818 = vrcp.pop %v1787
        %v1819 = vrcp.pop %v1789
        %v1820 = vrcp.pop %v1791
        %v1821 = vrcp.pop %v1793
        %v1822 = vrcp.pop %v1795
        %v1823 = vrcp.pop %v1797
        %v1824 = vrcp.pop %v1799
        %v1825 = vrcp.pop %v1801
        %v1826 = vrcp.pop %v1803
        %v1827 = vrcp.pop %v1805
        %v1828 = vrcp.pop %v1807
        %v1829 = vrcp.pop %v1809
        %v1830 = vrcp.pop %v1811
        %v1831 = vrcp.pop %v1813
        %v1832 = vrcp.pop %v1815
        %v1833 = vrcp.pop %v1817
        %v1834 = vmul.f32 %v1755, %v1818
        %v1835 = vmul.f32 %v1757, %v1819
        %v1836 = vmul.f32 %v1759, %v1820
        %v1837 = vmul.f32 %v1761, %v1821
        %v1838 = vmul.f32 %v1763, %v1822
        %v1839 = vmul.f32 %v1765, %v1823
        %v1840 = vmul.f32 %v1767, %v1824
        %v1841 = vmul.f32 %v1769, %v1825
        %v1842 = vmul.f32 %v1771, %v1826
        %v1843 = vmul.f32 %v1773, %v1827
        %v1844 = vmul.f32 %v1775, %v1828
        %v1845 = vmul.f32 %v1777, %v1829
        %v1846 = vmul.f32 %v1779, %v1830
        %v1847 = vmul.f32 %v1781, %v1831
        %v1848 = vmul.f32 %v1783, %v1832
        %v1849 = vmul.f32 %v1785, %v1833
        %v1850 = vpack.c.bf16 %v1835, %v1834
        %v1851 = vpack.c.bf16 %v1837, %v1836
        %v1852 = vpack.c.bf16 %v1839, %v1838
        %v1853 = vpack.c.bf16 %v1841, %v1840
        %v1854 = vpack.c.bf16 %v1843, %v1842
        %v1855 = vpack.c.bf16 %v1845, %v1844
        %v1856 = vpack.c.bf16 %v1847, %v1846
        %v1857 = vpack.c.bf16 %v1849, %v1848
        %v1874 = vunpack.c.h.b16 %v1232
        %v1875 = vunpack.c.h.b16 %v1234
        %v1876 = vunpack.c.h.b16 %v1236
        %v1877 = vunpack.c.h.b16 %v1238
        %v1878 = vunpack.c.h.b16 %v1240
        %v1879 = vunpack.c.h.b16 %v1242
        %v1880 = vunpack.c.h.b16 %v1244
        %v1881 = vunpack.c.h.b16 %v1246
        %v1882 = vunpack.c.h.b16 %v1248
        %v1883 = vunpack.c.h.b16 %v1250
        %v1884 = vunpack.c.h.b16 %v1252
        %v1885 = vunpack.c.h.b16 %v1254
        %v1886 = vunpack.c.h.b16 %v1256
        %v1887 = vunpack.c.h.b16 %v1258
        %v1888 = vunpack.c.h.b16 %v1260
        %v1889 = vunpack.c.h.b16 %v1262
        %v1890 = vpack.c.b16 %v1875, %v1874
        %v1891 = vpack.c.b16 %v1877, %v1876
        %v1892 = vpack.c.b16 %v1879, %v1878
        %v1893 = vpack.c.b16 %v1881, %v1880
        %v1894 = vpack.c.b16 %v1883, %v1882
        %v1895 = vpack.c.b16 %v1885, %v1884
        %v1896 = vpack.c.b16 %v1887, %v1886
        %v1897 = vpack.c.b16 %v1889, %v1888
        %1906 = vmatpush.bf16.msra.mxu0 %v1897
        %1907 = vmatpush.bf16.msra.mxu0 %v1896
        %1908 = vmatpush.bf16.msra.mxu0 %v1895
        %1909 = vmatpush.bf16.msra.mxu0 %v1894
        %1910 = vmatpush.bf16.msra.mxu0 %v1893
        %1911 = vmatpush.bf16.msra.mxu0 %v1892
        %1912 = vmatpush.bf16.msra.mxu0 %v1891
        %1913 = vmatpush.bf16.msra.mxu0 %v1890
        %1914 = vmatmul.bf16.gmra.mxu0 %v1850
        %v1915 = vpop.f32.mrf.mxu0
        %v1916 = vadd.f32 0.0, %v1915
        %v1917 = vpop.f32.mrf.mxu0
        %v1918 = vadd.f32 0.0, %v1917
        %1919 = vmatmul.bf16.gmra.mxu0 %v1851
        %v1920 = vpop.f32.mrf.mxu0
        %v1921 = vadd.f32 0.0, %v1920
        %v1922 = vpop.f32.mrf.mxu0
        %v1923 = vadd.f32 0.0, %v1922
        %1924 = vmatmul.bf16.gmra.mxu0 %v1852
        %v1925 = vpop.f32.mrf.mxu0
        %v1926 = vadd.f32 0.0, %v1925
        %v1927 = vpop.f32.mrf.mxu0
        %v1928 = vadd.f32 0.0, %v1927
        %1929 = vmatmul.bf16.gmra.mxu0 %v1853
        %v1930 = vpop.f32.mrf.mxu0
        %v1931 = vadd.f32 0.0, %v1930
        %v1932 = vpop.f32.mrf.mxu0
        %v1933 = vadd.f32 0.0, %v1932
        %1934 = vmatmul.bf16.gmra.mxu0 %v1854
        %v1935 = vpop.f32.mrf.mxu0
        %v1936 = vadd.f32 0.0, %v1935
        %v1937 = vpop.f32.mrf.mxu0
        %v1938 = vadd.f32 0.0, %v1937
        %1939 = vmatmul.bf16.gmra.mxu0 %v1855
        %v1940 = vpop.f32.mrf.mxu0
        %v1941 = vadd.f32 0.0, %v1940
        %v1942 = vpop.f32.mrf.mxu0
        %v1943 = vadd.f32 0.0, %v1942
        %1944 = vmatmul.bf16.gmra.mxu0 %v1856
        %v1945 = vpop.f32.mrf.mxu0
        %v1946 = vadd.f32 0.0, %v1945
        %v1947 = vpop.f32.mrf.mxu0
        %v1948 = vadd.f32 0.0, %v1947
        %1949 = vmatmul.bf16.gmra.mxu0 %v1857
        %v1950 = vpop.f32.mrf.mxu0
        %v1951 = vadd.f32 0.0, %v1950
        %v1952 = vpop.f32.mrf.mxu0
        %v1953 = vadd.f32 0.0, %v1952
        %1954 = vdwg.mxu0
        %v1955 = vunpack.c.l.b16 %v1232
        %v1956 = vunpack.c.l.b16 %v1234
        %v1957 = vunpack.c.l.b16 %v1236
        %v1958 = vunpack.c.l.b16 %v1238
        %v1959 = vunpack.c.l.b16 %v1240
        %v1960 = vunpack.c.l.b16 %v1242
        %v1961 = vunpack.c.l.b16 %v1244
        %v1962 = vunpack.c.l.b16 %v1246
        %v1963 = vunpack.c.l.b16 %v1248
        %v1964 = vunpack.c.l.b16 %v1250
        %v1965 = vunpack.c.l.b16 %v1252
        %v1966 = vunpack.c.l.b16 %v1254
        %v1967 = vunpack.c.l.b16 %v1256
        %v1968 = vunpack.c.l.b16 %v1258
        %v1969 = vunpack.c.l.b16 %v1260
        %v1970 = vunpack.c.l.b16 %v1262
        %v1971 = vpack.c.b16 %v1956, %v1955
        %v1972 = vpack.c.b16 %v1958, %v1957
        %v1973 = vpack.c.b16 %v1960, %v1959
        %v1974 = vpack.c.b16 %v1962, %v1961
        %v1975 = vpack.c.b16 %v1964, %v1963
        %v1976 = vpack.c.b16 %v1966, %v1965
        %v1977 = vpack.c.b16 %v1968, %v1967
        %v1978 = vpack.c.b16 %v1970, %v1969
        %1987 = vmatpush.bf16.msra.mxu0 %v1978
        %1988 = vmatpush.bf16.msra.mxu0 %v1977
        %1989 = vmatpush.bf16.msra.mxu0 %v1976
        %1990 = vmatpush.bf16.msra.mxu0 %v1975
        %1991 = vmatpush.bf16.msra.mxu0 %v1974
        %1992 = vmatpush.bf16.msra.mxu0 %v1973
        %1993 = vmatpush.bf16.msra.mxu0 %v1972
        %1994 = vmatpush.bf16.msra.mxu0 %v1971
        %1995 = vmatmul.bf16.gmra.mxu0 %v1553
        %v1996 = vpop.f32.mrf.mxu0
        %v1997 = vadd.f32 %v1916, %v1996
        %v1998 = vpop.f32.mrf.mxu0
        %v1999 = vadd.f32 %v1918, %v1998
        %2000 = vmatmul.bf16.gmra.mxu0 %v1554
        %v2001 = vpop.f32.mrf.mxu0
        %v2002 = vadd.f32 %v1921, %v2001
        %v2003 = vpop.f32.mrf.mxu0
        %v2004 = vadd.f32 %v1923, %v2003
        %2005 = vmatmul.bf16.gmra.mxu0 %v1555
        %v2006 = vpop.f32.mrf.mxu0
        %v2007 = vadd.f32 %v1926, %v2006
        %v2008 = vpop.f32.mrf.mxu0
        %v2009 = vadd.f32 %v1928, %v2008
        %2010 = vmatmul.bf16.gmra.mxu0 %v1556
        %v2011 = vpop.f32.mrf.mxu0
        %v2012 = vadd.f32 %v1931, %v2011
        %v2013 = vpop.f32.mrf.mxu0
        %v2014 = vadd.f32 %v1933, %v2013
        %2015 = vmatmul.bf16.gmra.mxu0 %v1557
        %v2016 = vpop.f32.mrf.mxu0
        %v2017 = vadd.f32 %v1936, %v2016
        %v2018 = vpop.f32.mrf.mxu0
        %v2019 = vadd.f32 %v1938, %v2018
        %2020 = vmatmul.bf16.gmra.mxu0 %v1558
        %v2021 = vpop.f32.mrf.mxu0
        %v2022 = vadd.f32 %v1941, %v2021
        %v2023 = vpop.f32.mrf.mxu0
        %v2024 = vadd.f32 %v1943, %v2023
        %2025 = vmatmul.bf16.gmra.mxu0 %v1559
        %v2026 = vpop.f32.mrf.mxu0
        %v2027 = vadd.f32 %v1946, %v2026
        %v2028 = vpop.f32.mrf.mxu0
        %v2029 = vadd.f32 %v1948, %v2028
        %2030 = vmatmul.bf16.gmra.mxu0 %v1560
        %v2031 = vpop.f32.mrf.mxu0
        %v2032 = vadd.f32 %v1951, %v2031
        %v2033 = vpop.f32.mrf.mxu0
        %v2034 = vadd.f32 %v1953, %v2033
        %2035 = vdwg.mxu0
        %2036 = vset.pattern.permute.xlu0 2
        %2037 = vperm.xlu0 %2036, %v1089
        %v2038 = vpop.permute.xlu0 %2037
        %2040 = vset.pattern.permute.xlu0 2
        %2041 = vperm.xlu0 %2040, %v1092
        %v2042 = vpop.permute.xlu0 %2041
        %2044 = vset.pattern.permute.xlu0 2
        %2045 = vperm.xlu0 %2044, %v1095
        %v2046 = vpop.permute.xlu0 %2045
        %2048 = vset.pattern.permute.xlu0 2
        %2049 = vperm.xlu0 %2048, %v1098
        %v2050 = vpop.permute.xlu0 %2049
        %2052 = vset.pattern.permute.xlu0 2
        %2053 = vperm.xlu0 %2052, %v1101
        %v2054 = vpop.permute.xlu0 %2053
        %2056 = vset.pattern.permute.xlu0 2
        %2057 = vperm.xlu0 %2056, %v1104
        %v2058 = vpop.permute.xlu0 %2057
        %2060 = vset.pattern.permute.xlu0 2
        %2061 = vperm.xlu0 %2060, %v1107
        %v2062 = vpop.permute.xlu0 %2061
        %2064 = vset.pattern.permute.xlu0 2
        %2065 = vperm.xlu0 %2064, %v1110
        %v2066 = vpop.permute.xlu0 %2065
        %2068 = vset.pattern.permute.xlu0 2
        %2069 = vperm.xlu0 %2068, %v1113
        %v2070 = vpop.permute.xlu0 %2069
        %2072 = vset.pattern.permute.xlu0 2
        %2073 = vperm.xlu0 %2072, %v1116
        %v2074 = vpop.permute.xlu0 %2073
        %2076 = vset.pattern.permute.xlu0 2
        %2077 = vperm.xlu0 %2076, %v1119
        %v2078 = vpop.permute.xlu0 %2077
        %2080 = vset.pattern.permute.xlu0 2
        %2081 = vperm.xlu0 %2080, %v1122
        %v2082 = vpop.permute.xlu0 %2081
        %2084 = vset.pattern.permute.xlu0 2
        %2085 = vperm.xlu0 %2084, %v1125
        %v2086 = vpop.permute.xlu0 %2085
        %2088 = vset.pattern.permute.xlu0 2
        %2089 = vperm.xlu0 %2088, %v1128
        %v2090 = vpop.permute.xlu0 %2089
        %2092 = vset.pattern.permute.xlu0 2
        %2093 = vperm.xlu0 %2092, %v1131
        %v2094 = vpop.permute.xlu0 %2093
        %2096 = vset.pattern.permute.xlu0 2
        %2097 = vperm.xlu0 %2096, %v1134
        %v2098 = vpop.permute.xlu0 %2097
        %v2100 = vperm.slane %v1216, 2
        %v2101 = vadd.f32 %v2038, %v2100
        %v2102 = vadd.f32 %v2042, %v2100
        %v2103 = vadd.f32 %v2046, %v2100
        %v2104 = vadd.f32 %v2050, %v2100
        %v2105 = vadd.f32 %v2054, %v2100
        %v2106 = vadd.f32 %v2058, %v2100
        %v2107 = vadd.f32 %v2062, %v2100
        %v2108 = vadd.f32 %v2066, %v2100
        %v2109 = vadd.f32 %v2070, %v2100
        %v2110 = vadd.f32 %v2074, %v2100
        %v2111 = vadd.f32 %v2078, %v2100
        %v2112 = vadd.f32 %v2082, %v2100
        %v2113 = vadd.f32 %v2086, %v2100
        %v2114 = vadd.f32 %v2090, %v2100
        %v2115 = vadd.f32 %v2094, %v2100
        %v2116 = vadd.f32 %v2098, %v2100
        %vm2117 = vcmp.gt.f32.partialorder %v2101, 0.0
        %vm2118 = vcmp.gt.f32.partialorder %v2102, 0.0
        %vm2119 = vcmp.gt.f32.partialorder %v2103, 0.0
        %vm2120 = vcmp.gt.f32.partialorder %v2104, 0.0
        %vm2121 = vcmp.gt.f32.partialorder %v2105, 0.0
        %vm2122 = vcmp.gt.f32.partialorder %v2106, 0.0
        %vm2123 = vcmp.gt.f32.partialorder %v2107, 0.0
        %vm2124 = vcmp.gt.f32.partialorder %v2108, 0.0
        %vm2125 = vcmp.gt.f32.partialorder %v2109, 0.0
        %vm2126 = vcmp.gt.f32.partialorder %v2110, 0.0
        %vm2127 = vcmp.gt.f32.partialorder %v2111, 0.0
        %vm2128 = vcmp.gt.f32.partialorder %v2112, 0.0
        %vm2129 = vcmp.gt.f32.partialorder %v2113, 0.0
        %vm2130 = vcmp.gt.f32.partialorder %v2114, 0.0
        %vm2131 = vcmp.gt.f32.partialorder %v2115, 0.0
        %vm2132 = vcmp.gt.f32.partialorder %v2116, 0.0
        %v2133 = vmul.f32 %v2101, 0.2
        %v2134 = vmul.f32 %v2102, 0.2
        %v2135 = vmul.f32 %v2103, 0.2
        %v2136 = vmul.f32 %v2104, 0.2
        %v2137 = vmul.f32 %v2105, 0.2
        %v2138 = vmul.f32 %v2106, 0.2
        %v2139 = vmul.f32 %v2107, 0.2
        %v2140 = vmul.f32 %v2108, 0.2
        %v2141 = vmul.f32 %v2109, 0.2
        %v2142 = vmul.f32 %v2110, 0.2
        %v2143 = vmul.f32 %v2111, 0.2
        %v2144 = vmul.f32 %v2112, 0.2
        %v2145 = vmul.f32 %v2113, 0.2
        %v2146 = vmul.f32 %v2114, 0.2
        %v2147 = vmul.f32 %v2115, 0.2
        %v2148 = vmul.f32 %v2116, 0.2
        %v2149 = vsel %vm2117, %v2101, %v2133
        %v2150 = vsel %vm2118, %v2102, %v2134
        %v2151 = vsel %vm2119, %v2103, %v2135
        %v2152 = vsel %vm2120, %v2104, %v2136
        %v2153 = vsel %vm2121, %v2105, %v2137
        %v2154 = vsel %vm2122, %v2106, %v2138
        %v2155 = vsel %vm2123, %v2107, %v2139
        %v2156 = vsel %vm2124, %v2108, %v2140
        %v2157 = vsel %vm2125, %v2109, %v2141
        %v2158 = vsel %vm2126, %v2110, %v2142
        %v2159 = vsel %vm2127, %v2111, %v2143
        %v2160 = vsel %vm2128, %v2112, %v2144
        %v2161 = vsel %vm2129, %v2113, %v2145
        %v2162 = vsel %vm2130, %v2114, %v2146
        %v2163 = vsel %vm2131, %v2115, %v2147
        %v2164 = vsel %vm2132, %v2116, %v2148
        %v2165 = vadd.f32 %v2149, %v394
        %v2166 = vadd.f32 %v2150, %v395
        %v2167 = vadd.f32 %v2151, %v396
        %v2168 = vadd.f32 %v2152, %v397
        %v2169 = vadd.f32 %v2153, %v398
        %v2170 = vadd.f32 %v2154, %v399
        %v2171 = vadd.f32 %v2155, %v400
        %v2172 = vadd.f32 %v2156, %v401
        %v2173 = vadd.f32 %v2157, %v402
        %v2174 = vadd.f32 %v2158, %v403
        %v2175 = vadd.f32 %v2159, %v404
        %v2176 = vadd.f32 %v2160, %v405
        %v2177 = vadd.f32 %v2161, %v406
        %v2178 = vadd.f32 %v2162, %v407
        %v2179 = vadd.f32 %v2163, %v408
        %v2180 = vadd.f32 %v2164, %v409
        %2181 = vmax.xlane.f32.xlu0 %v2165
        %v2182 = vpop.xlane.xlu0 %2181
        %2183 = vmax.xlane.f32.xlu0 %v2166
        %v2184 = vpop.xlane.xlu0 %2183
        %2185 = vmax.xlane.f32.xlu0 %v2167
        %v2186 = vpop.xlane.xlu0 %2185
        %2187 = vmax.xlane.f32.xlu0 %v2168
        %v2188 = vpop.xlane.xlu0 %2187
        %2189 = vmax.xlane.f32.xlu0 %v2169
        %v2190 = vpop.xlane.xlu0 %2189
        %2191 = vmax.xlane.f32.xlu0 %v2170
        %v2192 = vpop.xlane.xlu0 %2191
        %2193 = vmax.xlane.f32.xlu0 %v2171
        %v2194 = vpop.xlane.xlu0 %2193
        %2195 = vmax.xlane.f32.xlu0 %v2172
        %v2196 = vpop.xlane.xlu0 %2195
        %2197 = vmax.xlane.f32.xlu0 %v2173
        %v2198 = vpop.xlane.xlu0 %2197
        %2199 = vmax.xlane.f32.xlu0 %v2174
        %v2200 = vpop.xlane.xlu0 %2199
        %2201 = vmax.xlane.f32.xlu0 %v2175
        %v2202 = vpop.xlane.xlu0 %2201
        %2203 = vmax.xlane.f32.xlu0 %v2176
        %v2204 = vpop.xlane.xlu0 %2203
        %2205 = vmax.xlane.f32.xlu0 %v2177
        %v2206 = vpop.xlane.xlu0 %2205
        %2207 = vmax.xlane.f32.xlu0 %v2178
        %v2208 = vpop.xlane.xlu0 %2207
        %2209 = vmax.xlane.f32.xlu0 %v2179
        %v2210 = vpop.xlane.xlu0 %2209
        %2211 = vmax.xlane.f32.xlu0 %v2180
        %v2212 = vpop.xlane.xlu0 %2211
        %v2213 = vsub.f32 %v2165, %v2182
        %v2214 = vsub.f32 %v2166, %v2184
        %v2215 = vsub.f32 %v2167, %v2186
        %v2216 = vsub.f32 %v2168, %v2188
        %v2217 = vsub.f32 %v2169, %v2190
        %v2218 = vsub.f32 %v2170, %v2192
        %v2219 = vsub.f32 %v2171, %v2194
        %v2220 = vsub.f32 %v2172, %v2196
        %v2221 = vsub.f32 %v2173, %v2198
        %v2222 = vsub.f32 %v2174, %v2200
        %v2223 = vsub.f32 %v2175, %v2202
        %v2224 = vsub.f32 %v2176, %v2204
        %v2225 = vsub.f32 %v2177, %v2206
        %v2226 = vsub.f32 %v2178, %v2208
        %v2227 = vsub.f32 %v2179, %v2210
        %v2228 = vsub.f32 %v2180, %v2212
        %v2229 = vmul.f32 %v2213, 1.442695
        %v2230 = vpow.pop %v2229
        %v2231 = vmul.f32 %v2214, 1.442695
        %v2232 = vpow.pop %v2231
        %v2233 = vmul.f32 %v2215, 1.442695
        %v2234 = vpow.pop %v2233
        %v2235 = vmul.f32 %v2216, 1.442695
        %v2236 = vpow.pop %v2235
        %v2237 = vmul.f32 %v2217, 1.442695
        %v2238 = vpow.pop %v2237
        %v2239 = vmul.f32 %v2218, 1.442695
        %v2240 = vpow.pop %v2239
        %v2241 = vmul.f32 %v2219, 1.442695
        %v2242 = vpow.pop %v2241
        %v2243 = vmul.f32 %v2220, 1.442695
        %v2244 = vpow.pop %v2243
        %v2245 = vmul.f32 %v2221, 1.442695
        %v2246 = vpow.pop %v2245
        %v2247 = vmul.f32 %v2222, 1.442695
        %v2248 = vpow.pop %v2247
        %v2249 = vmul.f32 %v2223, 1.442695
        %v2250 = vpow.pop %v2249
        %v2251 = vmul.f32 %v2224, 1.442695
        %v2252 = vpow.pop %v2251
        %v2253 = vmul.f32 %v2225, 1.442695
        %v2254 = vpow.pop %v2253
        %v2255 = vmul.f32 %v2226, 1.442695
        %v2256 = vpow.pop %v2255
        %v2257 = vmul.f32 %v2227, 1.442695
        %v2258 = vpow.pop %v2257
        %v2259 = vmul.f32 %v2228, 1.442695
        %v2260 = vpow.pop %v2259
        %2261 = vadd.xlane.f32.xlu0 %v2230
        %v2262 = vpop.xlane.xlu0 %2261
        %2263 = vadd.xlane.f32.xlu0 %v2232
        %v2264 = vpop.xlane.xlu0 %2263
        %2265 = vadd.xlane.f32.xlu0 %v2234
        %v2266 = vpop.xlane.xlu0 %2265
        %2267 = vadd.xlane.f32.xlu0 %v2236
        %v2268 = vpop.xlane.xlu0 %2267
        %2269 = vadd.xlane.f32.xlu0 %v2238
        %v2270 = vpop.xlane.xlu0 %2269
        %2271 = vadd.xlane.f32.xlu0 %v2240
        %v2272 = vpop.xlane.xlu0 %2271
        %2273 = vadd.xlane.f32.xlu0 %v2242
        %v2274 = vpop.xlane.xlu0 %2273
        %2275 = vadd.xlane.f32.xlu0 %v2244
        %v2276 = vpop.xlane.xlu0 %2275
        %2277 = vadd.xlane.f32.xlu0 %v2246
        %v2278 = vpop.xlane.xlu0 %2277
        %2279 = vadd.xlane.f32.xlu0 %v2248
        %v2280 = vpop.xlane.xlu0 %2279
        %2281 = vadd.xlane.f32.xlu0 %v2250
        %v2282 = vpop.xlane.xlu0 %2281
        %2283 = vadd.xlane.f32.xlu0 %v2252
        %v2284 = vpop.xlane.xlu0 %2283
        %2285 = vadd.xlane.f32.xlu0 %v2254
        %v2286 = vpop.xlane.xlu0 %2285
        %2287 = vadd.xlane.f32.xlu0 %v2256
        %v2288 = vpop.xlane.xlu0 %2287
        %2289 = vadd.xlane.f32.xlu0 %v2258
        %v2290 = vpop.xlane.xlu0 %2289
        %2291 = vadd.xlane.f32.xlu0 %v2260
        %v2292 = vpop.xlane.xlu0 %2291
        %v2293 = vrcp.pop %v2262
        %v2294 = vrcp.pop %v2264
        %v2295 = vrcp.pop %v2266
        %v2296 = vrcp.pop %v2268
        %v2297 = vrcp.pop %v2270
        %v2298 = vrcp.pop %v2272
        %v2299 = vrcp.pop %v2274
        %v2300 = vrcp.pop %v2276
        %v2301 = vrcp.pop %v2278
        %v2302 = vrcp.pop %v2280
        %v2303 = vrcp.pop %v2282
        %v2304 = vrcp.pop %v2284
        %v2305 = vrcp.pop %v2286
        %v2306 = vrcp.pop %v2288
        %v2307 = vrcp.pop %v2290
        %v2308 = vrcp.pop %v2292
        %v2309 = vmul.f32 %v2230, %v2293
        %v2310 = vmul.f32 %v2232, %v2294
        %v2311 = vmul.f32 %v2234, %v2295
        %v2312 = vmul.f32 %v2236, %v2296
        %v2313 = vmul.f32 %v2238, %v2297
        %v2314 = vmul.f32 %v2240, %v2298
        %v2315 = vmul.f32 %v2242, %v2299
        %v2316 = vmul.f32 %v2244, %v2300
        %v2317 = vmul.f32 %v2246, %v2301
        %v2318 = vmul.f32 %v2248, %v2302
        %v2319 = vmul.f32 %v2250, %v2303
        %v2320 = vmul.f32 %v2252, %v2304
        %v2321 = vmul.f32 %v2254, %v2305
        %v2322 = vmul.f32 %v2256, %v2306
        %v2323 = vmul.f32 %v2258, %v2307
        %v2324 = vmul.f32 %v2260, %v2308
        %v2325 = vpack.c.bf16 %v2310, %v2309
        %v2326 = vpack.c.bf16 %v2312, %v2311
        %v2327 = vpack.c.bf16 %v2314, %v2313
        %v2328 = vpack.c.bf16 %v2316, %v2315
        %v2329 = vpack.c.bf16 %v2318, %v2317
        %v2330 = vpack.c.bf16 %v2320, %v2319
        %v2331 = vpack.c.bf16 %v2322, %v2321
        %v2332 = vpack.c.bf16 %v2324, %v2323
        %v2349 = vunpack.c.l.b16 %v1233
        %v2350 = vunpack.c.l.b16 %v1235
        %v2351 = vunpack.c.l.b16 %v1237
        %v2352 = vunpack.c.l.b16 %v1239
        %v2353 = vunpack.c.l.b16 %v1241
        %v2354 = vunpack.c.l.b16 %v1243
        %v2355 = vunpack.c.l.b16 %v1245
        %v2356 = vunpack.c.l.b16 %v1247
        %v2357 = vunpack.c.l.b16 %v1249
        %v2358 = vunpack.c.l.b16 %v1251
        %v2359 = vunpack.c.l.b16 %v1253
        %v2360 = vunpack.c.l.b16 %v1255
        %v2361 = vunpack.c.l.b16 %v1257
        %v2362 = vunpack.c.l.b16 %v1259
        %v2363 = vunpack.c.l.b16 %v1261
        %v2364 = vunpack.c.l.b16 %v1263
        %v2365 = vpack.c.b16 %v2350, %v2349
        %v2366 = vpack.c.b16 %v2352, %v2351
        %v2367 = vpack.c.b16 %v2354, %v2353
        %v2368 = vpack.c.b16 %v2356, %v2355
        %v2369 = vpack.c.b16 %v2358, %v2357
        %v2370 = vpack.c.b16 %v2360, %v2359
        %v2371 = vpack.c.b16 %v2362, %v2361
        %v2372 = vpack.c.b16 %v2364, %v2363
        %2381 = vmatpush.bf16.msra.mxu0 %v2372
        %2382 = vmatpush.bf16.msra.mxu0 %v2371
        %2383 = vmatpush.bf16.msra.mxu0 %v2370
        %2384 = vmatpush.bf16.msra.mxu0 %v2369
        %2385 = vmatpush.bf16.msra.mxu0 %v2368
        %2386 = vmatpush.bf16.msra.mxu0 %v2367
        %2387 = vmatpush.bf16.msra.mxu0 %v2366
        %2388 = vmatpush.bf16.msra.mxu0 %v2365
        %2389 = vmatmul.bf16.gmra.mxu0 %v2325
        %v2390 = vpop.f32.mrf.mxu0
        %v2391 = vadd.f32 0.0, %v2390
        %v2392 = vpop.f32.mrf.mxu0
        %v2393 = vadd.f32 0.0, %v2392
        %2394 = vmatmul.bf16.gmra.mxu0 %v2326
        %v2395 = vpop.f32.mrf.mxu0
        %v2396 = vadd.f32 0.0, %v2395
        %v2397 = vpop.f32.mrf.mxu0
        %v2398 = vadd.f32 0.0, %v2397
        %2399 = vmatmul.bf16.gmra.mxu0 %v2327
        %v2400 = vpop.f32.mrf.mxu0
        %v2401 = vadd.f32 0.0, %v2400
        %v2402 = vpop.f32.mrf.mxu0
        %v2403 = vadd.f32 0.0, %v2402
        %2404 = vmatmul.bf16.gmra.mxu0 %v2328
        %v2405 = vpop.f32.mrf.mxu0
        %v2406 = vadd.f32 0.0, %v2405
        %v2407 = vpop.f32.mrf.mxu0
        %v2408 = vadd.f32 0.0, %v2407
        %2409 = vmatmul.bf16.gmra.mxu0 %v2329
        %v2410 = vpop.f32.mrf.mxu0
        %v2411 = vadd.f32 0.0, %v2410
        %v2412 = vpop.f32.mrf.mxu0
        %v2413 = vadd.f32 0.0, %v2412
        %2414 = vmatmul.bf16.gmra.mxu0 %v2330
        %v2415 = vpop.f32.mrf.mxu0
        %v2416 = vadd.f32 0.0, %v2415
        %v2417 = vpop.f32.mrf.mxu0
        %v2418 = vadd.f32 0.0, %v2417
        %2419 = vmatmul.bf16.gmra.mxu0 %v2331
        %v2420 = vpop.f32.mrf.mxu0
        %v2421 = vadd.f32 0.0, %v2420
        %v2422 = vpop.f32.mrf.mxu0
        %v2423 = vadd.f32 0.0, %v2422
        %2424 = vmatmul.bf16.gmra.mxu0 %v2332
        %v2425 = vpop.f32.mrf.mxu0
        %v2426 = vadd.f32 0.0, %v2425
        %v2427 = vpop.f32.mrf.mxu0
        %v2428 = vadd.f32 0.0, %v2427
        %2429 = vdwg.mxu0
        %v2430 = vadd.f32 %v1997, %v2391
        %v2431 = vadd.f32 %v1999, %v2393
        %v2432 = vadd.f32 %v2002, %v2396
        %v2433 = vadd.f32 %v2004, %v2398
        %v2434 = vadd.f32 %v2007, %v2401
        %v2435 = vadd.f32 %v2009, %v2403
        %v2436 = vadd.f32 %v2012, %v2406
        %v2437 = vadd.f32 %v2014, %v2408
        %v2438 = vadd.f32 %v2017, %v2411
        %v2439 = vadd.f32 %v2019, %v2413
        %v2440 = vadd.f32 %v2022, %v2416
        %v2441 = vadd.f32 %v2024, %v2418
        %v2442 = vadd.f32 %v2027, %v2421
        %v2443 = vadd.f32 %v2029, %v2423
        %v2444 = vadd.f32 %v2032, %v2426
        %v2445 = vadd.f32 %v2034, %v2428
        %2446 = vset.pattern.permute.xlu0 3
        %2447 = vperm.xlu0 %2446, %v1089
        %v2448 = vpop.permute.xlu0 %2447
        %2450 = vset.pattern.permute.xlu0 3
        %2451 = vperm.xlu0 %2450, %v1092
        %v2452 = vpop.permute.xlu0 %2451
        %2454 = vset.pattern.permute.xlu0 3
        %2455 = vperm.xlu0 %2454, %v1095
        %v2456 = vpop.permute.xlu0 %2455
        %2458 = vset.pattern.permute.xlu0 3
        %2459 = vperm.xlu0 %2458, %v1098
        %v2460 = vpop.permute.xlu0 %2459
        %2462 = vset.pattern.permute.xlu0 3
        %2463 = vperm.xlu0 %2462, %v1101
        %v2464 = vpop.permute.xlu0 %2463
        %2466 = vset.pattern.permute.xlu0 3
        %2467 = vperm.xlu0 %2466, %v1104
        %v2468 = vpop.permute.xlu0 %2467
        %2470 = vset.pattern.permute.xlu0 3
        %2471 = vperm.xlu0 %2470, %v1107
        %v2472 = vpop.permute.xlu0 %2471
        %2474 = vset.pattern.permute.xlu0 3
        %2475 = vperm.xlu0 %2474, %v1110
        %v2476 = vpop.permute.xlu0 %2475
        %2478 = vset.pattern.permute.xlu0 3
        %2479 = vperm.xlu0 %2478, %v1113
        %v2480 = vpop.permute.xlu0 %2479
        %2482 = vset.pattern.permute.xlu0 3
        %2483 = vperm.xlu0 %2482, %v1116
        %v2484 = vpop.permute.xlu0 %2483
        %2486 = vset.pattern.permute.xlu0 3
        %2487 = vperm.xlu0 %2486, %v1119
        %v2488 = vpop.permute.xlu0 %2487
        %2490 = vset.pattern.permute.xlu0 3
        %2491 = vperm.xlu0 %2490, %v1122
        %v2492 = vpop.permute.xlu0 %2491
        %2494 = vset.pattern.permute.xlu0 3
        %2495 = vperm.xlu0 %2494, %v1125
        %v2496 = vpop.permute.xlu0 %2495
        %2498 = vset.pattern.permute.xlu0 3
        %2499 = vperm.xlu0 %2498, %v1128
        %v2500 = vpop.permute.xlu0 %2499
        %2502 = vset.pattern.permute.xlu0 3
        %2503 = vperm.xlu0 %2502, %v1131
        %v2504 = vpop.permute.xlu0 %2503
        %2506 = vset.pattern.permute.xlu0 3
        %2507 = vperm.xlu0 %2506, %v1134
        %v2508 = vpop.permute.xlu0 %2507
        %v2510 = vperm.slane %v1216, 3
        %v2511 = vadd.f32 %v2448, %v2510
        %v2512 = vadd.f32 %v2452, %v2510
        %v2513 = vadd.f32 %v2456, %v2510
        %v2514 = vadd.f32 %v2460, %v2510
        %v2515 = vadd.f32 %v2464, %v2510
        %v2516 = vadd.f32 %v2468, %v2510
        %v2517 = vadd.f32 %v2472, %v2510
        %v2518 = vadd.f32 %v2476, %v2510
        %v2519 = vadd.f32 %v2480, %v2510
        %v2520 = vadd.f32 %v2484, %v2510
        %v2521 = vadd.f32 %v2488, %v2510
        %v2522 = vadd.f32 %v2492, %v2510
        %v2523 = vadd.f32 %v2496, %v2510
        %v2524 = vadd.f32 %v2500, %v2510
        %v2525 = vadd.f32 %v2504, %v2510
        %v2526 = vadd.f32 %v2508, %v2510
        %vm2527 = vcmp.gt.f32.partialorder %v2511, 0.0
        %vm2528 = vcmp.gt.f32.partialorder %v2512, 0.0
        %vm2529 = vcmp.gt.f32.partialorder %v2513, 0.0
        %vm2530 = vcmp.gt.f32.partialorder %v2514, 0.0
        %vm2531 = vcmp.gt.f32.partialorder %v2515, 0.0
        %vm2532 = vcmp.gt.f32.partialorder %v2516, 0.0
        %vm2533 = vcmp.gt.f32.partialorder %v2517, 0.0
        %vm2534 = vcmp.gt.f32.partialorder %v2518, 0.0
        %vm2535 = vcmp.gt.f32.partialorder %v2519, 0.0
        %vm2536 = vcmp.gt.f32.partialorder %v2520, 0.0
        %vm2537 = vcmp.gt.f32.partialorder %v2521, 0.0
        %vm2538 = vcmp.gt.f32.partialorder %v2522, 0.0
        %vm2539 = vcmp.gt.f32.partialorder %v2523, 0.0
        %vm2540 = vcmp.gt.f32.partialorder %v2524, 0.0
        %vm2541 = vcmp.gt.f32.partialorder %v2525, 0.0
        %vm2542 = vcmp.gt.f32.partialorder %v2526, 0.0
        %v2543 = vmul.f32 %v2511, 0.2
        %v2544 = vmul.f32 %v2512, 0.2
        %v2545 = vmul.f32 %v2513, 0.2
        %v2546 = vmul.f32 %v2514, 0.2
        %v2547 = vmul.f32 %v2515, 0.2
        %v2548 = vmul.f32 %v2516, 0.2
        %v2549 = vmul.f32 %v2517, 0.2
        %v2550 = vmul.f32 %v2518, 0.2
        %v2551 = vmul.f32 %v2519, 0.2
        %v2552 = vmul.f32 %v2520, 0.2
        %v2553 = vmul.f32 %v2521, 0.2
        %v2554 = vmul.f32 %v2522, 0.2
        %v2555 = vmul.f32 %v2523, 0.2
        %v2556 = vmul.f32 %v2524, 0.2
        %v2557 = vmul.f32 %v2525, 0.2
        %v2558 = vmul.f32 %v2526, 0.2
        %v2559 = vsel %vm2527, %v2511, %v2543
        %v2560 = vsel %vm2528, %v2512, %v2544
        %v2561 = vsel %vm2529, %v2513, %v2545
        %v2562 = vsel %vm2530, %v2514, %v2546
        %v2563 = vsel %vm2531, %v2515, %v2547
        %v2564 = vsel %vm2532, %v2516, %v2548
        %v2565 = vsel %vm2533, %v2517, %v2549
        %v2566 = vsel %vm2534, %v2518, %v2550
        %v2567 = vsel %vm2535, %v2519, %v2551
        %v2568 = vsel %vm2536, %v2520, %v2552
        %v2569 = vsel %vm2537, %v2521, %v2553
        %v2570 = vsel %vm2538, %v2522, %v2554
        %v2571 = vsel %vm2539, %v2523, %v2555
        %v2572 = vsel %vm2540, %v2524, %v2556
        %v2573 = vsel %vm2541, %v2525, %v2557
        %v2574 = vsel %vm2542, %v2526, %v2558
        %v2575 = vadd.f32 %v2559, %v394
        %v2576 = vadd.f32 %v2560, %v395
        %v2577 = vadd.f32 %v2561, %v396
        %v2578 = vadd.f32 %v2562, %v397
        %v2579 = vadd.f32 %v2563, %v398
        %v2580 = vadd.f32 %v2564, %v399
        %v2581 = vadd.f32 %v2565, %v400
        %v2582 = vadd.f32 %v2566, %v401
        %v2583 = vadd.f32 %v2567, %v402
        %v2584 = vadd.f32 %v2568, %v403
        %v2585 = vadd.f32 %v2569, %v404
        %v2586 = vadd.f32 %v2570, %v405
        %v2587 = vadd.f32 %v2571, %v406
        %v2588 = vadd.f32 %v2572, %v407
        %v2589 = vadd.f32 %v2573, %v408
        %v2590 = vadd.f32 %v2574, %v409
        %2591 = vmax.xlane.f32.xlu0 %v2575
        %v2592 = vpop.xlane.xlu0 %2591
        %2593 = vmax.xlane.f32.xlu0 %v2576
        %v2594 = vpop.xlane.xlu0 %2593
        %2595 = vmax.xlane.f32.xlu0 %v2577
        %v2596 = vpop.xlane.xlu0 %2595
        %2597 = vmax.xlane.f32.xlu0 %v2578
        %v2598 = vpop.xlane.xlu0 %2597
        %2599 = vmax.xlane.f32.xlu0 %v2579
        %v2600 = vpop.xlane.xlu0 %2599
        %2601 = vmax.xlane.f32.xlu0 %v2580
        %v2602 = vpop.xlane.xlu0 %2601
        %2603 = vmax.xlane.f32.xlu0 %v2581
        %v2604 = vpop.xlane.xlu0 %2603
        %2605 = vmax.xlane.f32.xlu0 %v2582
        %v2606 = vpop.xlane.xlu0 %2605
        %2607 = vmax.xlane.f32.xlu0 %v2583
        %v2608 = vpop.xlane.xlu0 %2607
        %2609 = vmax.xlane.f32.xlu0 %v2584
        %v2610 = vpop.xlane.xlu0 %2609
        %2611 = vmax.xlane.f32.xlu0 %v2585
        %v2612 = vpop.xlane.xlu0 %2611
        %2613 = vmax.xlane.f32.xlu0 %v2586
        %v2614 = vpop.xlane.xlu0 %2613
        %2615 = vmax.xlane.f32.xlu0 %v2587
        %v2616 = vpop.xlane.xlu0 %2615
        %2617 = vmax.xlane.f32.xlu0 %v2588
        %v2618 = vpop.xlane.xlu0 %2617
        %2619 = vmax.xlane.f32.xlu0 %v2589
        %v2620 = vpop.xlane.xlu0 %2619
        %2621 = vmax.xlane.f32.xlu0 %v2590
        %v2622 = vpop.xlane.xlu0 %2621
        %v2623 = vsub.f32 %v2575, %v2592
        %v2624 = vsub.f32 %v2576, %v2594
        %v2625 = vsub.f32 %v2577, %v2596
        %v2626 = vsub.f32 %v2578, %v2598
        %v2627 = vsub.f32 %v2579, %v2600
        %v2628 = vsub.f32 %v2580, %v2602
        %v2629 = vsub.f32 %v2581, %v2604
        %v2630 = vsub.f32 %v2582, %v2606
        %v2631 = vsub.f32 %v2583, %v2608
        %v2632 = vsub.f32 %v2584, %v2610
        %v2633 = vsub.f32 %v2585, %v2612
        %v2634 = vsub.f32 %v2586, %v2614
        %v2635 = vsub.f32 %v2587, %v2616
        %v2636 = vsub.f32 %v2588, %v2618
        %v2637 = vsub.f32 %v2589, %v2620
        %v2638 = vsub.f32 %v2590, %v2622
        %v2639 = vmul.f32 %v2623, 1.442695
        %v2640 = vpow.pop %v2639
        %v2641 = vmul.f32 %v2624, 1.442695
        %v2642 = vpow.pop %v2641
        %v2643 = vmul.f32 %v2625, 1.442695
        %v2644 = vpow.pop %v2643
        %v2645 = vmul.f32 %v2626, 1.442695
        %v2646 = vpow.pop %v2645
        %v2647 = vmul.f32 %v2627, 1.442695
        %v2648 = vpow.pop %v2647
        %v2649 = vmul.f32 %v2628, 1.442695
        %v2650 = vpow.pop %v2649
        %v2651 = vmul.f32 %v2629, 1.442695
        %v2652 = vpow.pop %v2651
        %v2653 = vmul.f32 %v2630, 1.442695
        %v2654 = vpow.pop %v2653
        %v2655 = vmul.f32 %v2631, 1.442695
        %v2656 = vpow.pop %v2655
        %v2657 = vmul.f32 %v2632, 1.442695
        %v2658 = vpow.pop %v2657
        %v2659 = vmul.f32 %v2633, 1.442695
        %v2660 = vpow.pop %v2659
        %v2661 = vmul.f32 %v2634, 1.442695
        %v2662 = vpow.pop %v2661
        %v2663 = vmul.f32 %v2635, 1.442695
        %v2664 = vpow.pop %v2663
        %v2665 = vmul.f32 %v2636, 1.442695
        %v2666 = vpow.pop %v2665
        %v2667 = vmul.f32 %v2637, 1.442695
        %v2668 = vpow.pop %v2667
        %v2669 = vmul.f32 %v2638, 1.442695
        %v2670 = vpow.pop %v2669
        %2671 = vadd.xlane.f32.xlu0 %v2640
        %v2672 = vpop.xlane.xlu0 %2671
        %2673 = vadd.xlane.f32.xlu0 %v2642
        %v2674 = vpop.xlane.xlu0 %2673
        %2675 = vadd.xlane.f32.xlu0 %v2644
        %v2676 = vpop.xlane.xlu0 %2675
        %2677 = vadd.xlane.f32.xlu0 %v2646
        %v2678 = vpop.xlane.xlu0 %2677
        %2679 = vadd.xlane.f32.xlu0 %v2648
        %v2680 = vpop.xlane.xlu0 %2679
        %2681 = vadd.xlane.f32.xlu0 %v2650
        %v2682 = vpop.xlane.xlu0 %2681
        %2683 = vadd.xlane.f32.xlu0 %v2652
        %v2684 = vpop.xlane.xlu0 %2683
        %2685 = vadd.xlane.f32.xlu0 %v2654
        %v2686 = vpop.xlane.xlu0 %2685
        %2687 = vadd.xlane.f32.xlu0 %v2656
        %v2688 = vpop.xlane.xlu0 %2687
        %2689 = vadd.xlane.f32.xlu0 %v2658
        %v2690 = vpop.xlane.xlu0 %2689
        %2691 = vadd.xlane.f32.xlu0 %v2660
        %v2692 = vpop.xlane.xlu0 %2691
        %2693 = vadd.xlane.f32.xlu0 %v2662
        %v2694 = vpop.xlane.xlu0 %2693
        %2695 = vadd.xlane.f32.xlu0 %v2664
        %v2696 = vpop.xlane.xlu0 %2695
        %2697 = vadd.xlane.f32.xlu0 %v2666
        %v2698 = vpop.xlane.xlu0 %2697
        %2699 = vadd.xlane.f32.xlu0 %v2668
        %v2700 = vpop.xlane.xlu0 %2699
        %2701 = vadd.xlane.f32.xlu0 %v2670
        %v2702 = vpop.xlane.xlu0 %2701
        %v2703 = vrcp.pop %v2672
        %v2704 = vrcp.pop %v2674
        %v2705 = vrcp.pop %v2676
        %v2706 = vrcp.pop %v2678
        %v2707 = vrcp.pop %v2680
        %v2708 = vrcp.pop %v2682
        %v2709 = vrcp.pop %v2684
        %v2710 = vrcp.pop %v2686
        %v2711 = vrcp.pop %v2688
        %v2712 = vrcp.pop %v2690
        %v2713 = vrcp.pop %v2692
        %v2714 = vrcp.pop %v2694
        %v2715 = vrcp.pop %v2696
        %v2716 = vrcp.pop %v2698
        %v2717 = vrcp.pop %v2700
        %v2718 = vrcp.pop %v2702
        %v2719 = vmul.f32 %v2640, %v2703
        %v2720 = vmul.f32 %v2642, %v2704
        %v2721 = vmul.f32 %v2644, %v2705
        %v2722 = vmul.f32 %v2646, %v2706
        %v2723 = vmul.f32 %v2648, %v2707
        %v2724 = vmul.f32 %v2650, %v2708
        %v2725 = vmul.f32 %v2652, %v2709
        %v2726 = vmul.f32 %v2654, %v2710
        %v2727 = vmul.f32 %v2656, %v2711
        %v2728 = vmul.f32 %v2658, %v2712
        %v2729 = vmul.f32 %v2660, %v2713
        %v2730 = vmul.f32 %v2662, %v2714
        %v2731 = vmul.f32 %v2664, %v2715
        %v2732 = vmul.f32 %v2666, %v2716
        %v2733 = vmul.f32 %v2668, %v2717
        %v2734 = vmul.f32 %v2670, %v2718
        %v2735 = vpack.c.bf16 %v2720, %v2719
        %v2736 = vpack.c.bf16 %v2722, %v2721
        %v2737 = vpack.c.bf16 %v2724, %v2723
        %v2738 = vpack.c.bf16 %v2726, %v2725
        %v2739 = vpack.c.bf16 %v2728, %v2727
        %v2740 = vpack.c.bf16 %v2730, %v2729
        %v2741 = vpack.c.bf16 %v2732, %v2731
        %v2742 = vpack.c.bf16 %v2734, %v2733
        %v2743 = vunpack.c.h.b16 %v1233
        %v2744 = vunpack.c.h.b16 %v1235
        %v2745 = vunpack.c.h.b16 %v1237
        %v2746 = vunpack.c.h.b16 %v1239
        %v2747 = vunpack.c.h.b16 %v1241
        %v2748 = vunpack.c.h.b16 %v1243
        %v2749 = vunpack.c.h.b16 %v1245
        %v2750 = vunpack.c.h.b16 %v1247
        %v2751 = vunpack.c.h.b16 %v1249
        %v2752 = vunpack.c.h.b16 %v1251
        %v2753 = vunpack.c.h.b16 %v1253
        %v2754 = vunpack.c.h.b16 %v1255
        %v2755 = vunpack.c.h.b16 %v1257
        %v2756 = vunpack.c.h.b16 %v1259
        %v2757 = vunpack.c.h.b16 %v1261
        %v2758 = vunpack.c.h.b16 %v1263
        %v2759 = vpack.c.b16 %v2744, %v2743
        %v2760 = vpack.c.b16 %v2746, %v2745
        %v2761 = vpack.c.b16 %v2748, %v2747
        %v2762 = vpack.c.b16 %v2750, %v2749
        %v2763 = vpack.c.b16 %v2752, %v2751
        %v2764 = vpack.c.b16 %v2754, %v2753
        %v2765 = vpack.c.b16 %v2756, %v2755
        %v2766 = vpack.c.b16 %v2758, %v2757
        %2775 = vmatpush.bf16.msra.mxu0 %v2766
        %2776 = vmatpush.bf16.msra.mxu0 %v2765
        %2777 = vmatpush.bf16.msra.mxu0 %v2764
        %2778 = vmatpush.bf16.msra.mxu0 %v2763
        %2779 = vmatpush.bf16.msra.mxu0 %v2762
        %2780 = vmatpush.bf16.msra.mxu0 %v2761
        %2781 = vmatpush.bf16.msra.mxu0 %v2760
        %2782 = vmatpush.bf16.msra.mxu0 %v2759
        %2783 = vmatmul.bf16.gmra.mxu0 %v2735
        %v2784 = vpop.f32.mrf.mxu0
        %v2785 = vadd.f32 0.0, %v2784
        %v2786 = vpop.f32.mrf.mxu0
        %v2787 = vadd.f32 0.0, %v2786
        %2788 = vmatmul.bf16.gmra.mxu0 %v2736
        %v2789 = vpop.f32.mrf.mxu0
        %v2790 = vadd.f32 0.0, %v2789
        %v2791 = vpop.f32.mrf.mxu0
        %v2792 = vadd.f32 0.0, %v2791
        %2793 = vmatmul.bf16.gmra.mxu0 %v2737
        %v2794 = vpop.f32.mrf.mxu0
        %v2795 = vadd.f32 0.0, %v2794
        %v2796 = vpop.f32.mrf.mxu0
        %v2797 = vadd.f32 0.0, %v2796
        %2798 = vmatmul.bf16.gmra.mxu0 %v2738
        %v2799 = vpop.f32.mrf.mxu0
        %v2800 = vadd.f32 0.0, %v2799
        %v2801 = vpop.f32.mrf.mxu0
        %v2802 = vadd.f32 0.0, %v2801
        %2803 = vmatmul.bf16.gmra.mxu0 %v2739
        %v2804 = vpop.f32.mrf.mxu0
        %v2805 = vadd.f32 0.0, %v2804
        %v2806 = vpop.f32.mrf.mxu0
        %v2807 = vadd.f32 0.0, %v2806
        %2808 = vmatmul.bf16.gmra.mxu0 %v2740
        %v2809 = vpop.f32.mrf.mxu0
        %v2810 = vadd.f32 0.0, %v2809
        %v2811 = vpop.f32.mrf.mxu0
        %v2812 = vadd.f32 0.0, %v2811
        %2813 = vmatmul.bf16.gmra.mxu0 %v2741
        %v2814 = vpop.f32.mrf.mxu0
        %v2815 = vadd.f32 0.0, %v2814
        %v2816 = vpop.f32.mrf.mxu0
        %v2817 = vadd.f32 0.0, %v2816
        %2818 = vmatmul.bf16.gmra.mxu0 %v2742
        %v2819 = vpop.f32.mrf.mxu0
        %v2820 = vadd.f32 0.0, %v2819
        %v2821 = vpop.f32.mrf.mxu0
        %v2822 = vadd.f32 0.0, %v2821
        %2823 = vdwg.mxu0
        %v2824 = vadd.f32 %v2430, %v2785
        %v2825 = vadd.f32 %v2431, %v2787
        %v2826 = vadd.f32 %v2432, %v2790
        %v2827 = vadd.f32 %v2433, %v2792
        %v2828 = vadd.f32 %v2434, %v2795
        %v2829 = vadd.f32 %v2435, %v2797
        %v2830 = vadd.f32 %v2436, %v2800
        %v2831 = vadd.f32 %v2437, %v2802
        %v2832 = vadd.f32 %v2438, %v2805
        %v2833 = vadd.f32 %v2439, %v2807
        %v2834 = vadd.f32 %v2440, %v2810
        %v2835 = vadd.f32 %v2441, %v2812
        %v2836 = vadd.f32 %v2442, %v2815
        %v2837 = vadd.f32 %v2443, %v2817
        %v2838 = vadd.f32 %v2444, %v2820
        %v2839 = vadd.f32 %v2445, %v2822
        %v2840 = vmul.f32 %v2824, 0.25
        %v2841 = vmul.f32 %v2825, 0.25
        %v2842 = vmul.f32 %v2826, 0.25
        %v2843 = vmul.f32 %v2827, 0.25
        %v2844 = vmul.f32 %v2828, 0.25
        %v2845 = vmul.f32 %v2829, 0.25
        %v2846 = vmul.f32 %v2830, 0.25
        %v2847 = vmul.f32 %v2831, 0.25
        %v2848 = vmul.f32 %v2832, 0.25
        %v2849 = vmul.f32 %v2833, 0.25
        %v2850 = vmul.f32 %v2834, 0.25
        %v2851 = vmul.f32 %v2835, 0.25
        %v2852 = vmul.f32 %v2836, 0.25
        %v2853 = vmul.f32 %v2837, 0.25
        %v2854 = vmul.f32 %v2838, 0.25
        %v2855 = vmul.f32 %v2839, 0.25
        %v2856 = vperm.slane %v410, 0
        %v2857 = vadd.f32 %v2840, %v2856
        %v2858 = vadd.f32 %v2841, %v2856
        %v2859 = vadd.f32 %v2842, %v2856
        %v2860 = vadd.f32 %v2843, %v2856
        %v2861 = vadd.f32 %v2844, %v2856
        %v2862 = vadd.f32 %v2845, %v2856
        %v2863 = vadd.f32 %v2846, %v2856
        %v2864 = vadd.f32 %v2847, %v2856
        %v2865 = vadd.f32 %v2848, %v2856
        %v2866 = vadd.f32 %v2849, %v2856
        %v2867 = vadd.f32 %v2850, %v2856
        %v2868 = vadd.f32 %v2851, %v2856
        %v2869 = vadd.f32 %v2852, %v2856
        %v2870 = vadd.f32 %v2853, %v2856
        %v2871 = vadd.f32 %v2854, %v2856
        %v2872 = vadd.f32 %v2855, %v2856
        %v2873 = vadd.f32 %v378, %v2857
        %v2874 = vadd.f32 %v379, %v2858
        %v2875 = vadd.f32 %v380, %v2859
        %v2876 = vadd.f32 %v381, %v2860
        %v2877 = vadd.f32 %v382, %v2861
        %v2878 = vadd.f32 %v383, %v2862
        %v2879 = vadd.f32 %v384, %v2863
        %v2880 = vadd.f32 %v385, %v2864
        %v2881 = vadd.f32 %v386, %v2865
        %v2882 = vadd.f32 %v387, %v2866
        %v2883 = vadd.f32 %v388, %v2867
        %v2884 = vadd.f32 %v389, %v2868
        %v2885 = vadd.f32 %v390, %v2869
        %v2886 = vadd.f32 %v391, %v2870
        %v2887 = vadd.f32 %v392, %v2871
        %v2888 = vadd.f32 %v393, %v2872
        %2889 = vadd.xlane.f32.xlu0 %v2873
        %v2890 = vpop.xlane.xlu0 %2889
        %2891 = vadd.xlane.f32.xlu0 %v2874
        %v2892 = vpop.xlane.xlu0 %2891
        %2893 = vadd.xlane.f32.xlu0 %v2875
        %v2894 = vpop.xlane.xlu0 %2893
        %2895 = vadd.xlane.f32.xlu0 %v2876
        %v2896 = vpop.xlane.xlu0 %2895
        %2897 = vadd.xlane.f32.xlu0 %v2877
        %v2898 = vpop.xlane.xlu0 %2897
        %2899 = vadd.xlane.f32.xlu0 %v2878
        %v2900 = vpop.xlane.xlu0 %2899
        %2901 = vadd.xlane.f32.xlu0 %v2879
        %v2902 = vpop.xlane.xlu0 %2901
        %2903 = vadd.xlane.f32.xlu0 %v2880
        %v2904 = vpop.xlane.xlu0 %2903
        %2905 = vadd.xlane.f32.xlu0 %v2881
        %v2906 = vpop.xlane.xlu0 %2905
        %2907 = vadd.xlane.f32.xlu0 %v2882
        %v2908 = vpop.xlane.xlu0 %2907
        %2909 = vadd.xlane.f32.xlu0 %v2883
        %v2910 = vpop.xlane.xlu0 %2909
        %2911 = vadd.xlane.f32.xlu0 %v2884
        %v2912 = vpop.xlane.xlu0 %2911
        %2913 = vadd.xlane.f32.xlu0 %v2885
        %v2914 = vpop.xlane.xlu0 %2913
        %2915 = vadd.xlane.f32.xlu0 %v2886
        %v2916 = vpop.xlane.xlu0 %2915
        %2917 = vadd.xlane.f32.xlu0 %v2887
        %v2918 = vpop.xlane.xlu0 %2917
        %2919 = vadd.xlane.f32.xlu0 %v2888
        %v2920 = vpop.xlane.xlu0 %2919
        %v2921 = vmul.f32 %v2890, 0.03125
        %v2922 = vmul.f32 %v2892, 0.03125
        %v2923 = vmul.f32 %v2894, 0.03125
        %v2924 = vmul.f32 %v2896, 0.03125
        %v2925 = vmul.f32 %v2898, 0.03125
        %v2926 = vmul.f32 %v2900, 0.03125
        %v2927 = vmul.f32 %v2902, 0.03125
        %v2928 = vmul.f32 %v2904, 0.03125
        %v2929 = vmul.f32 %v2906, 0.03125
        %v2930 = vmul.f32 %v2908, 0.03125
        %v2931 = vmul.f32 %v2910, 0.03125
        %v2932 = vmul.f32 %v2912, 0.03125
        %v2933 = vmul.f32 %v2914, 0.03125
        %v2934 = vmul.f32 %v2916, 0.03125
        %v2935 = vmul.f32 %v2918, 0.03125
        %v2936 = vmul.f32 %v2920, 0.03125
        %v2937 = vsub.f32 %v2873, %v2921
        %v2938 = vsub.f32 %v2874, %v2922
        %v2939 = vsub.f32 %v2875, %v2923
        %v2940 = vsub.f32 %v2876, %v2924
        %v2941 = vsub.f32 %v2877, %v2925
        %v2942 = vsub.f32 %v2878, %v2926
        %v2943 = vsub.f32 %v2879, %v2927
        %v2944 = vsub.f32 %v2880, %v2928
        %v2945 = vsub.f32 %v2881, %v2929
        %v2946 = vsub.f32 %v2882, %v2930
        %v2947 = vsub.f32 %v2883, %v2931
        %v2948 = vsub.f32 %v2884, %v2932
        %v2949 = vsub.f32 %v2885, %v2933
        %v2950 = vsub.f32 %v2886, %v2934
        %v2951 = vsub.f32 %v2887, %v2935
        %v2952 = vsub.f32 %v2888, %v2936
        %v2953 = vmul.f32 %v2937, %v415
        %v2954 = vmul.f32 %v2938, %v415
        %v2955 = vmul.f32 %v2939, %v415
        %v2956 = vmul.f32 %v2940, %v415
        %v2957 = vmul.f32 %v2941, %v415
        %v2958 = vmul.f32 %v2942, %v415
        %v2959 = vmul.f32 %v2943, %v415
        %v2960 = vmul.f32 %v2944, %v415
        %v2961 = vmul.f32 %v2945, %v415
        %v2962 = vmul.f32 %v2946, %v415
        %v2963 = vmul.f32 %v2947, %v415
        %v2964 = vmul.f32 %v2948, %v415
        %v2965 = vmul.f32 %v2949, %v415
        %v2966 = vmul.f32 %v2950, %v415
        %v2967 = vmul.f32 %v2951, %v415
        %v2968 = vmul.f32 %v2952, %v415
        %v2969 = vmul.f32 %v2953, %v2953
        %v2970 = vmul.f32 %v2954, %v2954
        %v2971 = vmul.f32 %v2955, %v2955
        %v2972 = vmul.f32 %v2956, %v2956
        %v2973 = vmul.f32 %v2957, %v2957
        %v2974 = vmul.f32 %v2958, %v2958
        %v2975 = vmul.f32 %v2959, %v2959
        %v2976 = vmul.f32 %v2960, %v2960
        %v2977 = vmul.f32 %v2961, %v2961
        %v2978 = vmul.f32 %v2962, %v2962
        %v2979 = vmul.f32 %v2963, %v2963
        %v2980 = vmul.f32 %v2964, %v2964
        %v2981 = vmul.f32 %v2965, %v2965
        %v2982 = vmul.f32 %v2966, %v2966
        %v2983 = vmul.f32 %v2967, %v2967
        %v2984 = vmul.f32 %v2968, %v2968
        %2985 = vadd.xlane.f32.xlu0 %v2969
        %v2986 = vpop.xlane.xlu0 %2985
        %2987 = vadd.xlane.f32.xlu0 %v2970
        %v2988 = vpop.xlane.xlu0 %2987
        %2989 = vadd.xlane.f32.xlu0 %v2971
        %v2990 = vpop.xlane.xlu0 %2989
        %2991 = vadd.xlane.f32.xlu0 %v2972
        %v2992 = vpop.xlane.xlu0 %2991
        %2993 = vadd.xlane.f32.xlu0 %v2973
        %v2994 = vpop.xlane.xlu0 %2993
        %2995 = vadd.xlane.f32.xlu0 %v2974
        %v2996 = vpop.xlane.xlu0 %2995
        %2997 = vadd.xlane.f32.xlu0 %v2975
        %v2998 = vpop.xlane.xlu0 %2997
        %2999 = vadd.xlane.f32.xlu0 %v2976
        %v3000 = vpop.xlane.xlu0 %2999
        %3001 = vadd.xlane.f32.xlu0 %v2977
        %v3002 = vpop.xlane.xlu0 %3001
        %3003 = vadd.xlane.f32.xlu0 %v2978
        %v3004 = vpop.xlane.xlu0 %3003
        %3005 = vadd.xlane.f32.xlu0 %v2979
        %v3006 = vpop.xlane.xlu0 %3005
        %3007 = vadd.xlane.f32.xlu0 %v2980
        %v3008 = vpop.xlane.xlu0 %3007
        %3009 = vadd.xlane.f32.xlu0 %v2981
        %v3010 = vpop.xlane.xlu0 %3009
        %3011 = vadd.xlane.f32.xlu0 %v2982
        %v3012 = vpop.xlane.xlu0 %3011
        %3013 = vadd.xlane.f32.xlu0 %v2983
        %v3014 = vpop.xlane.xlu0 %3013
        %3015 = vadd.xlane.f32.xlu0 %v2984
        %v3016 = vpop.xlane.xlu0 %3015
        %v3017 = vmul.f32 %v2986, 0.03125
        %v3018 = vmul.f32 %v2988, 0.03125
        %v3019 = vmul.f32 %v2990, 0.03125
        %v3020 = vmul.f32 %v2992, 0.03125
        %v3021 = vmul.f32 %v2994, 0.03125
        %v3022 = vmul.f32 %v2996, 0.03125
        %v3023 = vmul.f32 %v2998, 0.03125
        %v3024 = vmul.f32 %v3000, 0.03125
        %v3025 = vmul.f32 %v3002, 0.03125
        %v3026 = vmul.f32 %v3004, 0.03125
        %v3027 = vmul.f32 %v3006, 0.03125
        %v3028 = vmul.f32 %v3008, 0.03125
        %v3029 = vmul.f32 %v3010, 0.03125
        %v3030 = vmul.f32 %v3012, 0.03125
        %v3031 = vmul.f32 %v3014, 0.03125
        %v3032 = vmul.f32 %v3016, 0.03125
        %v3033 = vadd.f32 %v3017, 1e-05
        %v3034 = vadd.f32 %v3018, 1e-05
        %v3035 = vadd.f32 %v3019, 1e-05
        %v3036 = vadd.f32 %v3020, 1e-05
        %v3037 = vadd.f32 %v3021, 1e-05
        %v3038 = vadd.f32 %v3022, 1e-05
        %v3039 = vadd.f32 %v3023, 1e-05
        %v3040 = vadd.f32 %v3024, 1e-05
        %v3041 = vadd.f32 %v3025, 1e-05
        %v3042 = vadd.f32 %v3026, 1e-05
        %v3043 = vadd.f32 %v3027, 1e-05
        %v3044 = vadd.f32 %v3028, 1e-05
        %v3045 = vadd.f32 %v3029, 1e-05
        %v3046 = vadd.f32 %v3030, 1e-05
        %v3047 = vadd.f32 %v3031, 1e-05
        %v3048 = vadd.f32 %v3032, 1e-05
        %v3049 = vrsqrt.pop %v3033
        %v3050 = vmul.f32 %v3049, %v3033
        %v3051 = vmul.f32 %v3050, %v3049
        %v3052 = vmul.f32 0.5, %v3051
        %v3053 = vsub.f32 1.5, %v3052
        %v3054 = vmul.f32 %v3049, %v3053
        %vm3055 = vweird.f32 %v3033
        %vm3056 = vweird.f32 %v3049
        %vm3057 = vmor %vm3055, %vm3056
        %v3058 = vsel %vm3057, %v3049, %v3054
        %v3059 = vrsqrt.pop %v3034
        %v3060 = vmul.f32 %v3059, %v3034
        %v3061 = vmul.f32 %v3060, %v3059
        %v3062 = vmul.f32 0.5, %v3061
        %v3063 = vsub.f32 1.5, %v3062
        %v3064 = vmul.f32 %v3059, %v3063
        %vm3065 = vweird.f32 %v3034
        %vm3066 = vweird.f32 %v3059
        %vm3067 = vmor %vm3065, %vm3066
        %v3068 = vsel %vm3067, %v3059, %v3064
        %v3069 = vrsqrt.pop %v3035
        %v3070 = vmul.f32 %v3069, %v3035
        %v3071 = vmul.f32 %v3070, %v3069
        %v3072 = vmul.f32 0.5, %v3071
        %v3073 = vsub.f32 1.5, %v3072
        %v3074 = vmul.f32 %v3069, %v3073
        %vm3075 = vweird.f32 %v3035
        %vm3076 = vweird.f32 %v3069
        %vm3077 = vmor %vm3075, %vm3076
        %v3078 = vsel %vm3077, %v3069, %v3074
        %v3079 = vrsqrt.pop %v3036
        %v3080 = vmul.f32 %v3079, %v3036
        %v3081 = vmul.f32 %v3080, %v3079
        %v3082 = vmul.f32 0.5, %v3081
        %v3083 = vsub.f32 1.5, %v3082
        %v3084 = vmul.f32 %v3079, %v3083
        %vm3085 = vweird.f32 %v3036
        %vm3086 = vweird.f32 %v3079
        %vm3087 = vmor %vm3085, %vm3086
        %v3088 = vsel %vm3087, %v3079, %v3084
        %v3089 = vrsqrt.pop %v3037
        %v3090 = vmul.f32 %v3089, %v3037
        %v3091 = vmul.f32 %v3090, %v3089
        %v3092 = vmul.f32 0.5, %v3091
        %v3093 = vsub.f32 1.5, %v3092
        %v3094 = vmul.f32 %v3089, %v3093
        %vm3095 = vweird.f32 %v3037
        %vm3096 = vweird.f32 %v3089
        %vm3097 = vmor %vm3095, %vm3096
        %v3098 = vsel %vm3097, %v3089, %v3094
        %v3099 = vrsqrt.pop %v3038
        %v3100 = vmul.f32 %v3099, %v3038
        %v3101 = vmul.f32 %v3100, %v3099
        %v3102 = vmul.f32 0.5, %v3101
        %v3103 = vsub.f32 1.5, %v3102
        %v3104 = vmul.f32 %v3099, %v3103
        %vm3105 = vweird.f32 %v3038
        %vm3106 = vweird.f32 %v3099
        %vm3107 = vmor %vm3105, %vm3106
        %v3108 = vsel %vm3107, %v3099, %v3104
        %v3109 = vrsqrt.pop %v3039
        %v3110 = vmul.f32 %v3109, %v3039
        %v3111 = vmul.f32 %v3110, %v3109
        %v3112 = vmul.f32 0.5, %v3111
        %v3113 = vsub.f32 1.5, %v3112
        %v3114 = vmul.f32 %v3109, %v3113
        %vm3115 = vweird.f32 %v3039
        %vm3116 = vweird.f32 %v3109
        %vm3117 = vmor %vm3115, %vm3116
        %v3118 = vsel %vm3117, %v3109, %v3114
        %v3119 = vrsqrt.pop %v3040
        %v3120 = vmul.f32 %v3119, %v3040
        %v3121 = vmul.f32 %v3120, %v3119
        %v3122 = vmul.f32 0.5, %v3121
        %v3123 = vsub.f32 1.5, %v3122
        %v3124 = vmul.f32 %v3119, %v3123
        %vm3125 = vweird.f32 %v3040
        %vm3126 = vweird.f32 %v3119
        %vm3127 = vmor %vm3125, %vm3126
        %v3128 = vsel %vm3127, %v3119, %v3124
        %v3129 = vrsqrt.pop %v3041
        %v3130 = vmul.f32 %v3129, %v3041
        %v3131 = vmul.f32 %v3130, %v3129
        %v3132 = vmul.f32 0.5, %v3131
        %v3133 = vsub.f32 1.5, %v3132
        %v3134 = vmul.f32 %v3129, %v3133
        %vm3135 = vweird.f32 %v3041
        %vm3136 = vweird.f32 %v3129
        %vm3137 = vmor %vm3135, %vm3136
        %v3138 = vsel %vm3137, %v3129, %v3134
        %v3139 = vrsqrt.pop %v3042
        %v3140 = vmul.f32 %v3139, %v3042
        %v3141 = vmul.f32 %v3140, %v3139
        %v3142 = vmul.f32 0.5, %v3141
        %v3143 = vsub.f32 1.5, %v3142
        %v3144 = vmul.f32 %v3139, %v3143
        %vm3145 = vweird.f32 %v3042
        %vm3146 = vweird.f32 %v3139
        %vm3147 = vmor %vm3145, %vm3146
        %v3148 = vsel %vm3147, %v3139, %v3144
        %v3149 = vrsqrt.pop %v3043
        %v3150 = vmul.f32 %v3149, %v3043
        %v3151 = vmul.f32 %v3150, %v3149
        %v3152 = vmul.f32 0.5, %v3151
        %v3153 = vsub.f32 1.5, %v3152
        %v3154 = vmul.f32 %v3149, %v3153
        %vm3155 = vweird.f32 %v3043
        %vm3156 = vweird.f32 %v3149
        %vm3157 = vmor %vm3155, %vm3156
        %v3158 = vsel %vm3157, %v3149, %v3154
        %v3159 = vrsqrt.pop %v3044
        %v3160 = vmul.f32 %v3159, %v3044
        %v3161 = vmul.f32 %v3160, %v3159
        %v3162 = vmul.f32 0.5, %v3161
        %v3163 = vsub.f32 1.5, %v3162
        %v3164 = vmul.f32 %v3159, %v3163
        %vm3165 = vweird.f32 %v3044
        %vm3166 = vweird.f32 %v3159
        %vm3167 = vmor %vm3165, %vm3166
        %v3168 = vsel %vm3167, %v3159, %v3164
        %v3169 = vrsqrt.pop %v3045
        %v3170 = vmul.f32 %v3169, %v3045
        %v3171 = vmul.f32 %v3170, %v3169
        %v3172 = vmul.f32 0.5, %v3171
        %v3173 = vsub.f32 1.5, %v3172
        %v3174 = vmul.f32 %v3169, %v3173
        %vm3175 = vweird.f32 %v3045
        %vm3176 = vweird.f32 %v3169
        %vm3177 = vmor %vm3175, %vm3176
        %v3178 = vsel %vm3177, %v3169, %v3174
        %v3179 = vrsqrt.pop %v3046
        %v3180 = vmul.f32 %v3179, %v3046
        %v3181 = vmul.f32 %v3180, %v3179
        %v3182 = vmul.f32 0.5, %v3181
        %v3183 = vsub.f32 1.5, %v3182
        %v3184 = vmul.f32 %v3179, %v3183
        %vm3185 = vweird.f32 %v3046
        %vm3186 = vweird.f32 %v3179
        %vm3187 = vmor %vm3185, %vm3186
        %v3188 = vsel %vm3187, %v3179, %v3184
        %v3189 = vrsqrt.pop %v3047
        %v3190 = vmul.f32 %v3189, %v3047
        %v3191 = vmul.f32 %v3190, %v3189
        %v3192 = vmul.f32 0.5, %v3191
        %v3193 = vsub.f32 1.5, %v3192
        %v3194 = vmul.f32 %v3189, %v3193
        %vm3195 = vweird.f32 %v3047
        %vm3196 = vweird.f32 %v3189
        %vm3197 = vmor %vm3195, %vm3196
        %v3198 = vsel %vm3197, %v3189, %v3194
        %v3199 = vrsqrt.pop %v3048
        %v3200 = vmul.f32 %v3199, %v3048
        %v3201 = vmul.f32 %v3200, %v3199
        %v3202 = vmul.f32 0.5, %v3201
        %v3203 = vsub.f32 1.5, %v3202
        %v3204 = vmul.f32 %v3199, %v3203
        %vm3205 = vweird.f32 %v3048
        %vm3206 = vweird.f32 %v3199
        %vm3207 = vmor %vm3205, %vm3206
        %v3208 = vsel %vm3207, %v3199, %v3204
        %v3209 = vmul.f32 %v2953, %v3058
        %v3210 = vmul.f32 %v2954, %v3068
        %v3211 = vmul.f32 %v2955, %v3078
        %v3212 = vmul.f32 %v2956, %v3088
        %v3213 = vmul.f32 %v2957, %v3098
        %v3214 = vmul.f32 %v2958, %v3108
        %v3215 = vmul.f32 %v2959, %v3118
        %v3216 = vmul.f32 %v2960, %v3128
        %v3217 = vmul.f32 %v2961, %v3138
        %v3218 = vmul.f32 %v2962, %v3148
        %v3219 = vmul.f32 %v2963, %v3158
        %v3220 = vmul.f32 %v2964, %v3168
        %v3221 = vmul.f32 %v2965, %v3178
        %v3222 = vmul.f32 %v2966, %v3188
        %v3223 = vmul.f32 %v2967, %v3198
        %v3224 = vmul.f32 %v2968, %v3208
        %v3225 = vperm.slane %v410, 1
        %v3226 = vmul.f32 %v3209, %v3225
        %v3227 = vmul.f32 %v3210, %v3225
        %v3228 = vmul.f32 %v3211, %v3225
        %v3229 = vmul.f32 %v3212, %v3225
        %v3230 = vmul.f32 %v3213, %v3225
        %v3231 = vmul.f32 %v3214, %v3225
        %v3232 = vmul.f32 %v3215, %v3225
        %v3233 = vmul.f32 %v3216, %v3225
        %v3234 = vmul.f32 %v3217, %v3225
        %v3235 = vmul.f32 %v3218, %v3225
        %v3236 = vmul.f32 %v3219, %v3225
        %v3237 = vmul.f32 %v3220, %v3225
        %v3238 = vmul.f32 %v3221, %v3225
        %v3239 = vmul.f32 %v3222, %v3225
        %v3240 = vmul.f32 %v3223, %v3225
        %v3241 = vmul.f32 %v3224, %v3225
        %v3242 = vperm.slane %v410, 2
        %v3243 = vadd.f32 %v3226, %v3242
        %v3244 = vadd.f32 %v3227, %v3242
        %v3245 = vadd.f32 %v3228, %v3242
        %v3246 = vadd.f32 %v3229, %v3242
        %v3247 = vadd.f32 %v3230, %v3242
        %v3248 = vadd.f32 %v3231, %v3242
        %v3249 = vadd.f32 %v3232, %v3242
        %v3250 = vadd.f32 %v3233, %v3242
        %v3251 = vadd.f32 %v3234, %v3242
        %v3252 = vadd.f32 %v3235, %v3242
        %v3253 = vadd.f32 %v3236, %v3242
        %v3254 = vadd.f32 %v3237, %v3242
        %v3255 = vadd.f32 %v3238, %v3242
        %v3256 = vadd.f32 %v3239, %v3242
        %v3257 = vadd.f32 %v3240, %v3242
        %v3258 = vadd.f32 %v3241, %v3242
        %v3259 = vpack.c.bf16 %v3244, %v3243
        %v3260 = vpack.c.bf16 %v3246, %v3245
        %v3261 = vpack.c.bf16 %v3248, %v3247
        %v3262 = vpack.c.bf16 %v3250, %v3249
        %v3263 = vpack.c.bf16 %v3252, %v3251
        %v3264 = vpack.c.bf16 %v3254, %v3253
        %v3265 = vpack.c.bf16 %v3256, %v3255
        %v3266 = vpack.c.bf16 %v3258, %v3257
        %v3267 = vld [vmem:[%s332] sm:$0xf]
        %v3268 = vld [vmem:[%s332 + $0x4] sm:$0xf]
        %v3269 = vld [vmem:[%s332 + $0x8] sm:$0xf]
        %v3270 = vld [vmem:[%s332 + $0xc] sm:$0xf]
        %v3271 = vld [vmem:[%s332 + $0x10] sm:$0xf]
        %v3272 = vld [vmem:[%s332 + $0x14] sm:$0xf]
        %v3273 = vld [vmem:[%s332 + $0x18] sm:$0xf]
        %v3274 = vld [vmem:[%s332 + $0x1c] sm:$0xf]
        %v3275 = vld [vmem:[%s332 + $0x20] sm:$0xf]
        %v3276 = vld [vmem:[%s332 + $0x24] sm:$0xf]
        %v3277 = vld [vmem:[%s332 + $0x28] sm:$0xf]
        %v3278 = vld [vmem:[%s332 + $0x2c] sm:$0xf]
        %v3279 = vld [vmem:[%s332 + $0x30] sm:$0xf]
        %v3280 = vld [vmem:[%s332 + $0x34] sm:$0xf]
        %v3281 = vld [vmem:[%s332 + $0x38] sm:$0xf]
        %v3282 = vld [vmem:[%s332 + $0x3c] sm:$0xf]
        %v3283 = vperm.slane %v410, 3
        %v3300 = vunpack.c.l.b16 %v3267
        %v3301 = vunpack.c.l.b16 %v3268
        %v3302 = vunpack.c.l.b16 %v3269
        %v3303 = vunpack.c.l.b16 %v3270
        %v3304 = vunpack.c.l.b16 %v3271
        %v3305 = vunpack.c.l.b16 %v3272
        %v3306 = vunpack.c.l.b16 %v3273
        %v3307 = vunpack.c.l.b16 %v3274
        %v3308 = vunpack.c.l.b16 %v3275
        %v3309 = vunpack.c.l.b16 %v3276
        %v3310 = vunpack.c.l.b16 %v3277
        %v3311 = vunpack.c.l.b16 %v3278
        %v3312 = vunpack.c.l.b16 %v3279
        %v3313 = vunpack.c.l.b16 %v3280
        %v3314 = vunpack.c.l.b16 %v3281
        %v3315 = vunpack.c.l.b16 %v3282
        %v3316 = vpack.c.b16 %v3301, %v3300
        %v3317 = vpack.c.b16 %v3303, %v3302
        %v3318 = vpack.c.b16 %v3305, %v3304
        %v3319 = vpack.c.b16 %v3307, %v3306
        %v3320 = vpack.c.b16 %v3309, %v3308
        %v3321 = vpack.c.b16 %v3311, %v3310
        %v3322 = vpack.c.b16 %v3313, %v3312
        %v3323 = vpack.c.b16 %v3315, %v3314
        %3332 = vmatpush.bf16.msra.mxu0 %v3323
        %3333 = vmatpush.bf16.msra.mxu0 %v3322
        %3334 = vmatpush.bf16.msra.mxu0 %v3321
        %3335 = vmatpush.bf16.msra.mxu0 %v3320
        %3336 = vmatpush.bf16.msra.mxu0 %v3319
        %3337 = vmatpush.bf16.msra.mxu0 %v3318
        %3338 = vmatpush.bf16.msra.mxu0 %v3317
        %3339 = vmatpush.bf16.msra.mxu0 %v3316
        %3340 = vmatmul.bf16.gmra.mxu0 %v3259
        %v3341 = vpop.f32.mrf.mxu0
        %v3342 = vadd.f32 %v3283, %v3341
        %v3343 = vpop.f32.mrf.mxu0
        %v3344 = vadd.f32 %v3283, %v3343
        %3345 = vmatmul.bf16.gmra.mxu0 %v3260
        %v3346 = vpop.f32.mrf.mxu0
        %v3347 = vadd.f32 %v3283, %v3346
        %v3348 = vpop.f32.mrf.mxu0
        %v3349 = vadd.f32 %v3283, %v3348
        %3350 = vmatmul.bf16.gmra.mxu0 %v3261
        %v3351 = vpop.f32.mrf.mxu0
        %v3352 = vadd.f32 %v3283, %v3351
        %v3353 = vpop.f32.mrf.mxu0
        %v3354 = vadd.f32 %v3283, %v3353
        %3355 = vmatmul.bf16.gmra.mxu0 %v3262
        %v3356 = vpop.f32.mrf.mxu0
        %v3357 = vadd.f32 %v3283, %v3356
        %v3358 = vpop.f32.mrf.mxu0
        %v3359 = vadd.f32 %v3283, %v3358
        %3360 = vmatmul.bf16.gmra.mxu0 %v3263
        %v3361 = vpop.f32.mrf.mxu0
        %v3362 = vadd.f32 %v3283, %v3361
        %v3363 = vpop.f32.mrf.mxu0
        %v3364 = vadd.f32 %v3283, %v3363
        %3365 = vmatmul.bf16.gmra.mxu0 %v3264
        %v3366 = vpop.f32.mrf.mxu0
        %v3367 = vadd.f32 %v3283, %v3366
        %v3368 = vpop.f32.mrf.mxu0
        %v3369 = vadd.f32 %v3283, %v3368
        %3370 = vmatmul.bf16.gmra.mxu0 %v3265
        %v3371 = vpop.f32.mrf.mxu0
        %v3372 = vadd.f32 %v3283, %v3371
        %v3373 = vpop.f32.mrf.mxu0
        %v3374 = vadd.f32 %v3283, %v3373
        %3375 = vmatmul.bf16.gmra.mxu0 %v3266
        %v3376 = vpop.f32.mrf.mxu0
        %v3377 = vadd.f32 %v3283, %v3376
        %v3378 = vpop.f32.mrf.mxu0
        %v3379 = vadd.f32 %v3283, %v3378
        %3380 = vdwg.mxu0
        %v3381 = vmax.f32 %v3342, 0.0
        %v3382 = vmax.f32 %v3344, 0.0
        %v3383 = vmax.f32 %v3347, 0.0
        %v3384 = vmax.f32 %v3349, 0.0
        %v3385 = vmax.f32 %v3352, 0.0
        %v3386 = vmax.f32 %v3354, 0.0
        %v3387 = vmax.f32 %v3357, 0.0
        %v3388 = vmax.f32 %v3359, 0.0
        %v3389 = vmax.f32 %v3362, 0.0
        %v3390 = vmax.f32 %v3364, 0.0
        %v3391 = vmax.f32 %v3367, 0.0
        %v3392 = vmax.f32 %v3369, 0.0
        %v3393 = vmax.f32 %v3372, 0.0
        %v3394 = vmax.f32 %v3374, 0.0
        %v3395 = vmax.f32 %v3377, 0.0
        %v3396 = vmax.f32 %v3379, 0.0
        %v3397 = vpack.c.bf16 %v3382, %v3381
        %v3398 = vpack.c.bf16 %v3384, %v3383
        %v3399 = vpack.c.bf16 %v3386, %v3385
        %v3400 = vpack.c.bf16 %v3388, %v3387
        %v3401 = vpack.c.bf16 %v3390, %v3389
        %v3402 = vpack.c.bf16 %v3392, %v3391
        %v3403 = vpack.c.bf16 %v3394, %v3393
        %v3404 = vpack.c.bf16 %v3396, %v3395
        %v3405 = vld [vmem:[%s337] sm:$0xf]
        %v3406 = vld [vmem:[%s337 + $0x4] sm:$0xf]
        %v3407 = vld [vmem:[%s337 + $0x8] sm:$0xf]
        %v3408 = vld [vmem:[%s337 + $0xc] sm:$0xf]
        %v3409 = vld [vmem:[%s337 + $0x10] sm:$0xf]
        %v3410 = vld [vmem:[%s337 + $0x14] sm:$0xf]
        %v3411 = vld [vmem:[%s337 + $0x18] sm:$0xf]
        %v3412 = vld [vmem:[%s337 + $0x1c] sm:$0xf]
        %v3413 = vld [vmem:[%s337 + $0x20] sm:$0xf]
        %v3414 = vld [vmem:[%s337 + $0x24] sm:$0xf]
        %v3415 = vld [vmem:[%s337 + $0x28] sm:$0xf]
        %v3416 = vld [vmem:[%s337 + $0x2c] sm:$0xf]
        %v3417 = vld [vmem:[%s337 + $0x30] sm:$0xf]
        %v3418 = vld [vmem:[%s337 + $0x34] sm:$0xf]
        %v3419 = vld [vmem:[%s337 + $0x38] sm:$0xf]
        %v3420 = vld [vmem:[%s337 + $0x3c] sm:$0xf]
        %v3421 = vperm.slane %v410, 4
        %v3438 = vunpack.c.l.b16 %v3405
        %v3439 = vunpack.c.l.b16 %v3406
        %v3440 = vunpack.c.l.b16 %v3407
        %v3441 = vunpack.c.l.b16 %v3408
        %v3442 = vunpack.c.l.b16 %v3409
        %v3443 = vunpack.c.l.b16 %v3410
        %v3444 = vunpack.c.l.b16 %v3411
        %v3445 = vunpack.c.l.b16 %v3412
        %v3446 = vunpack.c.l.b16 %v3413
        %v3447 = vunpack.c.l.b16 %v3414
        %v3448 = vunpack.c.l.b16 %v3415
        %v3449 = vunpack.c.l.b16 %v3416
        %v3450 = vunpack.c.l.b16 %v3417
        %v3451 = vunpack.c.l.b16 %v3418
        %v3452 = vunpack.c.l.b16 %v3419
        %v3453 = vunpack.c.l.b16 %v3420
        %v3454 = vpack.c.b16 %v3439, %v3438
        %v3455 = vpack.c.b16 %v3441, %v3440
        %v3456 = vpack.c.b16 %v3443, %v3442
        %v3457 = vpack.c.b16 %v3445, %v3444
        %v3458 = vpack.c.b16 %v3447, %v3446
        %v3459 = vpack.c.b16 %v3449, %v3448
        %v3460 = vpack.c.b16 %v3451, %v3450
        %v3461 = vpack.c.b16 %v3453, %v3452
        %3470 = vmatpush.bf16.msra.mxu0 %v3461
        %3471 = vmatpush.bf16.msra.mxu0 %v3460
        %3472 = vmatpush.bf16.msra.mxu0 %v3459
        %3473 = vmatpush.bf16.msra.mxu0 %v3458
        %3474 = vmatpush.bf16.msra.mxu0 %v3457
        %3475 = vmatpush.bf16.msra.mxu0 %v3456
        %3476 = vmatpush.bf16.msra.mxu0 %v3455
        %3477 = vmatpush.bf16.msra.mxu0 %v3454
        %3478 = vmatmul.bf16.gmra.mxu0 %v3397
        %v3479 = vpop.f32.mrf.mxu0
        %v3480 = vadd.f32 %v3421, %v3479
        %v3481 = vpop.f32.mrf.mxu0
        %v3482 = vadd.f32 %v3421, %v3481
        %3483 = vmatmul.bf16.gmra.mxu0 %v3398
        %v3484 = vpop.f32.mrf.mxu0
        %v3485 = vadd.f32 %v3421, %v3484
        %v3486 = vpop.f32.mrf.mxu0
        %v3487 = vadd.f32 %v3421, %v3486
        %3488 = vmatmul.bf16.gmra.mxu0 %v3399
        %v3489 = vpop.f32.mrf.mxu0
        %v3490 = vadd.f32 %v3421, %v3489
        %v3491 = vpop.f32.mrf.mxu0
        %v3492 = vadd.f32 %v3421, %v3491
        %3493 = vmatmul.bf16.gmra.mxu0 %v3400
        %v3494 = vpop.f32.mrf.mxu0
        %v3495 = vadd.f32 %v3421, %v3494
        %v3496 = vpop.f32.mrf.mxu0
        %v3497 = vadd.f32 %v3421, %v3496
        %3498 = vmatmul.bf16.gmra.mxu0 %v3401
        %v3499 = vpop.f32.mrf.mxu0
        %v3500 = vadd.f32 %v3421, %v3499
        %v3501 = vpop.f32.mrf.mxu0
        %v3502 = vadd.f32 %v3421, %v3501
        %3503 = vmatmul.bf16.gmra.mxu0 %v3402
        %v3504 = vpop.f32.mrf.mxu0
        %v3505 = vadd.f32 %v3421, %v3504
        %v3506 = vpop.f32.mrf.mxu0
        %v3507 = vadd.f32 %v3421, %v3506
        %3508 = vmatmul.bf16.gmra.mxu0 %v3403
        %v3509 = vpop.f32.mrf.mxu0
        %v3510 = vadd.f32 %v3421, %v3509
        %v3511 = vpop.f32.mrf.mxu0
        %v3512 = vadd.f32 %v3421, %v3511
        %3513 = vmatmul.bf16.gmra.mxu0 %v3404
        %v3514 = vpop.f32.mrf.mxu0
        %v3515 = vadd.f32 %v3421, %v3514
        %v3516 = vpop.f32.mrf.mxu0
        %v3517 = vadd.f32 %v3421, %v3516
        %3518 = vdwg.mxu0
        %v3519 = vadd.f32 %v3243, %v3480
        %v3520 = vadd.f32 %v3244, %v3482
        %v3521 = vadd.f32 %v3245, %v3485
        %v3522 = vadd.f32 %v3246, %v3487
        %v3523 = vadd.f32 %v3247, %v3490
        %v3524 = vadd.f32 %v3248, %v3492
        %v3525 = vadd.f32 %v3249, %v3495
        %v3526 = vadd.f32 %v3250, %v3497
        %v3527 = vadd.f32 %v3251, %v3500
        %v3528 = vadd.f32 %v3252, %v3502
        %v3529 = vadd.f32 %v3253, %v3505
        %v3530 = vadd.f32 %v3254, %v3507
        %v3531 = vadd.f32 %v3255, %v3510
        %v3532 = vadd.f32 %v3256, %v3512
        %v3533 = vadd.f32 %v3257, %v3515
        %v3534 = vadd.f32 %v3258, %v3517
        %3535 = vadd.xlane.f32.xlu0 %v3519
        %v3536 = vpop.xlane.xlu0 %3535
        %3537 = vadd.xlane.f32.xlu0 %v3520
        %v3538 = vpop.xlane.xlu0 %3537
        %3539 = vadd.xlane.f32.xlu0 %v3521
        %v3540 = vpop.xlane.xlu0 %3539
        %3541 = vadd.xlane.f32.xlu0 %v3522
        %v3542 = vpop.xlane.xlu0 %3541
        %3543 = vadd.xlane.f32.xlu0 %v3523
        %v3544 = vpop.xlane.xlu0 %3543
        %3545 = vadd.xlane.f32.xlu0 %v3524
        %v3546 = vpop.xlane.xlu0 %3545
        %3547 = vadd.xlane.f32.xlu0 %v3525
        %v3548 = vpop.xlane.xlu0 %3547
        %3549 = vadd.xlane.f32.xlu0 %v3526
        %v3550 = vpop.xlane.xlu0 %3549
        %3551 = vadd.xlane.f32.xlu0 %v3527
        %v3552 = vpop.xlane.xlu0 %3551
        %3553 = vadd.xlane.f32.xlu0 %v3528
        %v3554 = vpop.xlane.xlu0 %3553
        %3555 = vadd.xlane.f32.xlu0 %v3529
        %v3556 = vpop.xlane.xlu0 %3555
        %3557 = vadd.xlane.f32.xlu0 %v3530
        %v3558 = vpop.xlane.xlu0 %3557
        %3559 = vadd.xlane.f32.xlu0 %v3531
        %v3560 = vpop.xlane.xlu0 %3559
        %3561 = vadd.xlane.f32.xlu0 %v3532
        %v3562 = vpop.xlane.xlu0 %3561
        %3563 = vadd.xlane.f32.xlu0 %v3533
        %v3564 = vpop.xlane.xlu0 %3563
        %3565 = vadd.xlane.f32.xlu0 %v3534
        %v3566 = vpop.xlane.xlu0 %3565
        %v3567 = vmul.f32 %v3536, 0.03125
        %v3568 = vmul.f32 %v3538, 0.03125
        %v3569 = vmul.f32 %v3540, 0.03125
        %v3570 = vmul.f32 %v3542, 0.03125
        %v3571 = vmul.f32 %v3544, 0.03125
        %v3572 = vmul.f32 %v3546, 0.03125
        %v3573 = vmul.f32 %v3548, 0.03125
        %v3574 = vmul.f32 %v3550, 0.03125
        %v3575 = vmul.f32 %v3552, 0.03125
        %v3576 = vmul.f32 %v3554, 0.03125
        %v3577 = vmul.f32 %v3556, 0.03125
        %v3578 = vmul.f32 %v3558, 0.03125
        %v3579 = vmul.f32 %v3560, 0.03125
        %v3580 = vmul.f32 %v3562, 0.03125
        %v3581 = vmul.f32 %v3564, 0.03125
        %v3582 = vmul.f32 %v3566, 0.03125
        %v3583 = vsub.f32 %v3519, %v3567
        %v3584 = vsub.f32 %v3520, %v3568
        %v3585 = vsub.f32 %v3521, %v3569
        %v3586 = vsub.f32 %v3522, %v3570
        %v3587 = vsub.f32 %v3523, %v3571
        %v3588 = vsub.f32 %v3524, %v3572
        %v3589 = vsub.f32 %v3525, %v3573
        %v3590 = vsub.f32 %v3526, %v3574
        %v3591 = vsub.f32 %v3527, %v3575
        %v3592 = vsub.f32 %v3528, %v3576
        %v3593 = vsub.f32 %v3529, %v3577
        %v3594 = vsub.f32 %v3530, %v3578
        %v3595 = vsub.f32 %v3531, %v3579
        %v3596 = vsub.f32 %v3532, %v3580
        %v3597 = vsub.f32 %v3533, %v3581
        %v3598 = vsub.f32 %v3534, %v3582
        %v3599 = vmul.f32 %v3583, %v415
        %v3600 = vmul.f32 %v3584, %v415
        %v3601 = vmul.f32 %v3585, %v415
        %v3602 = vmul.f32 %v3586, %v415
        %v3603 = vmul.f32 %v3587, %v415
        %v3604 = vmul.f32 %v3588, %v415
        %v3605 = vmul.f32 %v3589, %v415
        %v3606 = vmul.f32 %v3590, %v415
        %v3607 = vmul.f32 %v3591, %v415
        %v3608 = vmul.f32 %v3592, %v415
        %v3609 = vmul.f32 %v3593, %v415
        %v3610 = vmul.f32 %v3594, %v415
        %v3611 = vmul.f32 %v3595, %v415
        %v3612 = vmul.f32 %v3596, %v415
        %v3613 = vmul.f32 %v3597, %v415
        %v3614 = vmul.f32 %v3598, %v415
        %v3615 = vmul.f32 %v3599, %v3599
        %v3616 = vmul.f32 %v3600, %v3600
        %v3617 = vmul.f32 %v3601, %v3601
        %v3618 = vmul.f32 %v3602, %v3602
        %v3619 = vmul.f32 %v3603, %v3603
        %v3620 = vmul.f32 %v3604, %v3604
        %v3621 = vmul.f32 %v3605, %v3605
        %v3622 = vmul.f32 %v3606, %v3606
        %v3623 = vmul.f32 %v3607, %v3607
        %v3624 = vmul.f32 %v3608, %v3608
        %v3625 = vmul.f32 %v3609, %v3609
        %v3626 = vmul.f32 %v3610, %v3610
        %v3627 = vmul.f32 %v3611, %v3611
        %v3628 = vmul.f32 %v3612, %v3612
        %v3629 = vmul.f32 %v3613, %v3613
        %v3630 = vmul.f32 %v3614, %v3614
        %3631 = vadd.xlane.f32.xlu0 %v3615
        %v3632 = vpop.xlane.xlu0 %3631
        %3633 = vadd.xlane.f32.xlu0 %v3616
        %v3634 = vpop.xlane.xlu0 %3633
        %3635 = vadd.xlane.f32.xlu0 %v3617
        %v3636 = vpop.xlane.xlu0 %3635
        %3637 = vadd.xlane.f32.xlu0 %v3618
        %v3638 = vpop.xlane.xlu0 %3637
        %3639 = vadd.xlane.f32.xlu0 %v3619
        %v3640 = vpop.xlane.xlu0 %3639
        %3641 = vadd.xlane.f32.xlu0 %v3620
        %v3642 = vpop.xlane.xlu0 %3641
        %3643 = vadd.xlane.f32.xlu0 %v3621
        %v3644 = vpop.xlane.xlu0 %3643
        %3645 = vadd.xlane.f32.xlu0 %v3622
        %v3646 = vpop.xlane.xlu0 %3645
        %3647 = vadd.xlane.f32.xlu0 %v3623
        %v3648 = vpop.xlane.xlu0 %3647
        %3649 = vadd.xlane.f32.xlu0 %v3624
        %v3650 = vpop.xlane.xlu0 %3649
        %3651 = vadd.xlane.f32.xlu0 %v3625
        %v3652 = vpop.xlane.xlu0 %3651
        %3653 = vadd.xlane.f32.xlu0 %v3626
        %v3654 = vpop.xlane.xlu0 %3653
        %3655 = vadd.xlane.f32.xlu0 %v3627
        %v3656 = vpop.xlane.xlu0 %3655
        %3657 = vadd.xlane.f32.xlu0 %v3628
        %v3658 = vpop.xlane.xlu0 %3657
        %3659 = vadd.xlane.f32.xlu0 %v3629
        %v3660 = vpop.xlane.xlu0 %3659
        %3661 = vadd.xlane.f32.xlu0 %v3630
        %v3662 = vpop.xlane.xlu0 %3661
        %v3663 = vmul.f32 %v3632, 0.03125
        %v3664 = vmul.f32 %v3634, 0.03125
        %v3665 = vmul.f32 %v3636, 0.03125
        %v3666 = vmul.f32 %v3638, 0.03125
        %v3667 = vmul.f32 %v3640, 0.03125
        %v3668 = vmul.f32 %v3642, 0.03125
        %v3669 = vmul.f32 %v3644, 0.03125
        %v3670 = vmul.f32 %v3646, 0.03125
        %v3671 = vmul.f32 %v3648, 0.03125
        %v3672 = vmul.f32 %v3650, 0.03125
        %v3673 = vmul.f32 %v3652, 0.03125
        %v3674 = vmul.f32 %v3654, 0.03125
        %v3675 = vmul.f32 %v3656, 0.03125
        %v3676 = vmul.f32 %v3658, 0.03125
        %v3677 = vmul.f32 %v3660, 0.03125
        %v3678 = vmul.f32 %v3662, 0.03125
        %v3679 = vadd.f32 %v3663, 1e-05
        %v3680 = vadd.f32 %v3664, 1e-05
        %v3681 = vadd.f32 %v3665, 1e-05
        %v3682 = vadd.f32 %v3666, 1e-05
        %v3683 = vadd.f32 %v3667, 1e-05
        %v3684 = vadd.f32 %v3668, 1e-05
        %v3685 = vadd.f32 %v3669, 1e-05
        %v3686 = vadd.f32 %v3670, 1e-05
        %v3687 = vadd.f32 %v3671, 1e-05
        %v3688 = vadd.f32 %v3672, 1e-05
        %v3689 = vadd.f32 %v3673, 1e-05
        %v3690 = vadd.f32 %v3674, 1e-05
        %v3691 = vadd.f32 %v3675, 1e-05
        %v3692 = vadd.f32 %v3676, 1e-05
        %v3693 = vadd.f32 %v3677, 1e-05
        %v3694 = vadd.f32 %v3678, 1e-05
        %v3695 = vrsqrt.pop %v3679
        %v3696 = vmul.f32 %v3695, %v3679
        %v3697 = vmul.f32 %v3696, %v3695
        %v3698 = vmul.f32 0.5, %v3697
        %v3699 = vsub.f32 1.5, %v3698
        %v3700 = vmul.f32 %v3695, %v3699
        %vm3701 = vweird.f32 %v3679
        %vm3702 = vweird.f32 %v3695
        %vm3703 = vmor %vm3701, %vm3702
        %v3704 = vsel %vm3703, %v3695, %v3700
        %v3705 = vrsqrt.pop %v3680
        %v3706 = vmul.f32 %v3705, %v3680
        %v3707 = vmul.f32 %v3706, %v3705
        %v3708 = vmul.f32 0.5, %v3707
        %v3709 = vsub.f32 1.5, %v3708
        %v3710 = vmul.f32 %v3705, %v3709
        %vm3711 = vweird.f32 %v3680
        %vm3712 = vweird.f32 %v3705
        %vm3713 = vmor %vm3711, %vm3712
        %v3714 = vsel %vm3713, %v3705, %v3710
        %v3715 = vrsqrt.pop %v3681
        %v3716 = vmul.f32 %v3715, %v3681
        %v3717 = vmul.f32 %v3716, %v3715
        %v3718 = vmul.f32 0.5, %v3717
        %v3719 = vsub.f32 1.5, %v3718
        %v3720 = vmul.f32 %v3715, %v3719
        %vm3721 = vweird.f32 %v3681
        %vm3722 = vweird.f32 %v3715
        %vm3723 = vmor %vm3721, %vm3722
        %v3724 = vsel %vm3723, %v3715, %v3720
        %v3725 = vrsqrt.pop %v3682
        %v3726 = vmul.f32 %v3725, %v3682
        %v3727 = vmul.f32 %v3726, %v3725
        %v3728 = vmul.f32 0.5, %v3727
        %v3729 = vsub.f32 1.5, %v3728
        %v3730 = vmul.f32 %v3725, %v3729
        %vm3731 = vweird.f32 %v3682
        %vm3732 = vweird.f32 %v3725
        %vm3733 = vmor %vm3731, %vm3732
        %v3734 = vsel %vm3733, %v3725, %v3730
        %v3735 = vrsqrt.pop %v3683
        %v3736 = vmul.f32 %v3735, %v3683
        %v3737 = vmul.f32 %v3736, %v3735
        %v3738 = vmul.f32 0.5, %v3737
        %v3739 = vsub.f32 1.5, %v3738
        %v3740 = vmul.f32 %v3735, %v3739
        %vm3741 = vweird.f32 %v3683
        %vm3742 = vweird.f32 %v3735
        %vm3743 = vmor %vm3741, %vm3742
        %v3744 = vsel %vm3743, %v3735, %v3740
        %v3745 = vrsqrt.pop %v3684
        %v3746 = vmul.f32 %v3745, %v3684
        %v3747 = vmul.f32 %v3746, %v3745
        %v3748 = vmul.f32 0.5, %v3747
        %v3749 = vsub.f32 1.5, %v3748
        %v3750 = vmul.f32 %v3745, %v3749
        %vm3751 = vweird.f32 %v3684
        %vm3752 = vweird.f32 %v3745
        %vm3753 = vmor %vm3751, %vm3752
        %v3754 = vsel %vm3753, %v3745, %v3750
        %v3755 = vrsqrt.pop %v3685
        %v3756 = vmul.f32 %v3755, %v3685
        %v3757 = vmul.f32 %v3756, %v3755
        %v3758 = vmul.f32 0.5, %v3757
        %v3759 = vsub.f32 1.5, %v3758
        %v3760 = vmul.f32 %v3755, %v3759
        %vm3761 = vweird.f32 %v3685
        %vm3762 = vweird.f32 %v3755
        %vm3763 = vmor %vm3761, %vm3762
        %v3764 = vsel %vm3763, %v3755, %v3760
        %v3765 = vrsqrt.pop %v3686
        %v3766 = vmul.f32 %v3765, %v3686
        %v3767 = vmul.f32 %v3766, %v3765
        %v3768 = vmul.f32 0.5, %v3767
        %v3769 = vsub.f32 1.5, %v3768
        %v3770 = vmul.f32 %v3765, %v3769
        %vm3771 = vweird.f32 %v3686
        %vm3772 = vweird.f32 %v3765
        %vm3773 = vmor %vm3771, %vm3772
        %v3774 = vsel %vm3773, %v3765, %v3770
        %v3775 = vrsqrt.pop %v3687
        %v3776 = vmul.f32 %v3775, %v3687
        %v3777 = vmul.f32 %v3776, %v3775
        %v3778 = vmul.f32 0.5, %v3777
        %v3779 = vsub.f32 1.5, %v3778
        %v3780 = vmul.f32 %v3775, %v3779
        %vm3781 = vweird.f32 %v3687
        %vm3782 = vweird.f32 %v3775
        %vm3783 = vmor %vm3781, %vm3782
        %v3784 = vsel %vm3783, %v3775, %v3780
        %v3785 = vrsqrt.pop %v3688
        %v3786 = vmul.f32 %v3785, %v3688
        %v3787 = vmul.f32 %v3786, %v3785
        %v3788 = vmul.f32 0.5, %v3787
        %v3789 = vsub.f32 1.5, %v3788
        %v3790 = vmul.f32 %v3785, %v3789
        %vm3791 = vweird.f32 %v3688
        %vm3792 = vweird.f32 %v3785
        %vm3793 = vmor %vm3791, %vm3792
        %v3794 = vsel %vm3793, %v3785, %v3790
        %v3795 = vrsqrt.pop %v3689
        %v3796 = vmul.f32 %v3795, %v3689
        %v3797 = vmul.f32 %v3796, %v3795
        %v3798 = vmul.f32 0.5, %v3797
        %v3799 = vsub.f32 1.5, %v3798
        %v3800 = vmul.f32 %v3795, %v3799
        %vm3801 = vweird.f32 %v3689
        %vm3802 = vweird.f32 %v3795
        %vm3803 = vmor %vm3801, %vm3802
        %v3804 = vsel %vm3803, %v3795, %v3800
        %v3805 = vrsqrt.pop %v3690
        %v3806 = vmul.f32 %v3805, %v3690
        %v3807 = vmul.f32 %v3806, %v3805
        %v3808 = vmul.f32 0.5, %v3807
        %v3809 = vsub.f32 1.5, %v3808
        %v3810 = vmul.f32 %v3805, %v3809
        %vm3811 = vweird.f32 %v3690
        %vm3812 = vweird.f32 %v3805
        %vm3813 = vmor %vm3811, %vm3812
        %v3814 = vsel %vm3813, %v3805, %v3810
        %v3815 = vrsqrt.pop %v3691
        %v3816 = vmul.f32 %v3815, %v3691
        %v3817 = vmul.f32 %v3816, %v3815
        %v3818 = vmul.f32 0.5, %v3817
        %v3819 = vsub.f32 1.5, %v3818
        %v3820 = vmul.f32 %v3815, %v3819
        %vm3821 = vweird.f32 %v3691
        %vm3822 = vweird.f32 %v3815
        %vm3823 = vmor %vm3821, %vm3822
        %v3824 = vsel %vm3823, %v3815, %v3820
        %v3825 = vrsqrt.pop %v3692
        %v3826 = vmul.f32 %v3825, %v3692
        %v3827 = vmul.f32 %v3826, %v3825
        %v3828 = vmul.f32 0.5, %v3827
        %v3829 = vsub.f32 1.5, %v3828
        %v3830 = vmul.f32 %v3825, %v3829
        %vm3831 = vweird.f32 %v3692
        %vm3832 = vweird.f32 %v3825
        %vm3833 = vmor %vm3831, %vm3832
        %v3834 = vsel %vm3833, %v3825, %v3830
        %v3835 = vrsqrt.pop %v3693
        %v3836 = vmul.f32 %v3835, %v3693
        %v3837 = vmul.f32 %v3836, %v3835
        %v3838 = vmul.f32 0.5, %v3837
        %v3839 = vsub.f32 1.5, %v3838
        %v3840 = vmul.f32 %v3835, %v3839
        %vm3841 = vweird.f32 %v3693
        %vm3842 = vweird.f32 %v3835
        %vm3843 = vmor %vm3841, %vm3842
        %v3844 = vsel %vm3843, %v3835, %v3840
        %v3845 = vrsqrt.pop %v3694
        %v3846 = vmul.f32 %v3845, %v3694
        %v3847 = vmul.f32 %v3846, %v3845
        %v3848 = vmul.f32 0.5, %v3847
        %v3849 = vsub.f32 1.5, %v3848
        %v3850 = vmul.f32 %v3845, %v3849
        %vm3851 = vweird.f32 %v3694
        %vm3852 = vweird.f32 %v3845
        %vm3853 = vmor %vm3851, %vm3852
        %v3854 = vsel %vm3853, %v3845, %v3850
        %v3855 = vmul.f32 %v3599, %v3704
        %v3856 = vmul.f32 %v3600, %v3714
        %v3857 = vmul.f32 %v3601, %v3724
        %v3858 = vmul.f32 %v3602, %v3734
        %v3859 = vmul.f32 %v3603, %v3744
        %v3860 = vmul.f32 %v3604, %v3754
        %v3861 = vmul.f32 %v3605, %v3764
        %v3862 = vmul.f32 %v3606, %v3774
        %v3863 = vmul.f32 %v3607, %v3784
        %v3864 = vmul.f32 %v3608, %v3794
        %v3865 = vmul.f32 %v3609, %v3804
        %v3866 = vmul.f32 %v3610, %v3814
        %v3867 = vmul.f32 %v3611, %v3824
        %v3868 = vmul.f32 %v3612, %v3834
        %v3869 = vmul.f32 %v3613, %v3844
        %v3870 = vmul.f32 %v3614, %v3854
        %v3871 = vperm.slane %v410, 5
        %v3872 = vmul.f32 %v3855, %v3871
        %v3873 = vmul.f32 %v3856, %v3871
        %v3874 = vmul.f32 %v3857, %v3871
        %v3875 = vmul.f32 %v3858, %v3871
        %v3876 = vmul.f32 %v3859, %v3871
        %v3877 = vmul.f32 %v3860, %v3871
        %v3878 = vmul.f32 %v3861, %v3871
        %v3879 = vmul.f32 %v3862, %v3871
        %v3880 = vmul.f32 %v3863, %v3871
        %v3881 = vmul.f32 %v3864, %v3871
        %v3882 = vmul.f32 %v3865, %v3871
        %v3883 = vmul.f32 %v3866, %v3871
        %v3884 = vmul.f32 %v3867, %v3871
        %v3885 = vmul.f32 %v3868, %v3871
        %v3886 = vmul.f32 %v3869, %v3871
        %v3887 = vmul.f32 %v3870, %v3871
        %v3888 = vperm.slane %v410, 6
        %v3889 = vadd.f32 %v3872, %v3888
        %v3890 = vadd.f32 %v3873, %v3888
        %v3891 = vadd.f32 %v3874, %v3888
        %v3892 = vadd.f32 %v3875, %v3888
        %v3893 = vadd.f32 %v3876, %v3888
        %v3894 = vadd.f32 %v3877, %v3888
        %v3895 = vadd.f32 %v3878, %v3888
        %v3896 = vadd.f32 %v3879, %v3888
        %v3897 = vadd.f32 %v3880, %v3888
        %v3898 = vadd.f32 %v3881, %v3888
        %v3899 = vadd.f32 %v3882, %v3888
        %v3900 = vadd.f32 %v3883, %v3888
        %v3901 = vadd.f32 %v3884, %v3888
        %v3902 = vadd.f32 %v3885, %v3888
        %v3903 = vadd.f32 %v3886, %v3888
        %v3904 = vadd.f32 %v3887, %v3888
        %3905 = vst [vmem:[#allocation2] sm:$0xff] %v3889
        %3906 = vst [vmem:[#allocation2 + $0x8] sm:$0xff] %v3890
        %3907 = vst [vmem:[#allocation2 + $0x10] sm:$0xff] %v3891
        %3908 = vst [vmem:[#allocation2 + $0x18] sm:$0xff] %v3892
        %3909 = vst [vmem:[#allocation2 + $0x20] sm:$0xff] %v3893
        %3910 = vst [vmem:[#allocation2 + $0x28] sm:$0xff] %v3894
        %3911 = vst [vmem:[#allocation2 + $0x30] sm:$0xff] %v3895
        %3912 = vst [vmem:[#allocation2 + $0x38] sm:$0xff] %v3896
        %3913 = vst [vmem:[#allocation2 + $0x40] sm:$0xff] %v3897
        %3914 = vst [vmem:[#allocation2 + $0x48] sm:$0xff] %v3898
        %3915 = vst [vmem:[#allocation2 + $0x50] sm:$0xff] %v3899
        %3916 = vst [vmem:[#allocation2 + $0x58] sm:$0xff] %v3900
        %3917 = vst [vmem:[#allocation2 + $0x60] sm:$0xff] %v3901
        %3918 = vst [vmem:[#allocation2 + $0x68] sm:$0xff] %v3902
        %3919 = vst [vmem:[#allocation2 + $0x70] sm:$0xff] %v3903
        %3920 = vst [vmem:[#allocation2 + $0x78] sm:$0xff] %v3904
        // Predicated region
        $region53: #{tpu_custom_call.1} parent=47 // pred_check
          %p3921 = pneg %p204
        $region54: #{tpu_custom_call.1} parent=47 // pred_check_branch
          %3923 = sbr.rel (%p3921) target = $region56
        $region55: #{tpu_custom_call.1} parent=47 // pred_region
          %3925 = vsyncadd [#allocation3], 0
          %s3926 = sshll.u32 [#allocation2], 4
          %s3927 = int_to_ptr.vmem [resolvable:$true] %s3926
          %s3928 = sshll.u32 %s7, 4
          %s3929 = int_to_ptr.hbm [resolvable:$true] %s3928
          %3934 = dma.vmem_to_hbm [thread:$0]  %s3927, 2048, %s3929, [#allocation3], 128, 128, 8
        $region56: #{tpu_custom_call.1} parent=47 // pred_fallthru
          _
        // Predicated region
        $region57: #{tpu_custom_call.1} parent=47 // pred_check
          %p3935 = pneg %p204
        $region58: #{tpu_custom_call.1} parent=47 // pred_check_branch
          %3937 = sbr.rel (%p3935) target = $region60
        $region59: #{tpu_custom_call.1} parent=47 // pred_region
          %3939 = dma.done [#allocation3], 2048
        $region60: #{tpu_custom_call.1} parent=47 // pred_fallthru
          _
      $region48: #{tpu_custom_call.1} parent=5 // pred_fallthru
        _
      %p3940 = scmp.le.s32.totalorder 2, %s14
      // Predicated region
      $region61: #{tpu_custom_call.1} parent=5 // pred_check
        %p3941 = pneg %p3940
      $region62: #{tpu_custom_call.1} parent=5 // pred_check_branch
        %3943 = sbr.rel (%p3941) target = $region64
      $region63: #{tpu_custom_call.1} parent=5 // pred_region
        %s3944 = ssub.s32 %s14, 2
      $region64: #{tpu_custom_call.1} parent=5 // pred_fallthru
        _
    $region6: #{tpu_custom_call.1} parent=1 // loop_footer
      %s18 = sadd.s32 1, %s14
    $region7: #{tpu_custom_call.1} parent=1 // loop_footer_branch
      %13 = sbr.rel target = $region3
    $region8: #{tpu_custom_call.1} parent=1 // loop_exit
      _
    %3945 = vsyncpa [#allocation3], 1
    %s3946 = scalar_lea.sflag [#allocation3], 1
    %3947 = vsyncpa %s3946, 1

</llo_original>
